<compile_context>
chip_gen: v5e
topology: v5e:2x2
jax: 0.10.0
libtpu: 0.0.40
codegen_flags: <defaults>
</compile_context>

<pallas_src>
import functools
import math

import jax
import jax.numpy as jnp
from jax.experimental import pallas as pl
from jax.experimental.pallas import tpu as pltpu

_EPS = 1e-5
_HI = jax.lax.Precision.HIGHEST

_VMEM_LIMIT_BYTES = 48 * 1024 * 1024     # safe on v7x (64 MiB phys) and v5e/v6e (128 MiB)
_TILE_VMEM_BUDGET = 40 * 1024 * 1024     # working-set budget used to size one tile
_MAX_TILE_ROWS = 8192
_FORCE_SPLIT_BYTES = 8 * 1024 * 1024     # only force >=4 grid steps above this size

_COMPILER_PARAMS = pltpu.CompilerParams(
    dimension_semantics=("parallel",),
    vmem_limit_bytes=_VMEM_LIMIT_BYTES,
)


def _ln_direct_kernel(x_ref, w_ref, o_ref, *, inv_c):
    """(TM, C) tile; reduce over the lane (channel) dim.  Two-pass variance."""
    x = x_ref[...].astype(jnp.float32)
    mean = jnp.sum(x, axis=-1, keepdims=True) * inv_c
    xc = x - mean
    var = jnp.sum(xc * xc, axis=-1, keepdims=True) * inv_c
    inv = jax.lax.rsqrt(var + _EPS)
    o_ref[...] = (x * inv * w_ref[...]).astype(o_ref.dtype)


def _ln_packed_kernel(x_ref, ind_ref, bcast_ref, wbcast_ref, o_ref, *, inv_c):
    """Lane-dense path: each packed row holds g logical rows of C channels
    (P = g*C lanes, a multiple of 128).  Segment sums / broadcasts use thin
    0/1 indicator matmuls on the otherwise idle MXU; the weight is folded into
    the broadcast-back matrix.  Variance is two-pass (centered squares)."""
    x = x_ref[...].astype(jnp.float32)
    ind = ind_ref[...]        # (P, g): 1 iff lane p belongs to segment j
    bcast = bcast_ref[...]    # (g, P): ind.T
    wbcast = wbcast_ref[...]  # (g, P): ind.T * packed weight
    mean = jnp.dot(x, ind, preferred_element_type=jnp.float32, precision=_HI) * inv_c
    mean_b = jnp.dot(mean, bcast, preferred_element_type=jnp.float32, precision=_HI)
    xc = x - mean_b
    var = jnp.dot(xc * xc, ind, preferred_element_type=jnp.float32, precision=_HI) * inv_c
    inv = jax.lax.rsqrt(var + _EPS)
    scale = jnp.dot(inv, wbcast, preferred_element_type=jnp.float32, precision=_HI)
    o_ref[...] = (x * scale).astype(o_ref.dtype)


def _round_up(v, m):
    return -(-v // m) * m


def _sublane_multiple(dtype):
    # 8 sublanes for 4-byte dtypes, 16 for bf16/fp16, 32 for 1-byte dtypes.
    return max(8, 32 // max(1, jnp.dtype(dtype).itemsize))


def _pick_tile_rows(n_rows, row_width, dtype, tile_rows=None):
    """Rows per tile: sized so 2x double-buffered (in+out) tiles in `dtype`
    plus ~3 live f32 temporaries fit the VMEM budget; rounded to the dtype's
    sublane multiple; >=4 grid steps only for large arrays (v7x megacore)."""
    sub = _sublane_multiple(dtype)
    if n_rows < sub:
        return n_rows                        # tiny array: single full-extent block
    itemsize = jnp.dtype(dtype).itemsize
    if tile_rows is None:
        per_row_bytes = row_width * (4 * itemsize + 3 * 4)
        tile_rows = _TILE_VMEM_BUDGET // max(1, per_row_bytes)
    tm = max(sub, (min(int(tile_rows), _MAX_TILE_ROWS) // sub) * sub)
    if n_rows * row_width * itemsize >= _FORCE_SPLIT_BYTES:
        tm = min(tm, _round_up(-(-n_rows // 4), sub))    # >=4 steps -> 2 per v7x core
    return min(tm, _round_up(n_rows, sub))


def _pack_factor(c):
    """g such that g*C is a multiple of 128 lanes (g = 1 -> no repack)."""
    if c <= 0 or c % 128 == 0:
        return 1
    g = math.lcm(c, 128) // c
    return g if g * c <= 2048 else 1


def _direct_call(x2, w32, tile_rows=None):
    rows, c = x2.shape
    tm = _pick_tile_rows(rows, c, x2.dtype, tile_rows)
    # Ragged last block (rows % tm != 0) reads garbage rows past the end; this
    # is intentional: rows are independent and OOB writes are dropped.
    return pl.pallas_call(
        functools.partial(_ln_direct_kernel, inv_c=1.0 / c),
        out_shape=jax.ShapeDtypeStruct((rows, c), x2.dtype),
        grid_spec=pltpu.PrefetchScalarGridSpec(
            num_scalar_prefetch=0,
            grid=(pl.cdiv(rows, tm),),
            in_specs=[
                pl.BlockSpec((tm, c), lambda i: (i, 0)),
                pl.BlockSpec((1, c), lambda i: (0, 0)),
            ],
            out_specs=pl.BlockSpec((tm, c), lambda i: (i, 0)),
        ),
        compiler_params=_COMPILER_PARAMS,
    )(x2, w32.reshape(1, c))


def _packed_call(xp, w32, c, g, tile_rows=None):
    n_rows, p = xp.shape
    tm = _pick_tile_rows(n_rows, p, xp.dtype, tile_rows)
    seg_ids = jnp.arange(p, dtype=jnp.int32) // c
    ind = (seg_ids[:, None] == jnp.arange(g, dtype=jnp.int32)[None, :]).astype(jnp.float32)
    bcast = ind.T                                      # (g, P)
    wbcast = bcast * jnp.tile(w32, (g,))[None, :]      # (g, P): broadcast * weight
    # The indicator constants are a few KiB; double-buffering them is harmless,
    # so no pl.Buffered(1) override is needed.
    return pl.pallas_call(
        functools.partial(_ln_packed_kernel, inv_c=1.0 / c),
        out_shape=jax.ShapeDtypeStruct((n_rows, p), xp.dtype),
        grid_spec=pltpu.PrefetchScalarGridSpec(
            num_scalar_prefetch=0,
            grid=(pl.cdiv(n_rows, tm),),
            in_specs=[
                pl.BlockSpec((tm, p), lambda i: (i, 0)),
                pl.BlockSpec((p, g), lambda i: (0, 0)),
                pl.BlockSpec((g, p), lambda i: (0, 0)),
                pl.BlockSpec((g, p), lambda i: (0, 0)),
            ],
            out_specs=pl.BlockSpec((tm, p), lambda i: (i, 0)),
        ),
        compiler_params=_COMPILER_PARAMS,
    )(xp, ind, bcast, wbcast)


def biasfree_layernorm(x, weight, *, tile_rows=None):
    """x: (..., C); weight: (C,).  Returns same shape/dtype as x."""
    orig_shape = x.shape
    c = orig_shape[-1]
    rows = int(math.prod(orig_shape[:-1]))
    x2 = x.reshape(rows, c)
    w32 = weight.astype(jnp.float32)

    g = _pack_factor(c)
    if g > 1 and rows >= g:
        n_full = rows // g
        rows_aligned = n_full * g
        if rows_aligned == rows:
            # Free row-major reshape to the lane-dense (rows/g, g*C) view.
            xp = x2.reshape(n_full, g * c)
            return _packed_call(xp, w32, c, g, tile_rows).reshape(orig_shape)
        # Ragged rows: packed kernel on the aligned prefix, direct kernel on the
        # < g-row tail, so >99% of I/O stays lane-dense.
        # TODO(synk): the concatenate costs one extra pass over the output; a
        # single ANY-memory-space kernel could avoid it if ragged row counts
        # ever matter here (H*W is a power of two in this net, so they don't).
        xp = x2[:rows_aligned].reshape(n_full, g * c)
        head = _packed_call(xp, w32, c, g, tile_rows).reshape(rows_aligned, c)
        tail = _direct_call(x2[rows_aligned:], w32, tile_rows)
        return jnp.concatenate([head, tail], axis=0).reshape(orig_shape)

    return _direct_call(x2, w32, tile_rows).reshape(orig_shape)


def biasfree_layernorm_ref(x, weight):
    xf = x.astype(jnp.float32)
    var = jnp.var(xf, axis=-1, keepdims=True)          # unbiased=False
    out = xf / jnp.sqrt(var + _EPS) * weight.astype(jnp.float32)
    return out.astype(x.dtype)


def _check(x, weight, tol):
    out = jax.block_until_ready(jax.jit(biasfree_layernorm)(x, weight))
    ref = biasfree_layernorm_ref(x, weight)
    assert out.shape == x.shape and out.dtype == x.dtype
    err = float(jnp.max(jnp.abs(out.astype(jnp.float32) - ref.astype(jnp.float32))))
    assert err < tol, f"max abs err {err} >= {tol}"


if __name__ == "__main__":
    key = jax.random.PRNGKey(0)
    k0, k1, k2, k3, k4, k5 = jax.random.split(key, 6)

    # Main case: NCHW feature map (B=2, C=32, H=W=16) -> to_3d layout (B, HW, C).
    B, C, H, W = 2, 32, 16, 16
    x_nchw = jax.random.normal(k0, (B, C, H, W), dtype=jnp.float32)
    x = jnp.transpose(x_nchw, (0, 2, 3, 1)).reshape(B, H * W, C)
    # Module initializes weight to ones; perturb slightly to exercise the path.
    w = jnp.ones((C,), jnp.float32) + 0.05 * jax.random.normal(k1, (C,), jnp.float32)
    _check(x, w, tol=1e-4)

    # Ragged row count: packed prefix (32 rows) + direct tail (3 rows) + concat.
    x_b = jax.random.normal(k2, (1, 35, 48), dtype=jnp.float32)
    w_b = jnp.ones((48,), jnp.float32) + 0.05 * jax.random.normal(k3, (48,), jnp.float32)
    _check(x_b, w_b, tol=1e-4)

    # Packed path with a non-trivial pack factor (C=48 -> g=8, P=384 lanes).
    x_c = jax.random.normal(k4, (2, 64, 48), dtype=jnp.float32)
    w_c = jnp.ones((48,), jnp.float32) + 0.05 * jax.random.normal(k5, (48,), jnp.float32)
    _check(x_c, w_c, tol=1e-4)

    # bf16 activations (exercises dtype-aware sublane rounding / tile budget).
    _check(x.astype(jnp.bfloat16), w, tol=3e-2)

    print("KERNEL_OK")
</pallas_src>

<mosaic_0001>
module attributes {stable_mosaic.version = 11 : i64} {
  func.func @_ln_packed_kernel(%arg0: i32, %arg1: memref<128x128xf32, #tpu.memory_space<vmem>>, %arg2: memref<128x4xf32, #tpu.memory_space<vmem>>, %arg3: memref<4x128xf32, #tpu.memory_space<vmem>>, %arg4: memref<4x128xf32, #tpu.memory_space<vmem>>, %arg5: memref<128x128xf32, #tpu.memory_space<vmem>>) attributes {dimension_semantics = [#tpu.dimension_semantics<parallel>], iteration_bounds = array<i64: 1>, scalar_prefetch = 0 : i64, scratch_operands = 0 : i64, tpu.core_type = #tpu.core_type<tc>, window_params = [{transform_indices = @transform_0, window_bounds = array<i64: 128, 128>}, {pipeline_mode = #tpu.pipeline_mode<synchronous>, transform_indices = @transform_1, window_bounds = array<i64: 128, 4>}, {pipeline_mode = #tpu.pipeline_mode<synchronous>, transform_indices = @transform_2, window_bounds = array<i64: 4, 128>}, {pipeline_mode = #tpu.pipeline_mode<synchronous>, transform_indices = @transform_3, window_bounds = array<i64: 4, 128>}, {transform_indices = @transform_4, window_bounds = array<i64: 128, 128>}]} {
    %c0 = arith.constant 0 : index
    %c0_0 = arith.constant 0 : index
    %0 = vector.load %arg1[%c0, %c0_0] : memref<128x128xf32, #tpu.memory_space<vmem>>, vector<128x128xf32>
    %c0_1 = arith.constant 0 : index
    %c0_2 = arith.constant 0 : index
    %1 = vector.load %arg2[%c0_1, %c0_2] : memref<128x4xf32, #tpu.memory_space<vmem>>, vector<128x4xf32>
    %c0_3 = arith.constant 0 : index
    %c0_4 = arith.constant 0 : index
    %2 = vector.load %arg3[%c0_3, %c0_4] : memref<4x128xf32, #tpu.memory_space<vmem>>, vector<4x128xf32>
    %c0_5 = arith.constant 0 : index
    %c0_6 = arith.constant 0 : index
    %3 = vector.load %arg4[%c0_5, %c0_6] : memref<4x128xf32, #tpu.memory_space<vmem>>, vector<4x128xf32>
    %cst = arith.constant dense<0.000000e+00> : vector<128x4xf32>
    %4 = tpu.matmul %0, %1, %cst {dimension_numbers = #tpu.dot_dimension_numbers<[1], [0], [0], [1], [0, 0, 1, 1], [], []>, precision = #tpu.contract_precision<fp32>} : vector<128x128xf32>, vector<128x4xf32>, vector<128x4xf32> -> vector<128x4xf32>
    %cst_7 = arith.constant 3.125000e-02 : f32
    %5 = vector.broadcast %cst_7 : f32 to vector<128x4xf32>
    %6 = arith.mulf %4, %5 : vector<128x4xf32>
    %cst_8 = arith.constant dense<0.000000e+00> : vector<128x128xf32>
    %7 = tpu.matmul %6, %2, %cst_8 {dimension_numbers = #tpu.dot_dimension_numbers<[1], [0], [0], [1], [0, 0, 1, 1], [], []>, precision = #tpu.contract_precision<fp32>} : vector<128x4xf32>, vector<4x128xf32>, vector<128x128xf32> -> vector<128x128xf32>
    %8 = arith.subf %0, %7 : vector<128x128xf32>
    %9 = arith.mulf %8, %8 : vector<128x128xf32>
    %cst_9 = arith.constant dense<0.000000e+00> : vector<128x4xf32>
    %10 = tpu.matmul %9, %1, %cst_9 {dimension_numbers = #tpu.dot_dimension_numbers<[1], [0], [0], [1], [0, 0, 1, 1], [], []>, precision = #tpu.contract_precision<fp32>} : vector<128x128xf32>, vector<128x4xf32>, vector<128x4xf32> -> vector<128x4xf32>
    %cst_10 = arith.constant 3.125000e-02 : f32
    %11 = vector.broadcast %cst_10 : f32 to vector<128x4xf32>
    %12 = arith.mulf %10, %11 : vector<128x4xf32>
    %cst_11 = arith.constant 9.99999974E-6 : f32
    %13 = vector.broadcast %cst_11 : f32 to vector<128x4xf32>
    %14 = arith.addf %12, %13 : vector<128x4xf32>
    %15 = math.rsqrt %14 : vector<128x4xf32>
    %cst_12 = arith.constant dense<0.000000e+00> : vector<128x128xf32>
    %16 = tpu.matmul %15, %3, %cst_12 {dimension_numbers = #tpu.dot_dimension_numbers<[1], [0], [0], [1], [0, 0, 1, 1], [], []>, precision = #tpu.contract_precision<fp32>} : vector<128x4xf32>, vector<4x128xf32>, vector<128x128xf32> -> vector<128x128xf32>
    %17 = arith.mulf %0, %16 : vector<128x128xf32>
    %c0_13 = arith.constant 0 : index
    %c0_14 = arith.constant 0 : index
    %18 = vector.load %arg5[%c0_13, %c0_14] : memref<128x128xf32, #tpu.memory_space<vmem>>, vector<128x128xf32>
    tpu.vector_store %arg5[%c0_13, %c0_14], %17 {strides = array<i32>} : memref<128x128xf32, #tpu.memory_space<vmem>>, vector<128x128xf32>,
    return
  }
  func.func @transform_0(%arg0: i32) -> (i32, i32) {
    %c0_i32 = arith.constant 0 : i32
    %c0_i32_0 = arith.constant 0 : i32
    return %arg0, %c0_i32 : i32, i32
  }
  func.func @transform_1(%arg0: i32) -> (i32, i32) {
    %c0_i32 = arith.constant 0 : i32
    %c0_i32_0 = arith.constant 0 : i32
    %c0_i32_1 = arith.constant 0 : i32
    return %c0_i32, %c0_i32_0 : i32, i32
  }
  func.func @transform_2(%arg0: i32) -> (i32, i32) {
    %c0_i32 = arith.constant 0 : i32
    %c0_i32_0 = arith.constant 0 : i32
    %c0_i32_1 = arith.constant 0 : i32
    return %c0_i32, %c0_i32_0 : i32, i32
  }
  func.func @transform_3(%arg0: i32) -> (i32, i32) {
    %c0_i32 = arith.constant 0 : i32
    %c0_i32_0 = arith.constant 0 : i32
    %c0_i32_1 = arith.constant 0 : i32
    return %c0_i32, %c0_i32_0 : i32, i32
  }
  func.func @transform_4(%arg0: i32) -> (i32, i32) {
    %c0_i32 = arith.constant 0 : i32
    %c0_i32_0 = arith.constant 0 : i32
    return %arg0, %c0_i32 : i32, i32
  }
}

</mosaic_0001>

<llo_original>
// kernel: tile.8
$region0: #{tile.8}
  #allocation0 [shape = 's32[1]{0}', space=sflag, size = 0x4, scoped, tag = 'scoped memory for tile.8']
  %s0 = inlined_call_operand.vmem [shape: f32[32], index: 0, kind: input, shape index: {}]
  %s1 = inlined_call_operand.vmem [shape: f32[4,32], index: 1, kind: output, shape index: {}]
  // Predicated region
  $region2: #{tile.8} parent=0 // pred_check
    _
  $region3: #{tile.8} parent=0 // pred_check_branch
    %3 = sbr.rel (0) target = $region5
  $region4: #{tile.8} parent=0 // pred_region
    _
  $region5: #{tile.8} parent=0 // pred_fallthru
    _
  %v4 = vld [vmem:[%s0] ss:$0 sm:$0xff]
  %5 = vst [vmem:[%s1] sm:$0xf] %v4

// kernel: mul.5
$region0: #{mul.5}
  %s0 = inlined_call_operand.vmem [shape: f32[4,32], index: 0, kind: input, shape index: {}]
  %s1 = inlined_call_operand.vmem [shape: f32[128], index: 1, kind: output, shape index: {}]
  $region1: #{mul.5} parent=0
    #allocation0 [shape = 'u8[4096]{0}', space=vmem, size = 0x1000, scoped, tag = 'scoped mem for output reshape']
    #allocation1 [shape = 'u8[4096]{0}', space=vmem, size = 0x1000, scoped, tag = 'scoped mem for input reshape']
    %s3 = ssub.s32 16, 1
    %v4 = vld [vmem:[%s0] sm:%s3]
    %5 = vst [vmem:[#allocation1] sm:%s3] %v4
    %v6 = vld [vmem:[#allocation1] sm:$0x1]
    %vm7 = vcmask 261120
    %8 = vst.msk [vmem:[#allocation0] sm:$0x1] %vm7, %v6
    %s9 = scalar_lea.vmem [#allocation1], 3
    %v10 = vld [vmem:[%s9] sm:$0x1]
    %11 = vrot.lane.b32.xlu0 %v10, 96
    %v12 = vpop.permute.xlu0 %11
    %vm13 = vcmask 1048320
    %14 = vst.msk [vmem:[#allocation0] sm:$0x1] %vm13, %v12
    %s15 = scalar_lea.vmem [#allocation1], 2
    %v16 = vld [vmem:[%s15] sm:$0x1]
    %17 = vrot.lane.b32.xlu0 %v16, 64
    %v18 = vpop.permute.xlu0 %17
    %vm19 = vcmask 785920
    %20 = vst.msk [vmem:[#allocation0] sm:$0x1] %vm19, %v18
    %s21 = scalar_lea.vmem [#allocation1], 1
    %v22 = vld [vmem:[%s21] sm:$0x1]
    %23 = vrot.lane.b32.xlu0 %v22, 32
    %v24 = vpop.permute.xlu0 %23
    %vm25 = vcmask 523520
    %26 = vst.msk [vmem:[#allocation0] sm:$0x1] %vm25, %v24
    %s28 = ssub.s32 2, 1
    %v29 = vld [vmem:[#allocation0] sm:%s28]
    %s31 = ssub.s32 2, 1
    %32 = vst [vmem:[%s1] sm:%s31] %v29

// kernel: biasfree_layernorm.1
$region0: #{biasfree_layernorm.1}
  #allocation0 [shape = 'u32[]', space=smem, size = 0x4, offset = 0x4, fixed_abs, tag = 'smem constant byte address 0x4 - core index']
  #allocation1 [shape = 'u32[72,128]{1,0:T(1,128)}', space=vmem, size = 0x9000, scoped, tag = 'internal scratch']
  %s0 = inlined_call_operand.vmem [shape: f32[128,128], index: 0, kind: input, shape index: {}]
  %s1 = inlined_call_operand.vmem [shape: f32[128,4], index: 1, kind: input, shape index: {}]
  %s2 = inlined_call_operand.vmem [shape: f32[4,128], index: 2, kind: input, shape index: {}]
  %s3 = inlined_call_operand.vmem [shape: f32[4,128], index: 3, kind: input, shape index: {}]
  %s4 = inlined_call_operand.vmem [shape: f32[128,128], index: 4, kind: output, shape index: {}]
  %s5 = sld [smem:[#allocation0]]
  $region26: #{biasfree_layernorm.1} parent=0
    _
  %s7 = ssub.s32 1, %s5
  %s8 = scalar_select 0, %s7, %s5
  // Predicated region
  $region2: #{biasfree_layernorm.1} parent=0 // pred_check
    _
  $region3: #{biasfree_layernorm.1} parent=0 // pred_check_branch
    %10 = sbr.rel (0) target = $region5
  $region4: #{biasfree_layernorm.1} parent=0 // pred_region
    _
  $region5: #{biasfree_layernorm.1} parent=0 // pred_fallthru
    _
  // Predicated region
  $region6: #{biasfree_layernorm.1} parent=0 // pred_check
    _
  $region7: #{biasfree_layernorm.1} parent=0 // pred_check_branch
    %12 = sbr.rel (0) target = $region9
  $region8: #{biasfree_layernorm.1} parent=0 // pred_region
    _
  $region9: #{biasfree_layernorm.1} parent=0 // pred_fallthru
    _
  // Predicated region
  $region10: #{biasfree_layernorm.1} parent=0 // pred_check
    _
  $region11: #{biasfree_layernorm.1} parent=0 // pred_check_branch
    %14 = sbr.rel (0) target = $region13
  $region12: #{biasfree_layernorm.1} parent=0 // pred_region
    _
  $region13: #{biasfree_layernorm.1} parent=0 // pred_fallthru
    _
  // Predicated region
  $region14: #{biasfree_layernorm.1} parent=0 // pred_check
    _
  $region15: #{biasfree_layernorm.1} parent=0 // pred_check_branch
    %16 = sbr.rel (0) target = $region17
  $region16: #{biasfree_layernorm.1} parent=0 // pred_region
    _
  $region17: #{biasfree_layernorm.1} parent=0 // pred_fallthru
    _
  %v17 = vld [vmem:[%s0] sm:$0xff]
  %v18 = vld [vmem:[%s0 + $0x8] sm:$0xff]
  %v19 = vld [vmem:[%s0 + $0x10] sm:$0xff]
  %v20 = vld [vmem:[%s0 + $0x18] sm:$0xff]
  %v21 = vld [vmem:[%s0 + $0x20] sm:$0xff]
  %v22 = vld [vmem:[%s0 + $0x28] sm:$0xff]
  %v23 = vld [vmem:[%s0 + $0x30] sm:$0xff]
  %v24 = vld [vmem:[%s0 + $0x38] sm:$0xff]
  %v25 = vld [vmem:[%s0 + $0x40] sm:$0xff]
  %v26 = vld [vmem:[%s0 + $0x48] sm:$0xff]
  %v27 = vld [vmem:[%s0 + $0x50] sm:$0xff]
  %v28 = vld [vmem:[%s0 + $0x58] sm:$0xff]
  %v29 = vld [vmem:[%s0 + $0x60] sm:$0xff]
  %v30 = vld [vmem:[%s0 + $0x68] sm:$0xff]
  %v31 = vld [vmem:[%s0 + $0x70] sm:$0xff]
  %v32 = vld [vmem:[%s0 + $0x78] sm:$0xff]
  %v33 = vld [vmem:[%s1] sm:$0xff]
  %v34 = vld [vmem:[%s1 + $0x8] sm:$0xff]
  %v35 = vld [vmem:[%s1 + $0x10] sm:$0xff]
  %v36 = vld [vmem:[%s1 + $0x18] sm:$0xff]
  %v37 = vld [vmem:[%s1 + $0x20] sm:$0xff]
  %v38 = vld [vmem:[%s1 + $0x28] sm:$0xff]
  %v39 = vld [vmem:[%s1 + $0x30] sm:$0xff]
  %v40 = vld [vmem:[%s1 + $0x38] sm:$0xff]
  %v41 = vld [vmem:[%s1 + $0x40] sm:$0xff]
  %v42 = vld [vmem:[%s1 + $0x48] sm:$0xff]
  %v43 = vld [vmem:[%s1 + $0x50] sm:$0xff]
  %v44 = vld [vmem:[%s1 + $0x58] sm:$0xff]
  %v45 = vld [vmem:[%s1 + $0x60] sm:$0xff]
  %v46 = vld [vmem:[%s1 + $0x68] sm:$0xff]
  %v47 = vld [vmem:[%s1 + $0x70] sm:$0xff]
  %v48 = vld [vmem:[%s1 + $0x78] sm:$0xff]
  %v49 = vld [vmem:[%s2] sm:$0xf]
  %v50 = vld [vmem:[%s3] sm:$0xf]
  %v51 = vand.u32 %v48, 4294901760
  %52 = vmatpush.msra.mxu0 %v51
  %v53 = vand.u32 %v47, 4294901760
  %54 = vmatpush.msra.mxu0 %v53
  %v55 = vand.u32 %v46, 4294901760
  %56 = vmatpush.msra.mxu0 %v55
  %v57 = vand.u32 %v45, 4294901760
  %58 = vmatpush.msra.mxu0 %v57
  %v59 = vand.u32 %v44, 4294901760
  %60 = vmatpush.msra.mxu0 %v59
  %v61 = vand.u32 %v43, 4294901760
  %62 = vmatpush.msra.mxu0 %v61
  %v63 = vand.u32 %v42, 4294901760
  %64 = vmatpush.msra.mxu0 %v63
  %v65 = vand.u32 %v41, 4294901760
  %66 = vmatpush.msra.mxu0 %v65
  %v67 = vand.u32 %v40, 4294901760
  %68 = vmatpush.msra.mxu0 %v67
  %v69 = vand.u32 %v39, 4294901760
  %70 = vmatpush.msra.mxu0 %v69
  %v71 = vand.u32 %v38, 4294901760
  %72 = vmatpush.msra.mxu0 %v71
  %v73 = vand.u32 %v37, 4294901760
  %74 = vmatpush.msra.mxu0 %v73
  %v75 = vand.u32 %v36, 4294901760
  %76 = vmatpush.msra.mxu0 %v75
  %v77 = vand.u32 %v35, 4294901760
  %78 = vmatpush.msra.mxu0 %v77
  %v79 = vand.u32 %v34, 4294901760
  %80 = vmatpush.msra.mxu0 %v79
  %v81 = vand.u32 %v33, 4294901760
  %82 = vmatpush.msra.mxu0 %v81
  %v83 = vand.u32 %v17, 4294901760
  %v84 = vsub.f32 %v17, %v83
  %v85 = vand.u32 %v84, 4294901760
  %v86 = vsub.f32 %v84, %v85
  %v87 = vand.u32 %v86, 4294901760
  %88 = vmatmul.f32.gmra.mxu0 %v87
  %v89 = vpop.f32.mrf.mxu0
  %v90 = vadd.f32 0.0, %v89
  %v91 = vand.u32 %v18, 4294901760
  %v92 = vsub.f32 %v18, %v91
  %v93 = vand.u32 %v92, 4294901760
  %v94 = vsub.f32 %v92, %v93
  %v95 = vand.u32 %v94, 4294901760
  %96 = vmatmul.f32.gmra.mxu0 %v95
  %v97 = vpop.f32.mrf.mxu0
  %v98 = vadd.f32 0.0, %v97
  %v99 = vand.u32 %v19, 4294901760
  %v100 = vsub.f32 %v19, %v99
  %v101 = vand.u32 %v100, 4294901760
  %v102 = vsub.f32 %v100, %v101
  %v103 = vand.u32 %v102, 4294901760
  %104 = vmatmul.f32.gmra.mxu0 %v103
  %v105 = vpop.f32.mrf.mxu0
  %v106 = vadd.f32 0.0, %v105
  %v107 = vand.u32 %v20, 4294901760
  %v108 = vsub.f32 %v20, %v107
  %v109 = vand.u32 %v108, 4294901760
  %v110 = vsub.f32 %v108, %v109
  %v111 = vand.u32 %v110, 4294901760
  %112 = vmatmul.f32.gmra.mxu0 %v111
  %v113 = vpop.f32.mrf.mxu0
  %v114 = vadd.f32 0.0, %v113
  %v115 = vand.u32 %v21, 4294901760
  %v116 = vsub.f32 %v21, %v115
  %v117 = vand.u32 %v116, 4294901760
  %v118 = vsub.f32 %v116, %v117
  %v119 = vand.u32 %v118, 4294901760
  %120 = vmatmul.f32.gmra.mxu0 %v119
  %v121 = vpop.f32.mrf.mxu0
  %v122 = vadd.f32 0.0, %v121
  %v123 = vand.u32 %v22, 4294901760
  %v124 = vsub.f32 %v22, %v123
  %v125 = vand.u32 %v124, 4294901760
  %v126 = vsub.f32 %v124, %v125
  %v127 = vand.u32 %v126, 4294901760
  %128 = vmatmul.f32.gmra.mxu0 %v127
  %v129 = vpop.f32.mrf.mxu0
  %v130 = vadd.f32 0.0, %v129
  %v131 = vand.u32 %v23, 4294901760
  %v132 = vsub.f32 %v23, %v131
  %v133 = vand.u32 %v132, 4294901760
  %v134 = vsub.f32 %v132, %v133
  %v135 = vand.u32 %v134, 4294901760
  %136 = vmatmul.f32.gmra.mxu0 %v135
  %v137 = vpop.f32.mrf.mxu0
  %v138 = vadd.f32 0.0, %v137
  %v139 = vand.u32 %v24, 4294901760
  %v140 = vsub.f32 %v24, %v139
  %v141 = vand.u32 %v140, 4294901760
  %v142 = vsub.f32 %v140, %v141
  %v143 = vand.u32 %v142, 4294901760
  %144 = vmatmul.f32.gmra.mxu0 %v143
  %v145 = vpop.f32.mrf.mxu0
  %v146 = vadd.f32 0.0, %v145
  %v147 = vand.u32 %v25, 4294901760
  %v148 = vsub.f32 %v25, %v147
  %v149 = vand.u32 %v148, 4294901760
  %v150 = vsub.f32 %v148, %v149
  %v151 = vand.u32 %v150, 4294901760
  %152 = vmatmul.f32.gmra.mxu0 %v151
  %v153 = vpop.f32.mrf.mxu0
  %v154 = vadd.f32 0.0, %v153
  %v155 = vand.u32 %v26, 4294901760
  %v156 = vsub.f32 %v26, %v155
  %v157 = vand.u32 %v156, 4294901760
  %v158 = vsub.f32 %v156, %v157
  %v159 = vand.u32 %v158, 4294901760
  %160 = vmatmul.f32.gmra.mxu0 %v159
  %v161 = vpop.f32.mrf.mxu0
  %v162 = vadd.f32 0.0, %v161
  %v163 = vand.u32 %v27, 4294901760
  %v164 = vsub.f32 %v27, %v163
  %v165 = vand.u32 %v164, 4294901760
  %v166 = vsub.f32 %v164, %v165
  %v167 = vand.u32 %v166, 4294901760
  %168 = vmatmul.f32.gmra.mxu0 %v167
  %v169 = vpop.f32.mrf.mxu0
  %v170 = vadd.f32 0.0, %v169
  %v171 = vand.u32 %v28, 4294901760
  %v172 = vsub.f32 %v28, %v171
  %v173 = vand.u32 %v172, 4294901760
  %v174 = vsub.f32 %v172, %v173
  %v175 = vand.u32 %v174, 4294901760
  %176 = vmatmul.f32.gmra.mxu0 %v175
  %v177 = vpop.f32.mrf.mxu0
  %v178 = vadd.f32 0.0, %v177
  %v179 = vand.u32 %v29, 4294901760
  %v180 = vsub.f32 %v29, %v179
  %v181 = vand.u32 %v180, 4294901760
  %v182 = vsub.f32 %v180, %v181
  %v183 = vand.u32 %v182, 4294901760
  %184 = vmatmul.f32.gmra.mxu0 %v183
  %v185 = vpop.f32.mrf.mxu0
  %v186 = vadd.f32 0.0, %v185
  %v187 = vand.u32 %v30, 4294901760
  %v188 = vsub.f32 %v30, %v187
  %v189 = vand.u32 %v188, 4294901760
  %v190 = vsub.f32 %v188, %v189
  %v191 = vand.u32 %v190, 4294901760
  %192 = vmatmul.f32.gmra.mxu0 %v191
  %v193 = vpop.f32.mrf.mxu0
  %v194 = vadd.f32 0.0, %v193
  %v195 = vand.u32 %v31, 4294901760
  %v196 = vsub.f32 %v31, %v195
  %v197 = vand.u32 %v196, 4294901760
  %v198 = vsub.f32 %v196, %v197
  %v199 = vand.u32 %v198, 4294901760
  %200 = vmatmul.f32.gmra.mxu0 %v199
  %v201 = vpop.f32.mrf.mxu0
  %v202 = vadd.f32 0.0, %v201
  %v203 = vand.u32 %v32, 4294901760
  %v204 = vsub.f32 %v32, %v203
  %v205 = vand.u32 %v204, 4294901760
  %v206 = vsub.f32 %v204, %v205
  %v207 = vand.u32 %v206, 4294901760
  %208 = vmatmul.f32.gmra.mxu0 %v207
  %v209 = vpop.f32.mrf.mxu0
  %v210 = vadd.f32 0.0, %v209
  %211 = vdwg.mxu0
  %v212 = vand.u32 %v48, 4294901760
  %v213 = vsub.f32 %v48, %v212
  %v214 = vand.u32 %v213, 4294901760
  %v215 = vsub.f32 %v213, %v214
  %v216 = vand.u32 %v215, 4294901760
  %217 = vmatpush.msra.mxu0 %v216
  %v218 = vand.u32 %v47, 4294901760
  %v219 = vsub.f32 %v47, %v218
  %v220 = vand.u32 %v219, 4294901760
  %v221 = vsub.f32 %v219, %v220
  %v222 = vand.u32 %v221, 4294901760
  %223 = vmatpush.msra.mxu0 %v222
  %v224 = vand.u32 %v46, 4294901760
  %v225 = vsub.f32 %v46, %v224
  %v226 = vand.u32 %v225, 4294901760
  %v227 = vsub.f32 %v225, %v226
  %v228 = vand.u32 %v227, 4294901760
  %229 = vmatpush.msra.mxu0 %v228
  %v230 = vand.u32 %v45, 4294901760
  %v231 = vsub.f32 %v45, %v230
  %v232 = vand.u32 %v231, 4294901760
  %v233 = vsub.f32 %v231, %v232
  %v234 = vand.u32 %v233, 4294901760
  %235 = vmatpush.msra.mxu0 %v234
  %v236 = vand.u32 %v44, 4294901760
  %v237 = vsub.f32 %v44, %v236
  %v238 = vand.u32 %v237, 4294901760
  %v239 = vsub.f32 %v237, %v238
  %v240 = vand.u32 %v239, 4294901760
  %241 = vmatpush.msra.mxu0 %v240
  %v242 = vand.u32 %v43, 4294901760
  %v243 = vsub.f32 %v43, %v242
  %v244 = vand.u32 %v243, 4294901760
  %v245 = vsub.f32 %v243, %v244
  %v246 = vand.u32 %v245, 4294901760
  %247 = vmatpush.msra.mxu0 %v246
  %v248 = vand.u32 %v42, 4294901760
  %v249 = vsub.f32 %v42, %v248
  %v250 = vand.u32 %v249, 4294901760
  %v251 = vsub.f32 %v249, %v250
  %v252 = vand.u32 %v251, 4294901760
  %253 = vmatpush.msra.mxu0 %v252
  %v254 = vand.u32 %v41, 4294901760
  %v255 = vsub.f32 %v41, %v254
  %v256 = vand.u32 %v255, 4294901760
  %v257 = vsub.f32 %v255, %v256
  %v258 = vand.u32 %v257, 4294901760
  %259 = vmatpush.msra.mxu0 %v258
  %v260 = vand.u32 %v40, 4294901760
  %v261 = vsub.f32 %v40, %v260
  %v262 = vand.u32 %v261, 4294901760
  %v263 = vsub.f32 %v261, %v262
  %v264 = vand.u32 %v263, 4294901760
  %265 = vmatpush.msra.mxu0 %v264
  %v266 = vand.u32 %v39, 4294901760
  %v267 = vsub.f32 %v39, %v266
  %v268 = vand.u32 %v267, 4294901760
  %v269 = vsub.f32 %v267, %v268
  %v270 = vand.u32 %v269, 4294901760
  %271 = vmatpush.msra.mxu0 %v270
  %v272 = vand.u32 %v38, 4294901760
  %v273 = vsub.f32 %v38, %v272
  %v274 = vand.u32 %v273, 4294901760
  %v275 = vsub.f32 %v273, %v274
  %v276 = vand.u32 %v275, 4294901760
  %277 = vmatpush.msra.mxu0 %v276
  %v278 = vand.u32 %v37, 4294901760
  %v279 = vsub.f32 %v37, %v278
  %v280 = vand.u32 %v279, 4294901760
  %v281 = vsub.f32 %v279, %v280
  %v282 = vand.u32 %v281, 4294901760
  %283 = vmatpush.msra.mxu0 %v282
  %v284 = vand.u32 %v36, 4294901760
  %v285 = vsub.f32 %v36, %v284
  %v286 = vand.u32 %v285, 4294901760
  %v287 = vsub.f32 %v285, %v286
  %v288 = vand.u32 %v287, 4294901760
  %289 = vmatpush.msra.mxu0 %v288
  %v290 = vand.u32 %v35, 4294901760
  %v291 = vsub.f32 %v35, %v290
  %v292 = vand.u32 %v291, 4294901760
  %v293 = vsub.f32 %v291, %v292
  %v294 = vand.u32 %v293, 4294901760
  %295 = vmatpush.msra.mxu0 %v294
  %v296 = vand.u32 %v34, 4294901760
  %v297 = vsub.f32 %v34, %v296
  %v298 = vand.u32 %v297, 4294901760
  %v299 = vsub.f32 %v297, %v298
  %v300 = vand.u32 %v299, 4294901760
  %301 = vmatpush.msra.mxu0 %v300
  %v302 = vand.u32 %v33, 4294901760
  %v303 = vsub.f32 %v33, %v302
  %v304 = vand.u32 %v303, 4294901760
  %v305 = vsub.f32 %v303, %v304
  %v306 = vand.u32 %v305, 4294901760
  %307 = vmatpush.msra.mxu0 %v306
  %v308 = vand.u32 %v17, 4294901760
  %309 = vmatmul.f32.gmra.mxu0 %v308
  %v310 = vpop.f32.mrf.mxu0
  %v311 = vadd.f32 %v90, %v310
  %v312 = vand.u32 %v18, 4294901760
  %313 = vmatmul.f32.gmra.mxu0 %v312
  %v314 = vpop.f32.mrf.mxu0
  %v315 = vadd.f32 %v98, %v314
  %v316 = vand.u32 %v19, 4294901760
  %317 = vmatmul.f32.gmra.mxu0 %v316
  %v318 = vpop.f32.mrf.mxu0
  %v319 = vadd.f32 %v106, %v318
  %v320 = vand.u32 %v20, 4294901760
  %321 = vmatmul.f32.gmra.mxu0 %v320
  %v322 = vpop.f32.mrf.mxu0
  %v323 = vadd.f32 %v114, %v322
  %v324 = vand.u32 %v21, 4294901760
  %325 = vmatmul.f32.gmra.mxu0 %v324
  %v326 = vpop.f32.mrf.mxu0
  %v327 = vadd.f32 %v122, %v326
  %v328 = vand.u32 %v22, 4294901760
  %329 = vmatmul.f32.gmra.mxu0 %v328
  %v330 = vpop.f32.mrf.mxu0
  %v331 = vadd.f32 %v130, %v330
  %v332 = vand.u32 %v23, 4294901760
  %333 = vmatmul.f32.gmra.mxu0 %v332
  %v334 = vpop.f32.mrf.mxu0
  %v335 = vadd.f32 %v138, %v334
  %v336 = vand.u32 %v24, 4294901760
  %337 = vmatmul.f32.gmra.mxu0 %v336
  %v338 = vpop.f32.mrf.mxu0
  %v339 = vadd.f32 %v146, %v338
  %v340 = vand.u32 %v25, 4294901760
  %341 = vmatmul.f32.gmra.mxu0 %v340
  %v342 = vpop.f32.mrf.mxu0
  %v343 = vadd.f32 %v154, %v342
  %v344 = vand.u32 %v26, 4294901760
  %345 = vmatmul.f32.gmra.mxu0 %v344
  %v346 = vpop.f32.mrf.mxu0
  %v347 = vadd.f32 %v162, %v346
  %v348 = vand.u32 %v27, 4294901760
  %349 = vmatmul.f32.gmra.mxu0 %v348
  %v350 = vpop.f32.mrf.mxu0
  %v351 = vadd.f32 %v170, %v350
  %v352 = vand.u32 %v28, 4294901760
  %353 = vmatmul.f32.gmra.mxu0 %v352
  %v354 = vpop.f32.mrf.mxu0
  %v355 = vadd.f32 %v178, %v354
  %v356 = vand.u32 %v29, 4294901760
  %357 = vmatmul.f32.gmra.mxu0 %v356
  %v358 = vpop.f32.mrf.mxu0
  %v359 = vadd.f32 %v186, %v358
  %v360 = vand.u32 %v30, 4294901760
  %361 = vmatmul.f32.gmra.mxu0 %v360
  %v362 = vpop.f32.mrf.mxu0
  %v363 = vadd.f32 %v194, %v362
  %v364 = vand.u32 %v31, 4294901760
  %365 = vmatmul.f32.gmra.mxu0 %v364
  %v366 = vpop.f32.mrf.mxu0
  %v367 = vadd.f32 %v202, %v366
  %v368 = vand.u32 %v32, 4294901760
  %369 = vmatmul.f32.gmra.mxu0 %v368
  %v370 = vpop.f32.mrf.mxu0
  %v371 = vadd.f32 %v210, %v370
  %372 = vdwg.mxu0
  %v373 = vand.u32 %v48, 4294901760
  %v374 = vsub.f32 %v48, %v373
  %375 = vmatpush.msra.mxu0 %v374
  %v376 = vand.u32 %v47, 4294901760
  %v377 = vsub.f32 %v47, %v376
  %378 = vmatpush.msra.mxu0 %v377
  %v379 = vand.u32 %v46, 4294901760
  %v380 = vsub.f32 %v46, %v379
  %381 = vmatpush.msra.mxu0 %v380
  %v382 = vand.u32 %v45, 4294901760
  %v383 = vsub.f32 %v45, %v382
  %384 = vmatpush.msra.mxu0 %v383
  %v385 = vand.u32 %v44, 4294901760
  %v386 = vsub.f32 %v44, %v385
  %387 = vmatpush.msra.mxu0 %v386
  %v388 = vand.u32 %v43, 4294901760
  %v389 = vsub.f32 %v43, %v388
  %390 = vmatpush.msra.mxu0 %v389
  %v391 = vand.u32 %v42, 4294901760
  %v392 = vsub.f32 %v42, %v391
  %393 = vmatpush.msra.mxu0 %v392
  %v394 = vand.u32 %v41, 4294901760
  %v395 = vsub.f32 %v41, %v394
  %396 = vmatpush.msra.mxu0 %v395
  %v397 = vand.u32 %v40, 4294901760
  %v398 = vsub.f32 %v40, %v397
  %399 = vmatpush.msra.mxu0 %v398
  %v400 = vand.u32 %v39, 4294901760
  %v401 = vsub.f32 %v39, %v400
  %402 = vmatpush.msra.mxu0 %v401
  %v403 = vand.u32 %v38, 4294901760
  %v404 = vsub.f32 %v38, %v403
  %405 = vmatpush.msra.mxu0 %v404
  %v406 = vand.u32 %v37, 4294901760
  %v407 = vsub.f32 %v37, %v406
  %408 = vmatpush.msra.mxu0 %v407
  %v409 = vand.u32 %v36, 4294901760
  %v410 = vsub.f32 %v36, %v409
  %411 = vmatpush.msra.mxu0 %v410
  %v412 = vand.u32 %v35, 4294901760
  %v413 = vsub.f32 %v35, %v412
  %414 = vmatpush.msra.mxu0 %v413
  %v415 = vand.u32 %v34, 4294901760
  %v416 = vsub.f32 %v34, %v415
  %417 = vmatpush.msra.mxu0 %v416
  %v418 = vand.u32 %v33, 4294901760
  %v419 = vsub.f32 %v33, %v418
  %420 = vmatpush.msra.mxu0 %v419
  %v421 = vand.u32 %v17, 4294901760
  %v422 = vsub.f32 %v17, %v421
  %423 = vmatmul.f32.gmra.mxu0 %v422
  %v424 = vpop.f32.mrf.mxu0
  %v425 = vadd.f32 %v311, %v424
  %v426 = vand.u32 %v18, 4294901760
  %v427 = vsub.f32 %v18, %v426
  %428 = vmatmul.f32.gmra.mxu0 %v427
  %v429 = vpop.f32.mrf.mxu0
  %v430 = vadd.f32 %v315, %v429
  %v431 = vand.u32 %v19, 4294901760
  %v432 = vsub.f32 %v19, %v431
  %433 = vmatmul.f32.gmra.mxu0 %v432
  %v434 = vpop.f32.mrf.mxu0
  %v435 = vadd.f32 %v319, %v434
  %v436 = vand.u32 %v20, 4294901760
  %v437 = vsub.f32 %v20, %v436
  %438 = vmatmul.f32.gmra.mxu0 %v437
  %v439 = vpop.f32.mrf.mxu0
  %v440 = vadd.f32 %v323, %v439
  %v441 = vand.u32 %v21, 4294901760
  %v442 = vsub.f32 %v21, %v441
  %443 = vmatmul.f32.gmra.mxu0 %v442
  %v444 = vpop.f32.mrf.mxu0
  %v445 = vadd.f32 %v327, %v444
  %v446 = vand.u32 %v22, 4294901760
  %v447 = vsub.f32 %v22, %v446
  %448 = vmatmul.f32.gmra.mxu0 %v447
  %v449 = vpop.f32.mrf.mxu0
  %v450 = vadd.f32 %v331, %v449
  %v451 = vand.u32 %v23, 4294901760
  %v452 = vsub.f32 %v23, %v451
  %453 = vmatmul.f32.gmra.mxu0 %v452
  %v454 = vpop.f32.mrf.mxu0
  %v455 = vadd.f32 %v335, %v454
  %v456 = vand.u32 %v24, 4294901760
  %v457 = vsub.f32 %v24, %v456
  %458 = vmatmul.f32.gmra.mxu0 %v457
  %v459 = vpop.f32.mrf.mxu0
  %v460 = vadd.f32 %v339, %v459
  %v461 = vand.u32 %v25, 4294901760
  %v462 = vsub.f32 %v25, %v461
  %463 = vmatmul.f32.gmra.mxu0 %v462
  %v464 = vpop.f32.mrf.mxu0
  %v465 = vadd.f32 %v343, %v464
  %v466 = vand.u32 %v26, 4294901760
  %v467 = vsub.f32 %v26, %v466
  %468 = vmatmul.f32.gmra.mxu0 %v467
  %v469 = vpop.f32.mrf.mxu0
  %v470 = vadd.f32 %v347, %v469
  %v471 = vand.u32 %v27, 4294901760
  %v472 = vsub.f32 %v27, %v471
  %473 = vmatmul.f32.gmra.mxu0 %v472
  %v474 = vpop.f32.mrf.mxu0
  %v475 = vadd.f32 %v351, %v474
  %v476 = vand.u32 %v28, 4294901760
  %v477 = vsub.f32 %v28, %v476
  %478 = vmatmul.f32.gmra.mxu0 %v477
  %v479 = vpop.f32.mrf.mxu0
  %v480 = vadd.f32 %v355, %v479
  %v481 = vand.u32 %v29, 4294901760
  %v482 = vsub.f32 %v29, %v481
  %483 = vmatmul.f32.gmra.mxu0 %v482
  %v484 = vpop.f32.mrf.mxu0
  %v485 = vadd.f32 %v359, %v484
  %v486 = vand.u32 %v30, 4294901760
  %v487 = vsub.f32 %v30, %v486
  %488 = vmatmul.f32.gmra.mxu0 %v487
  %v489 = vpop.f32.mrf.mxu0
  %v490 = vadd.f32 %v363, %v489
  %v491 = vand.u32 %v31, 4294901760
  %v492 = vsub.f32 %v31, %v491
  %493 = vmatmul.f32.gmra.mxu0 %v492
  %v494 = vpop.f32.mrf.mxu0
  %v495 = vadd.f32 %v367, %v494
  %v496 = vand.u32 %v32, 4294901760
  %v497 = vsub.f32 %v32, %v496
  %498 = vmatmul.f32.gmra.mxu0 %v497
  %v499 = vpop.f32.mrf.mxu0
  %v500 = vadd.f32 %v371, %v499
  %501 = vdwg.mxu0
  %v502 = vand.u32 %v48, 4294901760
  %503 = vmatpush.msra.mxu0 %v502
  %v504 = vand.u32 %v47, 4294901760
  %505 = vmatpush.msra.mxu0 %v504
  %v506 = vand.u32 %v46, 4294901760
  %507 = vmatpush.msra.mxu0 %v506
  %v508 = vand.u32 %v45, 4294901760
  %509 = vmatpush.msra.mxu0 %v508
  %v510 = vand.u32 %v44, 4294901760
  %511 = vmatpush.msra.mxu0 %v510
  %v512 = vand.u32 %v43, 4294901760
  %513 = vmatpush.msra.mxu0 %v512
  %v514 = vand.u32 %v42, 4294901760
  %515 = vmatpush.msra.mxu0 %v514
  %v516 = vand.u32 %v41, 4294901760
  %517 = vmatpush.msra.mxu0 %v516
  %v518 = vand.u32 %v40, 4294901760
  %519 = vmatpush.msra.mxu0 %v518
  %v520 = vand.u32 %v39, 4294901760
  %521 = vmatpush.msra.mxu0 %v520
  %v522 = vand.u32 %v38, 4294901760
  %523 = vmatpush.msra.mxu0 %v522
  %v524 = vand.u32 %v37, 4294901760
  %525 = vmatpush.msra.mxu0 %v524
  %v526 = vand.u32 %v36, 4294901760
  %527 = vmatpush.msra.mxu0 %v526
  %v528 = vand.u32 %v35, 4294901760
  %529 = vmatpush.msra.mxu0 %v528
  %v530 = vand.u32 %v34, 4294901760
  %531 = vmatpush.msra.mxu0 %v530
  %v532 = vand.u32 %v33, 4294901760
  %533 = vmatpush.msra.mxu0 %v532
  %v534 = vand.u32 %v17, 4294901760
  %v535 = vsub.f32 %v17, %v534
  %v536 = vand.u32 %v535, 4294901760
  %537 = vmatmul.f32.gmra.mxu0 %v536
  %v538 = vpop.f32.mrf.mxu0
  %v539 = vadd.f32 %v425, %v538
  %v540 = vand.u32 %v18, 4294901760
  %v541 = vsub.f32 %v18, %v540
  %v542 = vand.u32 %v541, 4294901760
  %543 = vmatmul.f32.gmra.mxu0 %v542
  %v544 = vpop.f32.mrf.mxu0
  %v545 = vadd.f32 %v430, %v544
  %v546 = vand.u32 %v19, 4294901760
  %v547 = vsub.f32 %v19, %v546
  %v548 = vand.u32 %v547, 4294901760
  %549 = vmatmul.f32.gmra.mxu0 %v548
  %v550 = vpop.f32.mrf.mxu0
  %v551 = vadd.f32 %v435, %v550
  %v552 = vand.u32 %v20, 4294901760
  %v553 = vsub.f32 %v20, %v552
  %v554 = vand.u32 %v553, 4294901760
  %555 = vmatmul.f32.gmra.mxu0 %v554
  %v556 = vpop.f32.mrf.mxu0
  %v557 = vadd.f32 %v440, %v556
  %v558 = vand.u32 %v21, 4294901760
  %v559 = vsub.f32 %v21, %v558
  %v560 = vand.u32 %v559, 4294901760
  %561 = vmatmul.f32.gmra.mxu0 %v560
  %v562 = vpop.f32.mrf.mxu0
  %v563 = vadd.f32 %v445, %v562
  %v564 = vand.u32 %v22, 4294901760
  %v565 = vsub.f32 %v22, %v564
  %v566 = vand.u32 %v565, 4294901760
  %567 = vmatmul.f32.gmra.mxu0 %v566
  %v568 = vpop.f32.mrf.mxu0
  %v569 = vadd.f32 %v450, %v568
  %v570 = vand.u32 %v23, 4294901760
  %v571 = vsub.f32 %v23, %v570
  %v572 = vand.u32 %v571, 4294901760
  %573 = vmatmul.f32.gmra.mxu0 %v572
  %v574 = vpop.f32.mrf.mxu0
  %v575 = vadd.f32 %v455, %v574
  %v576 = vand.u32 %v24, 4294901760
  %v577 = vsub.f32 %v24, %v576
  %v578 = vand.u32 %v577, 4294901760
  %579 = vmatmul.f32.gmra.mxu0 %v578
  %v580 = vpop.f32.mrf.mxu0
  %v581 = vadd.f32 %v460, %v580
  %v582 = vand.u32 %v25, 4294901760
  %v583 = vsub.f32 %v25, %v582
  %v584 = vand.u32 %v583, 4294901760
  %585 = vmatmul.f32.gmra.mxu0 %v584
  %v586 = vpop.f32.mrf.mxu0
  %v587 = vadd.f32 %v465, %v586
  %v588 = vand.u32 %v26, 4294901760
  %v589 = vsub.f32 %v26, %v588
  %v590 = vand.u32 %v589, 4294901760
  %591 = vmatmul.f32.gmra.mxu0 %v590
  %v592 = vpop.f32.mrf.mxu0
  %v593 = vadd.f32 %v470, %v592
  %v594 = vand.u32 %v27, 4294901760
  %v595 = vsub.f32 %v27, %v594
  %v596 = vand.u32 %v595, 4294901760
  %597 = vmatmul.f32.gmra.mxu0 %v596
  %v598 = vpop.f32.mrf.mxu0
  %v599 = vadd.f32 %v475, %v598
  %v600 = vand.u32 %v28, 4294901760
  %v601 = vsub.f32 %v28, %v600
  %v602 = vand.u32 %v601, 4294901760
  %603 = vmatmul.f32.gmra.mxu0 %v602
  %v604 = vpop.f32.mrf.mxu0
  %v605 = vadd.f32 %v480, %v604
  %v606 = vand.u32 %v29, 4294901760
  %v607 = vsub.f32 %v29, %v606
  %v608 = vand.u32 %v607, 4294901760
  %609 = vmatmul.f32.gmra.mxu0 %v608
  %v610 = vpop.f32.mrf.mxu0
  %v611 = vadd.f32 %v485, %v610
  %v612 = vand.u32 %v30, 4294901760
  %v613 = vsub.f32 %v30, %v612
  %v614 = vand.u32 %v613, 4294901760
  %615 = vmatmul.f32.gmra.mxu0 %v614
  %v616 = vpop.f32.mrf.mxu0
  %v617 = vadd.f32 %v490, %v616
  %v618 = vand.u32 %v31, 4294901760
  %v619 = vsub.f32 %v31, %v618
  %v620 = vand.u32 %v619, 4294901760
  %621 = vmatmul.f32.gmra.mxu0 %v620
  %v622 = vpop.f32.mrf.mxu0
  %v623 = vadd.f32 %v495, %v622
  %v624 = vand.u32 %v32, 4294901760
  %v625 = vsub.f32 %v32, %v624
  %v626 = vand.u32 %v625, 4294901760
  %627 = vmatmul.f32.gmra.mxu0 %v626
  %v628 = vpop.f32.mrf.mxu0
  %v629 = vadd.f32 %v500, %v628
  %630 = vdwg.mxu0
  %v631 = vand.u32 %v48, 4294901760
  %v632 = vsub.f32 %v48, %v631
  %v633 = vand.u32 %v632, 4294901760
  %634 = vmatpush.msra.mxu0 %v633
  %v635 = vand.u32 %v47, 4294901760
  %v636 = vsub.f32 %v47, %v635
  %v637 = vand.u32 %v636, 4294901760
  %638 = vmatpush.msra.mxu0 %v637
  %v639 = vand.u32 %v46, 4294901760
  %v640 = vsub.f32 %v46, %v639
  %v641 = vand.u32 %v640, 4294901760
  %642 = vmatpush.msra.mxu0 %v641
  %v643 = vand.u32 %v45, 4294901760
  %v644 = vsub.f32 %v45, %v643
  %v645 = vand.u32 %v644, 4294901760
  %646 = vmatpush.msra.mxu0 %v645
  %v647 = vand.u32 %v44, 4294901760
  %v648 = vsub.f32 %v44, %v647
  %v649 = vand.u32 %v648, 4294901760
  %650 = vmatpush.msra.mxu0 %v649
  %v651 = vand.u32 %v43, 4294901760
  %v652 = vsub.f32 %v43, %v651
  %v653 = vand.u32 %v652, 4294901760
  %654 = vmatpush.msra.mxu0 %v653
  %v655 = vand.u32 %v42, 4294901760
  %v656 = vsub.f32 %v42, %v655
  %v657 = vand.u32 %v656, 4294901760
  %658 = vmatpush.msra.mxu0 %v657
  %v659 = vand.u32 %v41, 4294901760
  %v660 = vsub.f32 %v41, %v659
  %v661 = vand.u32 %v660, 4294901760
  %662 = vmatpush.msra.mxu0 %v661
  %v663 = vand.u32 %v40, 4294901760
  %v664 = vsub.f32 %v40, %v663
  %v665 = vand.u32 %v664, 4294901760
  %666 = vmatpush.msra.mxu0 %v665
  %v667 = vand.u32 %v39, 4294901760
  %v668 = vsub.f32 %v39, %v667
  %v669 = vand.u32 %v668, 4294901760
  %670 = vmatpush.msra.mxu0 %v669
  %v671 = vand.u32 %v38, 4294901760
  %v672 = vsub.f32 %v38, %v671
  %v673 = vand.u32 %v672, 4294901760
  %674 = vmatpush.msra.mxu0 %v673
  %v675 = vand.u32 %v37, 4294901760
  %v676 = vsub.f32 %v37, %v675
  %v677 = vand.u32 %v676, 4294901760
  %678 = vmatpush.msra.mxu0 %v677
  %v679 = vand.u32 %v36, 4294901760
  %v680 = vsub.f32 %v36, %v679
  %v681 = vand.u32 %v680, 4294901760
  %682 = vmatpush.msra.mxu0 %v681
  %v683 = vand.u32 %v35, 4294901760
  %v684 = vsub.f32 %v35, %v683
  %v685 = vand.u32 %v684, 4294901760
  %686 = vmatpush.msra.mxu0 %v685
  %v687 = vand.u32 %v34, 4294901760
  %v688 = vsub.f32 %v34, %v687
  %v689 = vand.u32 %v688, 4294901760
  %690 = vmatpush.msra.mxu0 %v689
  %v691 = vand.u32 %v33, 4294901760
  %v692 = vsub.f32 %v33, %v691
  %v693 = vand.u32 %v692, 4294901760
  %694 = vmatpush.msra.mxu0 %v693
  %v695 = vand.u32 %v17, 4294901760
  %696 = vmatmul.f32.gmra.mxu0 %v695
  %v697 = vpop.f32.mrf.mxu0
  %v698 = vadd.f32 %v539, %v697
  %v699 = vand.u32 %v18, 4294901760
  %700 = vmatmul.f32.gmra.mxu0 %v699
  %v701 = vpop.f32.mrf.mxu0
  %v702 = vadd.f32 %v545, %v701
  %v703 = vand.u32 %v19, 4294901760
  %704 = vmatmul.f32.gmra.mxu0 %v703
  %v705 = vpop.f32.mrf.mxu0
  %v706 = vadd.f32 %v551, %v705
  %v707 = vand.u32 %v20, 4294901760
  %708 = vmatmul.f32.gmra.mxu0 %v707
  %v709 = vpop.f32.mrf.mxu0
  %v710 = vadd.f32 %v557, %v709
  %v711 = vand.u32 %v21, 4294901760
  %712 = vmatmul.f32.gmra.mxu0 %v711
  %v713 = vpop.f32.mrf.mxu0
  %v714 = vadd.f32 %v563, %v713
  %v715 = vand.u32 %v22, 4294901760
  %716 = vmatmul.f32.gmra.mxu0 %v715
  %v717 = vpop.f32.mrf.mxu0
  %v718 = vadd.f32 %v569, %v717
  %v719 = vand.u32 %v23, 4294901760
  %720 = vmatmul.f32.gmra.mxu0 %v719
  %v721 = vpop.f32.mrf.mxu0
  %v722 = vadd.f32 %v575, %v721
  %v723 = vand.u32 %v24, 4294901760
  %724 = vmatmul.f32.gmra.mxu0 %v723
  %v725 = vpop.f32.mrf.mxu0
  %v726 = vadd.f32 %v581, %v725
  %v727 = vand.u32 %v25, 4294901760
  %728 = vmatmul.f32.gmra.mxu0 %v727
  %v729 = vpop.f32.mrf.mxu0
  %v730 = vadd.f32 %v587, %v729
  %v731 = vand.u32 %v26, 4294901760
  %732 = vmatmul.f32.gmra.mxu0 %v731
  %v733 = vpop.f32.mrf.mxu0
  %v734 = vadd.f32 %v593, %v733
  %v735 = vand.u32 %v27, 4294901760
  %736 = vmatmul.f32.gmra.mxu0 %v735
  %v737 = vpop.f32.mrf.mxu0
  %v738 = vadd.f32 %v599, %v737
  %v739 = vand.u32 %v28, 4294901760
  %740 = vmatmul.f32.gmra.mxu0 %v739
  %v741 = vpop.f32.mrf.mxu0
  %v742 = vadd.f32 %v605, %v741
  %v743 = vand.u32 %v29, 4294901760
  %744 = vmatmul.f32.gmra.mxu0 %v743
  %v745 = vpop.f32.mrf.mxu0
  %v746 = vadd.f32 %v611, %v745
  %v747 = vand.u32 %v30, 4294901760
  %748 = vmatmul.f32.gmra.mxu0 %v747
  %v749 = vpop.f32.mrf.mxu0
  %v750 = vadd.f32 %v617, %v749
  %v751 = vand.u32 %v31, 4294901760
  %752 = vmatmul.f32.gmra.mxu0 %v751
  %v753 = vpop.f32.mrf.mxu0
  %v754 = vadd.f32 %v623, %v753
  %v755 = vand.u32 %v32, 4294901760
  %756 = vmatmul.f32.gmra.mxu0 %v755
  %v757 = vpop.f32.mrf.mxu0
  %v758 = vadd.f32 %v629, %v757
  %759 = vdwg.mxu0
  %v760 = vand.u32 %v48, 4294901760
  %761 = vmatpush.msra.mxu0 %v760
  %v762 = vand.u32 %v47, 4294901760
  %763 = vmatpush.msra.mxu0 %v762
  %v764 = vand.u32 %v46, 4294901760
  %765 = vmatpush.msra.mxu0 %v764
  %v766 = vand.u32 %v45, 4294901760
  %767 = vmatpush.msra.mxu0 %v766
  %v768 = vand.u32 %v44, 4294901760
  %769 = vmatpush.msra.mxu0 %v768
  %v770 = vand.u32 %v43, 4294901760
  %771 = vmatpush.msra.mxu0 %v770
  %v772 = vand.u32 %v42, 4294901760
  %773 = vmatpush.msra.mxu0 %v772
  %v774 = vand.u32 %v41, 4294901760
  %775 = vmatpush.msra.mxu0 %v774
  %v776 = vand.u32 %v40, 4294901760
  %777 = vmatpush.msra.mxu0 %v776
  %v778 = vand.u32 %v39, 4294901760
  %779 = vmatpush.msra.mxu0 %v778
  %v780 = vand.u32 %v38, 4294901760
  %781 = vmatpush.msra.mxu0 %v780
  %v782 = vand.u32 %v37, 4294901760
  %783 = vmatpush.msra.mxu0 %v782
  %v784 = vand.u32 %v36, 4294901760
  %785 = vmatpush.msra.mxu0 %v784
  %v786 = vand.u32 %v35, 4294901760
  %787 = vmatpush.msra.mxu0 %v786
  %v788 = vand.u32 %v34, 4294901760
  %789 = vmatpush.msra.mxu0 %v788
  %v790 = vand.u32 %v33, 4294901760
  %791 = vmatpush.msra.mxu0 %v790
  %v792 = vand.u32 %v17, 4294901760
  %793 = vmatmul.f32.gmra.mxu0 %v792
  %v794 = vpop.f32.mrf.mxu0
  %v795 = vadd.f32 %v698, %v794
  %v796 = vand.u32 %v18, 4294901760
  %797 = vmatmul.f32.gmra.mxu0 %v796
  %v798 = vpop.f32.mrf.mxu0
  %v799 = vadd.f32 %v702, %v798
  %v800 = vand.u32 %v19, 4294901760
  %801 = vmatmul.f32.gmra.mxu0 %v800
  %v802 = vpop.f32.mrf.mxu0
  %v803 = vadd.f32 %v706, %v802
  %v804 = vand.u32 %v20, 4294901760
  %805 = vmatmul.f32.gmra.mxu0 %v804
  %v806 = vpop.f32.mrf.mxu0
  %v807 = vadd.f32 %v710, %v806
  %v808 = vand.u32 %v21, 4294901760
  %809 = vmatmul.f32.gmra.mxu0 %v808
  %v810 = vpop.f32.mrf.mxu0
  %v811 = vadd.f32 %v714, %v810
  %v812 = vand.u32 %v22, 4294901760
  %813 = vmatmul.f32.gmra.mxu0 %v812
  %v814 = vpop.f32.mrf.mxu0
  %v815 = vadd.f32 %v718, %v814
  %v816 = vand.u32 %v23, 4294901760
  %817 = vmatmul.f32.gmra.mxu0 %v816
  %v818 = vpop.f32.mrf.mxu0
  %v819 = vadd.f32 %v722, %v818
  %v820 = vand.u32 %v24, 4294901760
  %821 = vmatmul.f32.gmra.mxu0 %v820
  %v822 = vpop.f32.mrf.mxu0
  %v823 = vadd.f32 %v726, %v822
  %v824 = vand.u32 %v25, 4294901760
  %825 = vmatmul.f32.gmra.mxu0 %v824
  %v826 = vpop.f32.mrf.mxu0
  %v827 = vadd.f32 %v730, %v826
  %v828 = vand.u32 %v26, 4294901760
  %829 = vmatmul.f32.gmra.mxu0 %v828
  %v830 = vpop.f32.mrf.mxu0
  %v831 = vadd.f32 %v734, %v830
  %v832 = vand.u32 %v27, 4294901760
  %833 = vmatmul.f32.gmra.mxu0 %v832
  %v834 = vpop.f32.mrf.mxu0
  %v835 = vadd.f32 %v738, %v834
  %v836 = vand.u32 %v28, 4294901760
  %837 = vmatmul.f32.gmra.mxu0 %v836
  %v838 = vpop.f32.mrf.mxu0
  %v839 = vadd.f32 %v742, %v838
  %v840 = vand.u32 %v29, 4294901760
  %841 = vmatmul.f32.gmra.mxu0 %v840
  %v842 = vpop.f32.mrf.mxu0
  %v843 = vadd.f32 %v746, %v842
  %v844 = vand.u32 %v30, 4294901760
  %845 = vmatmul.f32.gmra.mxu0 %v844
  %v846 = vpop.f32.mrf.mxu0
  %v847 = vadd.f32 %v750, %v846
  %v848 = vand.u32 %v31, 4294901760
  %849 = vmatmul.f32.gmra.mxu0 %v848
  %v850 = vpop.f32.mrf.mxu0
  %v851 = vadd.f32 %v754, %v850
  %v852 = vand.u32 %v32, 4294901760
  %853 = vmatmul.f32.gmra.mxu0 %v852
  %v854 = vpop.f32.mrf.mxu0
  %v855 = vadd.f32 %v758, %v854
  %856 = vdwg.mxu0
  %v857 = vmul.f32 %v795, 0.03125
  %v858 = vmul.f32 %v799, 0.03125
  %v859 = vmul.f32 %v803, 0.03125
  %v860 = vmul.f32 %v807, 0.03125
  %v861 = vmul.f32 %v811, 0.03125
  %v862 = vmul.f32 %v815, 0.03125
  %v863 = vmul.f32 %v819, 0.03125
  %v864 = vmul.f32 %v823, 0.03125
  %v865 = vmul.f32 %v827, 0.03125
  %v866 = vmul.f32 %v831, 0.03125
  %v867 = vmul.f32 %v835, 0.03125
  %v868 = vmul.f32 %v839, 0.03125
  %v869 = vmul.f32 %v843, 0.03125
  %v870 = vmul.f32 %v847, 0.03125
  %v871 = vmul.f32 %v851, 0.03125
  %v872 = vmul.f32 %v855, 0.03125
  %vm873 = vcmask 31744
  %v875 = vsel %vm873, %v857, 0
  %v878 = vsel %vm873, %v858, 0
  %v881 = vsel %vm873, %v859, 0
  %v884 = vsel %vm873, %v860, 0
  %v887 = vsel %vm873, %v861, 0
  %v890 = vsel %vm873, %v862, 0
  %v893 = vsel %vm873, %v863, 0
  %v896 = vsel %vm873, %v864, 0
  %v899 = vsel %vm873, %v865, 0
  %v902 = vsel %vm873, %v866, 0
  %v905 = vsel %vm873, %v867, 0
  %v908 = vsel %vm873, %v868, 0
  %v911 = vsel %vm873, %v869, 0
  %v914 = vsel %vm873, %v870, 0
  %v917 = vsel %vm873, %v871, 0
  %v920 = vsel %vm873, %v872, 0
  %vm922 = vcmask 1043456
  %v924 = vsel %vm922, %v49, 0
  %926 = vmatpush.msra.mxu0 0.0
  %927 = vmatpush.msra.mxu0 0.0
  %928 = vmatpush.msra.mxu0 0.0
  %929 = vmatpush.msra.mxu0 0.0
  %930 = vmatpush.msra.mxu0 0.0
  %931 = vmatpush.msra.mxu0 0.0
  %932 = vmatpush.msra.mxu0 0.0
  %933 = vmatpush.msra.mxu0 0.0
  %934 = vmatpush.msra.mxu0 0.0
  %935 = vmatpush.msra.mxu0 0.0
  %936 = vmatpush.msra.mxu0 0.0
  %937 = vmatpush.msra.mxu0 0.0
  %938 = vmatpush.msra.mxu0 0.0
  %939 = vmatpush.msra.mxu0 0.0
  %940 = vmatpush.msra.mxu0 0.0
  %v941 = vand.u32 %v924, 4294901760
  %942 = vmatpush.msra.mxu0 %v941
  %v943 = vand.u32 %v875, 4294901760
  %v944 = vsub.f32 %v875, %v943
  %v945 = vand.u32 %v944, 4294901760
  %v946 = vsub.f32 %v944, %v945
  %v947 = vand.u32 %v946, 4294901760
  %948 = vmatmul.f32.gmra.mxu0 %v947
  %v949 = vpop.f32.mrf.mxu0
  %v950 = vadd.f32 0.0, %v949
  %v951 = vand.u32 %v878, 4294901760
  %v952 = vsub.f32 %v878, %v951
  %v953 = vand.u32 %v952, 4294901760
  %v954 = vsub.f32 %v952, %v953
  %v955 = vand.u32 %v954, 4294901760
  %956 = vmatmul.f32.gmra.mxu0 %v955
  %v957 = vpop.f32.mrf.mxu0
  %v958 = vadd.f32 0.0, %v957
  %v959 = vand.u32 %v881, 4294901760
  %v960 = vsub.f32 %v881, %v959
  %v961 = vand.u32 %v960, 4294901760
  %v962 = vsub.f32 %v960, %v961
  %v963 = vand.u32 %v962, 4294901760
  %964 = vmatmul.f32.gmra.mxu0 %v963
  %v965 = vpop.f32.mrf.mxu0
  %v966 = vadd.f32 0.0, %v965
  %v967 = vand.u32 %v884, 4294901760
  %v968 = vsub.f32 %v884, %v967
  %v969 = vand.u32 %v968, 4294901760
  %v970 = vsub.f32 %v968, %v969
  %v971 = vand.u32 %v970, 4294901760
  %972 = vmatmul.f32.gmra.mxu0 %v971
  %v973 = vpop.f32.mrf.mxu0
  %v974 = vadd.f32 0.0, %v973
  %v975 = vand.u32 %v887, 4294901760
  %v976 = vsub.f32 %v887, %v975
  %v977 = vand.u32 %v976, 4294901760
  %v978 = vsub.f32 %v976, %v977
  %v979 = vand.u32 %v978, 4294901760
  %980 = vmatmul.f32.gmra.mxu0 %v979
  %v981 = vpop.f32.mrf.mxu0
  %v982 = vadd.f32 0.0, %v981
  %v983 = vand.u32 %v890, 4294901760
  %v984 = vsub.f32 %v890, %v983
  %v985 = vand.u32 %v984, 4294901760
  %v986 = vsub.f32 %v984, %v985
  %v987 = vand.u32 %v986, 4294901760
  %988 = vmatmul.f32.gmra.mxu0 %v987
  %v989 = vpop.f32.mrf.mxu0
  %v990 = vadd.f32 0.0, %v989
  %v991 = vand.u32 %v893, 4294901760
  %v992 = vsub.f32 %v893, %v991
  %v993 = vand.u32 %v992, 4294901760
  %v994 = vsub.f32 %v992, %v993
  %v995 = vand.u32 %v994, 4294901760
  %996 = vmatmul.f32.gmra.mxu0 %v995
  %v997 = vpop.f32.mrf.mxu0
  %v998 = vadd.f32 0.0, %v997
  %v999 = vand.u32 %v896, 4294901760
  %v1000 = vsub.f32 %v896, %v999
  %v1001 = vand.u32 %v1000, 4294901760
  %v1002 = vsub.f32 %v1000, %v1001
  %v1003 = vand.u32 %v1002, 4294901760
  %1004 = vmatmul.f32.gmra.mxu0 %v1003
  %v1005 = vpop.f32.mrf.mxu0
  %v1006 = vadd.f32 0.0, %v1005
  %v1007 = vand.u32 %v899, 4294901760
  %v1008 = vsub.f32 %v899, %v1007
  %v1009 = vand.u32 %v1008, 4294901760
  %v1010 = vsub.f32 %v1008, %v1009
  %v1011 = vand.u32 %v1010, 4294901760
  %1012 = vmatmul.f32.gmra.mxu0 %v1011
  %v1013 = vpop.f32.mrf.mxu0
  %v1014 = vadd.f32 0.0, %v1013
  %v1015 = vand.u32 %v902, 4294901760
  %v1016 = vsub.f32 %v902, %v1015
  %v1017 = vand.u32 %v1016, 4294901760
  %v1018 = vsub.f32 %v1016, %v1017
  %v1019 = vand.u32 %v1018, 4294901760
  %1020 = vmatmul.f32.gmra.mxu0 %v1019
  %v1021 = vpop.f32.mrf.mxu0
  %v1022 = vadd.f32 0.0, %v1021
  %v1023 = vand.u32 %v905, 4294901760
  %v1024 = vsub.f32 %v905, %v1023
  %v1025 = vand.u32 %v1024, 4294901760
  %v1026 = vsub.f32 %v1024, %v1025
  %v1027 = vand.u32 %v1026, 4294901760
  %1028 = vmatmul.f32.gmra.mxu0 %v1027
  %v1029 = vpop.f32.mrf.mxu0
  %v1030 = vadd.f32 0.0, %v1029
  %v1031 = vand.u32 %v908, 4294901760
  %v1032 = vsub.f32 %v908, %v1031
  %v1033 = vand.u32 %v1032, 4294901760
  %v1034 = vsub.f32 %v1032, %v1033
  %v1035 = vand.u32 %v1034, 4294901760
  %1036 = vmatmul.f32.gmra.mxu0 %v1035
  %v1037 = vpop.f32.mrf.mxu0
  %v1038 = vadd.f32 0.0, %v1037
  %v1039 = vand.u32 %v911, 4294901760
  %v1040 = vsub.f32 %v911, %v1039
  %v1041 = vand.u32 %v1040, 4294901760
  %v1042 = vsub.f32 %v1040, %v1041
  %v1043 = vand.u32 %v1042, 4294901760
  %1044 = vmatmul.f32.gmra.mxu0 %v1043
  %v1045 = vpop.f32.mrf.mxu0
  %v1046 = vadd.f32 0.0, %v1045
  %v1047 = vand.u32 %v914, 4294901760
  %v1048 = vsub.f32 %v914, %v1047
  %v1049 = vand.u32 %v1048, 4294901760
  %v1050 = vsub.f32 %v1048, %v1049
  %v1051 = vand.u32 %v1050, 4294901760
  %1052 = vmatmul.f32.gmra.mxu0 %v1051
  %v1053 = vpop.f32.mrf.mxu0
  %v1054 = vadd.f32 0.0, %v1053
  %v1055 = vand.u32 %v917, 4294901760
  %v1056 = vsub.f32 %v917, %v1055
  %v1057 = vand.u32 %v1056, 4294901760
  %v1058 = vsub.f32 %v1056, %v1057
  %v1059 = vand.u32 %v1058, 4294901760
  %1060 = vmatmul.f32.gmra.mxu0 %v1059
  %v1061 = vpop.f32.mrf.mxu0
  %v1062 = vadd.f32 0.0, %v1061
  %v1063 = vand.u32 %v920, 4294901760
  %v1064 = vsub.f32 %v920, %v1063
  %v1065 = vand.u32 %v1064, 4294901760
  %v1066 = vsub.f32 %v1064, %v1065
  %v1067 = vand.u32 %v1066, 4294901760
  %1068 = vmatmul.f32.gmra.mxu0 %v1067
  %v1069 = vpop.f32.mrf.mxu0
  %v1070 = vadd.f32 0.0, %v1069
  %1071 = vdwg.mxu0
  %1072 = vmatpush.msra.mxu0 0.0
  %1073 = vmatpush.msra.mxu0 0.0
  %1074 = vmatpush.msra.mxu0 0.0
  %1075 = vmatpush.msra.mxu0 0.0
  %1076 = vmatpush.msra.mxu0 0.0
  %1077 = vmatpush.msra.mxu0 0.0
  %1078 = vmatpush.msra.mxu0 0.0
  %1079 = vmatpush.msra.mxu0 0.0
  %1080 = vmatpush.msra.mxu0 0.0
  %1081 = vmatpush.msra.mxu0 0.0
  %1082 = vmatpush.msra.mxu0 0.0
  %1083 = vmatpush.msra.mxu0 0.0
  %1084 = vmatpush.msra.mxu0 0.0
  %1085 = vmatpush.msra.mxu0 0.0
  %1086 = vmatpush.msra.mxu0 0.0
  %v1087 = vand.u32 %v924, 4294901760
  %v1088 = vsub.f32 %v924, %v1087
  %v1089 = vand.u32 %v1088, 4294901760
  %v1090 = vsub.f32 %v1088, %v1089
  %v1091 = vand.u32 %v1090, 4294901760
  %1092 = vmatpush.msra.mxu0 %v1091
  %v1093 = vand.u32 %v875, 4294901760
  %1094 = vmatmul.f32.gmra.mxu0 %v1093
  %v1095 = vpop.f32.mrf.mxu0
  %v1096 = vadd.f32 %v950, %v1095
  %v1097 = vand.u32 %v878, 4294901760
  %1098 = vmatmul.f32.gmra.mxu0 %v1097
  %v1099 = vpop.f32.mrf.mxu0
  %v1100 = vadd.f32 %v958, %v1099
  %v1101 = vand.u32 %v881, 4294901760
  %1102 = vmatmul.f32.gmra.mxu0 %v1101
  %v1103 = vpop.f32.mrf.mxu0
  %v1104 = vadd.f32 %v966, %v1103
  %v1105 = vand.u32 %v884, 4294901760
  %1106 = vmatmul.f32.gmra.mxu0 %v1105
  %v1107 = vpop.f32.mrf.mxu0
  %v1108 = vadd.f32 %v974, %v1107
  %v1109 = vand.u32 %v887, 4294901760
  %1110 = vmatmul.f32.gmra.mxu0 %v1109
  %v1111 = vpop.f32.mrf.mxu0
  %v1112 = vadd.f32 %v982, %v1111
  %v1113 = vand.u32 %v890, 4294901760
  %1114 = vmatmul.f32.gmra.mxu0 %v1113
  %v1115 = vpop.f32.mrf.mxu0
  %v1116 = vadd.f32 %v990, %v1115
  %v1117 = vand.u32 %v893, 4294901760
  %1118 = vmatmul.f32.gmra.mxu0 %v1117
  %v1119 = vpop.f32.mrf.mxu0
  %v1120 = vadd.f32 %v998, %v1119
  %v1121 = vand.u32 %v896, 4294901760
  %1122 = vmatmul.f32.gmra.mxu0 %v1121
  %v1123 = vpop.f32.mrf.mxu0
  %v1124 = vadd.f32 %v1006, %v1123
  %v1125 = vand.u32 %v899, 4294901760
  %1126 = vmatmul.f32.gmra.mxu0 %v1125
  %v1127 = vpop.f32.mrf.mxu0
  %v1128 = vadd.f32 %v1014, %v1127
  %v1129 = vand.u32 %v902, 4294901760
  %1130 = vmatmul.f32.gmra.mxu0 %v1129
  %v1131 = vpop.f32.mrf.mxu0
  %v1132 = vadd.f32 %v1022, %v1131
  %v1133 = vand.u32 %v905, 4294901760
  %1134 = vmatmul.f32.gmra.mxu0 %v1133
  %v1135 = vpop.f32.mrf.mxu0
  %v1136 = vadd.f32 %v1030, %v1135
  %v1137 = vand.u32 %v908, 4294901760
  %1138 = vmatmul.f32.gmra.mxu0 %v1137
  %v1139 = vpop.f32.mrf.mxu0
  %v1140 = vadd.f32 %v1038, %v1139
  %v1141 = vand.u32 %v911, 4294901760
  %1142 = vmatmul.f32.gmra.mxu0 %v1141
  %v1143 = vpop.f32.mrf.mxu0
  %v1144 = vadd.f32 %v1046, %v1143
  %v1145 = vand.u32 %v914, 4294901760
  %1146 = vmatmul.f32.gmra.mxu0 %v1145
  %v1147 = vpop.f32.mrf.mxu0
  %v1148 = vadd.f32 %v1054, %v1147
  %v1149 = vand.u32 %v917, 4294901760
  %1150 = vmatmul.f32.gmra.mxu0 %v1149
  %v1151 = vpop.f32.mrf.mxu0
  %v1152 = vadd.f32 %v1062, %v1151
  %v1153 = vand.u32 %v920, 4294901760
  %1154 = vmatmul.f32.gmra.mxu0 %v1153
  %v1155 = vpop.f32.mrf.mxu0
  %v1156 = vadd.f32 %v1070, %v1155
  %1157 = vdwg.mxu0
  %1158 = vmatpush.msra.mxu0 0.0
  %1159 = vmatpush.msra.mxu0 0.0
  %1160 = vmatpush.msra.mxu0 0.0
  %1161 = vmatpush.msra.mxu0 0.0
  %1162 = vmatpush.msra.mxu0 0.0
  %1163 = vmatpush.msra.mxu0 0.0
  %1164 = vmatpush.msra.mxu0 0.0
  %1165 = vmatpush.msra.mxu0 0.0
  %1166 = vmatpush.msra.mxu0 0.0
  %1167 = vmatpush.msra.mxu0 0.0
  %1168 = vmatpush.msra.mxu0 0.0
  %1169 = vmatpush.msra.mxu0 0.0
  %1170 = vmatpush.msra.mxu0 0.0
  %1171 = vmatpush.msra.mxu0 0.0
  %1172 = vmatpush.msra.mxu0 0.0
  %v1173 = vand.u32 %v924, 4294901760
  %v1174 = vsub.f32 %v924, %v1173
  %1175 = vmatpush.msra.mxu0 %v1174
  %v1176 = vand.u32 %v875, 4294901760
  %v1177 = vsub.f32 %v875, %v1176
  %1178 = vmatmul.f32.gmra.mxu0 %v1177
  %v1179 = vpop.f32.mrf.mxu0
  %v1180 = vadd.f32 %v1096, %v1179
  %v1181 = vand.u32 %v878, 4294901760
  %v1182 = vsub.f32 %v878, %v1181
  %1183 = vmatmul.f32.gmra.mxu0 %v1182
  %v1184 = vpop.f32.mrf.mxu0
  %v1185 = vadd.f32 %v1100, %v1184
  %v1186 = vand.u32 %v881, 4294901760
  %v1187 = vsub.f32 %v881, %v1186
  %1188 = vmatmul.f32.gmra.mxu0 %v1187
  %v1189 = vpop.f32.mrf.mxu0
  %v1190 = vadd.f32 %v1104, %v1189
  %v1191 = vand.u32 %v884, 4294901760
  %v1192 = vsub.f32 %v884, %v1191
  %1193 = vmatmul.f32.gmra.mxu0 %v1192
  %v1194 = vpop.f32.mrf.mxu0
  %v1195 = vadd.f32 %v1108, %v1194
  %v1196 = vand.u32 %v887, 4294901760
  %v1197 = vsub.f32 %v887, %v1196
  %1198 = vmatmul.f32.gmra.mxu0 %v1197
  %v1199 = vpop.f32.mrf.mxu0
  %v1200 = vadd.f32 %v1112, %v1199
  %v1201 = vand.u32 %v890, 4294901760
  %v1202 = vsub.f32 %v890, %v1201
  %1203 = vmatmul.f32.gmra.mxu0 %v1202
  %v1204 = vpop.f32.mrf.mxu0
  %v1205 = vadd.f32 %v1116, %v1204
  %v1206 = vand.u32 %v893, 4294901760
  %v1207 = vsub.f32 %v893, %v1206
  %1208 = vmatmul.f32.gmra.mxu0 %v1207
  %v1209 = vpop.f32.mrf.mxu0
  %v1210 = vadd.f32 %v1120, %v1209
  %v1211 = vand.u32 %v896, 4294901760
  %v1212 = vsub.f32 %v896, %v1211
  %1213 = vmatmul.f32.gmra.mxu0 %v1212
  %v1214 = vpop.f32.mrf.mxu0
  %v1215 = vadd.f32 %v1124, %v1214
  %v1216 = vand.u32 %v899, 4294901760
  %v1217 = vsub.f32 %v899, %v1216
  %1218 = vmatmul.f32.gmra.mxu0 %v1217
  %v1219 = vpop.f32.mrf.mxu0
  %v1220 = vadd.f32 %v1128, %v1219
  %v1221 = vand.u32 %v902, 4294901760
  %v1222 = vsub.f32 %v902, %v1221
  %1223 = vmatmul.f32.gmra.mxu0 %v1222
  %v1224 = vpop.f32.mrf.mxu0
  %v1225 = vadd.f32 %v1132, %v1224
  %v1226 = vand.u32 %v905, 4294901760
  %v1227 = vsub.f32 %v905, %v1226
  %1228 = vmatmul.f32.gmra.mxu0 %v1227
  %v1229 = vpop.f32.mrf.mxu0
  %v1230 = vadd.f32 %v1136, %v1229
  %v1231 = vand.u32 %v908, 4294901760
  %v1232 = vsub.f32 %v908, %v1231
  %1233 = vmatmul.f32.gmra.mxu0 %v1232
  %v1234 = vpop.f32.mrf.mxu0
  %v1235 = vadd.f32 %v1140, %v1234
  %v1236 = vand.u32 %v911, 4294901760
  %v1237 = vsub.f32 %v911, %v1236
  %1238 = vmatmul.f32.gmra.mxu0 %v1237
  %v1239 = vpop.f32.mrf.mxu0
  %v1240 = vadd.f32 %v1144, %v1239
  %v1241 = vand.u32 %v914, 4294901760
  %v1242 = vsub.f32 %v914, %v1241
  %1243 = vmatmul.f32.gmra.mxu0 %v1242
  %v1244 = vpop.f32.mrf.mxu0
  %v1245 = vadd.f32 %v1148, %v1244
  %v1246 = vand.u32 %v917, 4294901760
  %v1247 = vsub.f32 %v917, %v1246
  %1248 = vmatmul.f32.gmra.mxu0 %v1247
  %v1249 = vpop.f32.mrf.mxu0
  %v1250 = vadd.f32 %v1152, %v1249
  %v1251 = vand.u32 %v920, 4294901760
  %v1252 = vsub.f32 %v920, %v1251
  %1253 = vmatmul.f32.gmra.mxu0 %v1252
  %v1254 = vpop.f32.mrf.mxu0
  %v1255 = vadd.f32 %v1156, %v1254
  %1256 = vdwg.mxu0
  %1257 = vmatpush.msra.mxu0 0.0
  %1258 = vmatpush.msra.mxu0 0.0
  %1259 = vmatpush.msra.mxu0 0.0
  %1260 = vmatpush.msra.mxu0 0.0
  %1261 = vmatpush.msra.mxu0 0.0
  %1262 = vmatpush.msra.mxu0 0.0
  %1263 = vmatpush.msra.mxu0 0.0
  %1264 = vmatpush.msra.mxu0 0.0
  %1265 = vmatpush.msra.mxu0 0.0
  %1266 = vmatpush.msra.mxu0 0.0
  %1267 = vmatpush.msra.mxu0 0.0
  %1268 = vmatpush.msra.mxu0 0.0
  %1269 = vmatpush.msra.mxu0 0.0
  %1270 = vmatpush.msra.mxu0 0.0
  %1271 = vmatpush.msra.mxu0 0.0
  %v1272 = vand.u32 %v924, 4294901760
  %1273 = vmatpush.msra.mxu0 %v1272
  %v1274 = vand.u32 %v875, 4294901760
  %v1275 = vsub.f32 %v875, %v1274
  %v1276 = vand.u32 %v1275, 4294901760
  %1277 = vmatmul.f32.gmra.mxu0 %v1276
  %v1278 = vpop.f32.mrf.mxu0
  %v1279 = vadd.f32 %v1180, %v1278
  %v1280 = vand.u32 %v878, 4294901760
  %v1281 = vsub.f32 %v878, %v1280
  %v1282 = vand.u32 %v1281, 4294901760
  %1283 = vmatmul.f32.gmra.mxu0 %v1282
  %v1284 = vpop.f32.mrf.mxu0
  %v1285 = vadd.f32 %v1185, %v1284
  %v1286 = vand.u32 %v881, 4294901760
  %v1287 = vsub.f32 %v881, %v1286
  %v1288 = vand.u32 %v1287, 4294901760
  %1289 = vmatmul.f32.gmra.mxu0 %v1288
  %v1290 = vpop.f32.mrf.mxu0
  %v1291 = vadd.f32 %v1190, %v1290
  %v1292 = vand.u32 %v884, 4294901760
  %v1293 = vsub.f32 %v884, %v1292
  %v1294 = vand.u32 %v1293, 4294901760
  %1295 = vmatmul.f32.gmra.mxu0 %v1294
  %v1296 = vpop.f32.mrf.mxu0
  %v1297 = vadd.f32 %v1195, %v1296
  %v1298 = vand.u32 %v887, 4294901760
  %v1299 = vsub.f32 %v887, %v1298
  %v1300 = vand.u32 %v1299, 4294901760
  %1301 = vmatmul.f32.gmra.mxu0 %v1300
  %v1302 = vpop.f32.mrf.mxu0
  %v1303 = vadd.f32 %v1200, %v1302
  %v1304 = vand.u32 %v890, 4294901760
  %v1305 = vsub.f32 %v890, %v1304
  %v1306 = vand.u32 %v1305, 4294901760
  %1307 = vmatmul.f32.gmra.mxu0 %v1306
  %v1308 = vpop.f32.mrf.mxu0
  %v1309 = vadd.f32 %v1205, %v1308
  %v1310 = vand.u32 %v893, 4294901760
  %v1311 = vsub.f32 %v893, %v1310
  %v1312 = vand.u32 %v1311, 4294901760
  %1313 = vmatmul.f32.gmra.mxu0 %v1312
  %v1314 = vpop.f32.mrf.mxu0
  %v1315 = vadd.f32 %v1210, %v1314
  %v1316 = vand.u32 %v896, 4294901760
  %v1317 = vsub.f32 %v896, %v1316
  %v1318 = vand.u32 %v1317, 4294901760
  %1319 = vmatmul.f32.gmra.mxu0 %v1318
  %v1320 = vpop.f32.mrf.mxu0
  %v1321 = vadd.f32 %v1215, %v1320
  %v1322 = vand.u32 %v899, 4294901760
  %v1323 = vsub.f32 %v899, %v1322
  %v1324 = vand.u32 %v1323, 4294901760
  %1325 = vmatmul.f32.gmra.mxu0 %v1324
  %v1326 = vpop.f32.mrf.mxu0
  %v1327 = vadd.f32 %v1220, %v1326
  %v1328 = vand.u32 %v902, 4294901760
  %v1329 = vsub.f32 %v902, %v1328
  %v1330 = vand.u32 %v1329, 4294901760
  %1331 = vmatmul.f32.gmra.mxu0 %v1330
  %v1332 = vpop.f32.mrf.mxu0
  %v1333 = vadd.f32 %v1225, %v1332
  %v1334 = vand.u32 %v905, 4294901760
  %v1335 = vsub.f32 %v905, %v1334
  %v1336 = vand.u32 %v1335, 4294901760
  %1337 = vmatmul.f32.gmra.mxu0 %v1336
  %v1338 = vpop.f32.mrf.mxu0
  %v1339 = vadd.f32 %v1230, %v1338
  %v1340 = vand.u32 %v908, 4294901760
  %v1341 = vsub.f32 %v908, %v1340
  %v1342 = vand.u32 %v1341, 4294901760
  %1343 = vmatmul.f32.gmra.mxu0 %v1342
  %v1344 = vpop.f32.mrf.mxu0
  %v1345 = vadd.f32 %v1235, %v1344
  %v1346 = vand.u32 %v911, 4294901760
  %v1347 = vsub.f32 %v911, %v1346
  %v1348 = vand.u32 %v1347, 4294901760
  %1349 = vmatmul.f32.gmra.mxu0 %v1348
  %v1350 = vpop.f32.mrf.mxu0
  %v1351 = vadd.f32 %v1240, %v1350
  %v1352 = vand.u32 %v914, 4294901760
  %v1353 = vsub.f32 %v914, %v1352
  %v1354 = vand.u32 %v1353, 4294901760
  %1355 = vmatmul.f32.gmra.mxu0 %v1354
  %v1356 = vpop.f32.mrf.mxu0
  %v1357 = vadd.f32 %v1245, %v1356
  %v1358 = vand.u32 %v917, 4294901760
  %v1359 = vsub.f32 %v917, %v1358
  %v1360 = vand.u32 %v1359, 4294901760
  %1361 = vmatmul.f32.gmra.mxu0 %v1360
  %v1362 = vpop.f32.mrf.mxu0
  %v1363 = vadd.f32 %v1250, %v1362
  %v1364 = vand.u32 %v920, 4294901760
  %v1365 = vsub.f32 %v920, %v1364
  %v1366 = vand.u32 %v1365, 4294901760
  %1367 = vmatmul.f32.gmra.mxu0 %v1366
  %v1368 = vpop.f32.mrf.mxu0
  %v1369 = vadd.f32 %v1255, %v1368
  %1370 = vdwg.mxu0
  %1371 = vmatpush.msra.mxu0 0.0
  %1372 = vmatpush.msra.mxu0 0.0
  %1373 = vmatpush.msra.mxu0 0.0
  %1374 = vmatpush.msra.mxu0 0.0
  %1375 = vmatpush.msra.mxu0 0.0
  %1376 = vmatpush.msra.mxu0 0.0
  %1377 = vmatpush.msra.mxu0 0.0
  %1378 = vmatpush.msra.mxu0 0.0
  %1379 = vmatpush.msra.mxu0 0.0
  %1380 = vmatpush.msra.mxu0 0.0
  %1381 = vmatpush.msra.mxu0 0.0
  %1382 = vmatpush.msra.mxu0 0.0
  %1383 = vmatpush.msra.mxu0 0.0
  %1384 = vmatpush.msra.mxu0 0.0
  %1385 = vmatpush.msra.mxu0 0.0
  %v1386 = vand.u32 %v924, 4294901760
  %v1387 = vsub.f32 %v924, %v1386
  %v1388 = vand.u32 %v1387, 4294901760
  %1389 = vmatpush.msra.mxu0 %v1388
  %v1390 = vand.u32 %v875, 4294901760
  %1391 = vmatmul.f32.gmra.mxu0 %v1390
  %v1392 = vpop.f32.mrf.mxu0
  %v1393 = vadd.f32 %v1279, %v1392
  %v1394 = vand.u32 %v878, 4294901760
  %1395 = vmatmul.f32.gmra.mxu0 %v1394
  %v1396 = vpop.f32.mrf.mxu0
  %v1397 = vadd.f32 %v1285, %v1396
  %v1398 = vand.u32 %v881, 4294901760
  %1399 = vmatmul.f32.gmra.mxu0 %v1398
  %v1400 = vpop.f32.mrf.mxu0
  %v1401 = vadd.f32 %v1291, %v1400
  %v1402 = vand.u32 %v884, 4294901760
  %1403 = vmatmul.f32.gmra.mxu0 %v1402
  %v1404 = vpop.f32.mrf.mxu0
  %v1405 = vadd.f32 %v1297, %v1404
  %v1406 = vand.u32 %v887, 4294901760
  %1407 = vmatmul.f32.gmra.mxu0 %v1406
  %v1408 = vpop.f32.mrf.mxu0
  %v1409 = vadd.f32 %v1303, %v1408
  %v1410 = vand.u32 %v890, 4294901760
  %1411 = vmatmul.f32.gmra.mxu0 %v1410
  %v1412 = vpop.f32.mrf.mxu0
  %v1413 = vadd.f32 %v1309, %v1412
  %v1414 = vand.u32 %v893, 4294901760
  %1415 = vmatmul.f32.gmra.mxu0 %v1414
  %v1416 = vpop.f32.mrf.mxu0
  %v1417 = vadd.f32 %v1315, %v1416
  %v1418 = vand.u32 %v896, 4294901760
  %1419 = vmatmul.f32.gmra.mxu0 %v1418
  %v1420 = vpop.f32.mrf.mxu0
  %v1421 = vadd.f32 %v1321, %v1420
  %v1422 = vand.u32 %v899, 4294901760
  %1423 = vmatmul.f32.gmra.mxu0 %v1422
  %v1424 = vpop.f32.mrf.mxu0
  %v1425 = vadd.f32 %v1327, %v1424
  %v1426 = vand.u32 %v902, 4294901760
  %1427 = vmatmul.f32.gmra.mxu0 %v1426
  %v1428 = vpop.f32.mrf.mxu0
  %v1429 = vadd.f32 %v1333, %v1428
  %v1430 = vand.u32 %v905, 4294901760
  %1431 = vmatmul.f32.gmra.mxu0 %v1430
  %v1432 = vpop.f32.mrf.mxu0
  %v1433 = vadd.f32 %v1339, %v1432
  %v1434 = vand.u32 %v908, 4294901760
  %1435 = vmatmul.f32.gmra.mxu0 %v1434
  %v1436 = vpop.f32.mrf.mxu0
  %v1437 = vadd.f32 %v1345, %v1436
  %v1438 = vand.u32 %v911, 4294901760
  %1439 = vmatmul.f32.gmra.mxu0 %v1438
  %v1440 = vpop.f32.mrf.mxu0
  %v1441 = vadd.f32 %v1351, %v1440
  %v1442 = vand.u32 %v914, 4294901760
  %1443 = vmatmul.f32.gmra.mxu0 %v1442
  %v1444 = vpop.f32.mrf.mxu0
  %v1445 = vadd.f32 %v1357, %v1444
  %v1446 = vand.u32 %v917, 4294901760
  %1447 = vmatmul.f32.gmra.mxu0 %v1446
  %v1448 = vpop.f32.mrf.mxu0
  %v1449 = vadd.f32 %v1363, %v1448
  %v1450 = vand.u32 %v920, 4294901760
  %1451 = vmatmul.f32.gmra.mxu0 %v1450
  %v1452 = vpop.f32.mrf.mxu0
  %v1453 = vadd.f32 %v1369, %v1452
  %1454 = vdwg.mxu0
  %1455 = vmatpush.msra.mxu0 0.0
  %1456 = vmatpush.msra.mxu0 0.0
  %1457 = vmatpush.msra.mxu0 0.0
  %1458 = vmatpush.msra.mxu0 0.0
  %1459 = vmatpush.msra.mxu0 0.0
  %1460 = vmatpush.msra.mxu0 0.0
  %1461 = vmatpush.msra.mxu0 0.0
  %1462 = vmatpush.msra.mxu0 0.0
  %1463 = vmatpush.msra.mxu0 0.0
  %1464 = vmatpush.msra.mxu0 0.0
  %1465 = vmatpush.msra.mxu0 0.0
  %1466 = vmatpush.msra.mxu0 0.0
  %1467 = vmatpush.msra.mxu0 0.0
  %1468 = vmatpush.msra.mxu0 0.0
  %1469 = vmatpush.msra.mxu0 0.0
  %v1470 = vand.u32 %v924, 4294901760
  %1471 = vmatpush.msra.mxu0 %v1470
  %v1472 = vand.u32 %v875, 4294901760
  %1473 = vmatmul.f32.gmra.mxu0 %v1472
  %v1474 = vpop.f32.mrf.mxu0
  %v1475 = vadd.f32 %v1393, %v1474
  %v1476 = vand.u32 %v878, 4294901760
  %1477 = vmatmul.f32.gmra.mxu0 %v1476
  %v1478 = vpop.f32.mrf.mxu0
  %v1479 = vadd.f32 %v1397, %v1478
  %v1480 = vand.u32 %v881, 4294901760
  %1481 = vmatmul.f32.gmra.mxu0 %v1480
  %v1482 = vpop.f32.mrf.mxu0
  %v1483 = vadd.f32 %v1401, %v1482
  %v1484 = vand.u32 %v884, 4294901760
  %1485 = vmatmul.f32.gmra.mxu0 %v1484
  %v1486 = vpop.f32.mrf.mxu0
  %v1487 = vadd.f32 %v1405, %v1486
  %v1488 = vand.u32 %v887, 4294901760
  %1489 = vmatmul.f32.gmra.mxu0 %v1488
  %v1490 = vpop.f32.mrf.mxu0
  %v1491 = vadd.f32 %v1409, %v1490
  %v1492 = vand.u32 %v890, 4294901760
  %1493 = vmatmul.f32.gmra.mxu0 %v1492
  %v1494 = vpop.f32.mrf.mxu0
  %v1495 = vadd.f32 %v1413, %v1494
  %v1496 = vand.u32 %v893, 4294901760
  %1497 = vmatmul.f32.gmra.mxu0 %v1496
  %v1498 = vpop.f32.mrf.mxu0
  %v1499 = vadd.f32 %v1417, %v1498
  %v1500 = vand.u32 %v896, 4294901760
  %1501 = vmatmul.f32.gmra.mxu0 %v1500
  %v1502 = vpop.f32.mrf.mxu0
  %v1503 = vadd.f32 %v1421, %v1502
  %v1504 = vand.u32 %v899, 4294901760
  %1505 = vmatmul.f32.gmra.mxu0 %v1504
  %v1506 = vpop.f32.mrf.mxu0
  %v1507 = vadd.f32 %v1425, %v1506
  %v1508 = vand.u32 %v902, 4294901760
  %1509 = vmatmul.f32.gmra.mxu0 %v1508
  %v1510 = vpop.f32.mrf.mxu0
  %v1511 = vadd.f32 %v1429, %v1510
  %v1512 = vand.u32 %v905, 4294901760
  %1513 = vmatmul.f32.gmra.mxu0 %v1512
  %v1514 = vpop.f32.mrf.mxu0
  %v1515 = vadd.f32 %v1433, %v1514
  %v1516 = vand.u32 %v908, 4294901760
  %1517 = vmatmul.f32.gmra.mxu0 %v1516
  %v1518 = vpop.f32.mrf.mxu0
  %v1519 = vadd.f32 %v1437, %v1518
  %v1520 = vand.u32 %v911, 4294901760
  %1521 = vmatmul.f32.gmra.mxu0 %v1520
  %v1522 = vpop.f32.mrf.mxu0
  %v1523 = vadd.f32 %v1441, %v1522
  %v1524 = vand.u32 %v914, 4294901760
  %1525 = vmatmul.f32.gmra.mxu0 %v1524
  %v1526 = vpop.f32.mrf.mxu0
  %v1527 = vadd.f32 %v1445, %v1526
  %v1528 = vand.u32 %v917, 4294901760
  %1529 = vmatmul.f32.gmra.mxu0 %v1528
  %v1530 = vpop.f32.mrf.mxu0
  %v1531 = vadd.f32 %v1449, %v1530
  %v1532 = vand.u32 %v920, 4294901760
  %1533 = vmatmul.f32.gmra.mxu0 %v1532
  %v1534 = vpop.f32.mrf.mxu0
  %v1535 = vadd.f32 %v1453, %v1534
  %1536 = vdwg.mxu0
  %v1537 = vsub.f32 %v17, %v1475
  %v1538 = vsub.f32 %v18, %v1479
  %v1539 = vsub.f32 %v19, %v1483
  %v1540 = vsub.f32 %v20, %v1487
  %v1541 = vsub.f32 %v21, %v1491
  %v1542 = vsub.f32 %v22, %v1495
  %v1543 = vsub.f32 %v23, %v1499
  %v1544 = vsub.f32 %v24, %v1503
  %v1545 = vsub.f32 %v25, %v1507
  %v1546 = vsub.f32 %v26, %v1511
  %v1547 = vsub.f32 %v27, %v1515
  %v1548 = vsub.f32 %v28, %v1519
  %v1549 = vsub.f32 %v29, %v1523
  %v1550 = vsub.f32 %v30, %v1527
  %v1551 = vsub.f32 %v31, %v1531
  %v1552 = vsub.f32 %v32, %v1535
  %v1553 = vmul.f32 %v1537, %v1537
  %v1554 = vmul.f32 %v1538, %v1538
  %v1555 = vmul.f32 %v1539, %v1539
  %v1556 = vmul.f32 %v1540, %v1540
  %v1557 = vmul.f32 %v1541, %v1541
  %v1558 = vmul.f32 %v1542, %v1542
  %v1559 = vmul.f32 %v1543, %v1543
  %v1560 = vmul.f32 %v1544, %v1544
  %v1561 = vmul.f32 %v1545, %v1545
  %v1562 = vmul.f32 %v1546, %v1546
  %v1563 = vmul.f32 %v1547, %v1547
  %v1564 = vmul.f32 %v1548, %v1548
  %v1565 = vmul.f32 %v1549, %v1549
  %v1566 = vmul.f32 %v1550, %v1550
  %v1567 = vmul.f32 %v1551, %v1551
  %v1568 = vmul.f32 %v1552, %v1552
  %v1569 = vand.u32 %v48, 4294901760
  %1570 = vmatpush.msra.mxu0 %v1569
  %v1571 = vand.u32 %v47, 4294901760
  %1572 = vmatpush.msra.mxu0 %v1571
  %v1573 = vand.u32 %v46, 4294901760
  %1574 = vmatpush.msra.mxu0 %v1573
  %v1575 = vand.u32 %v45, 4294901760
  %1576 = vmatpush.msra.mxu0 %v1575
  %v1577 = vand.u32 %v44, 4294901760
  %1578 = vmatpush.msra.mxu0 %v1577
  %v1579 = vand.u32 %v43, 4294901760
  %1580 = vmatpush.msra.mxu0 %v1579
  %v1581 = vand.u32 %v42, 4294901760
  %1582 = vmatpush.msra.mxu0 %v1581
  %v1583 = vand.u32 %v41, 4294901760
  %1584 = vmatpush.msra.mxu0 %v1583
  %v1585 = vand.u32 %v40, 4294901760
  %1586 = vmatpush.msra.mxu0 %v1585
  %v1587 = vand.u32 %v39, 4294901760
  %1588 = vmatpush.msra.mxu0 %v1587
  %v1589 = vand.u32 %v38, 4294901760
  %1590 = vmatpush.msra.mxu0 %v1589
  %v1591 = vand.u32 %v37, 4294901760
  %1592 = vmatpush.msra.mxu0 %v1591
  %v1593 = vand.u32 %v36, 4294901760
  %1594 = vmatpush.msra.mxu0 %v1593
  %v1595 = vand.u32 %v35, 4294901760
  %1596 = vmatpush.msra.mxu0 %v1595
  %v1597 = vand.u32 %v34, 4294901760
  %1598 = vmatpush.msra.mxu0 %v1597
  %v1599 = vand.u32 %v33, 4294901760
  %1600 = vmatpush.msra.mxu0 %v1599
  %v1601 = vand.u32 %v1553, 4294901760
  %v1602 = vsub.f32 %v1553, %v1601
  %v1603 = vand.u32 %v1602, 4294901760
  %v1604 = vsub.f32 %v1602, %v1603
  %v1605 = vand.u32 %v1604, 4294901760
  %1606 = vmatmul.f32.gmra.mxu0 %v1605
  %v1607 = vpop.f32.mrf.mxu0
  %v1608 = vadd.f32 0.0, %v1607
  %v1609 = vand.u32 %v1554, 4294901760
  %v1610 = vsub.f32 %v1554, %v1609
  %v1611 = vand.u32 %v1610, 4294901760
  %v1612 = vsub.f32 %v1610, %v1611
  %v1613 = vand.u32 %v1612, 4294901760
  %1614 = vmatmul.f32.gmra.mxu0 %v1613
  %v1615 = vpop.f32.mrf.mxu0
  %v1616 = vadd.f32 0.0, %v1615
  %v1617 = vand.u32 %v1555, 4294901760
  %v1618 = vsub.f32 %v1555, %v1617
  %v1619 = vand.u32 %v1618, 4294901760
  %v1620 = vsub.f32 %v1618, %v1619
  %v1621 = vand.u32 %v1620, 4294901760
  %1622 = vmatmul.f32.gmra.mxu0 %v1621
  %v1623 = vpop.f32.mrf.mxu0
  %v1624 = vadd.f32 0.0, %v1623
  %v1625 = vand.u32 %v1556, 4294901760
  %v1626 = vsub.f32 %v1556, %v1625
  %v1627 = vand.u32 %v1626, 4294901760
  %v1628 = vsub.f32 %v1626, %v1627
  %v1629 = vand.u32 %v1628, 4294901760
  %1630 = vmatmul.f32.gmra.mxu0 %v1629
  %v1631 = vpop.f32.mrf.mxu0
  %v1632 = vadd.f32 0.0, %v1631
  %v1633 = vand.u32 %v1557, 4294901760
  %v1634 = vsub.f32 %v1557, %v1633
  %v1635 = vand.u32 %v1634, 4294901760
  %v1636 = vsub.f32 %v1634, %v1635
  %v1637 = vand.u32 %v1636, 4294901760
  %1638 = vmatmul.f32.gmra.mxu0 %v1637
  %v1639 = vpop.f32.mrf.mxu0
  %v1640 = vadd.f32 0.0, %v1639
  %v1641 = vand.u32 %v1558, 4294901760
  %v1642 = vsub.f32 %v1558, %v1641
  %v1643 = vand.u32 %v1642, 4294901760
  %v1644 = vsub.f32 %v1642, %v1643
  %v1645 = vand.u32 %v1644, 4294901760
  %1646 = vmatmul.f32.gmra.mxu0 %v1645
  %v1647 = vpop.f32.mrf.mxu0
  %v1648 = vadd.f32 0.0, %v1647
  %v1649 = vand.u32 %v1559, 4294901760
  %v1650 = vsub.f32 %v1559, %v1649
  %v1651 = vand.u32 %v1650, 4294901760
  %v1652 = vsub.f32 %v1650, %v1651
  %v1653 = vand.u32 %v1652, 4294901760
  %1654 = vmatmul.f32.gmra.mxu0 %v1653
  %v1655 = vpop.f32.mrf.mxu0
  %v1656 = vadd.f32 0.0, %v1655
  %v1657 = vand.u32 %v1560, 4294901760
  %v1658 = vsub.f32 %v1560, %v1657
  %v1659 = vand.u32 %v1658, 4294901760
  %v1660 = vsub.f32 %v1658, %v1659
  %v1661 = vand.u32 %v1660, 4294901760
  %1662 = vmatmul.f32.gmra.mxu0 %v1661
  %v1663 = vpop.f32.mrf.mxu0
  %v1664 = vadd.f32 0.0, %v1663
  %v1665 = vand.u32 %v1561, 4294901760
  %v1666 = vsub.f32 %v1561, %v1665
  %v1667 = vand.u32 %v1666, 4294901760
  %v1668 = vsub.f32 %v1666, %v1667
  %v1669 = vand.u32 %v1668, 4294901760
  %1670 = vmatmul.f32.gmra.mxu0 %v1669
  %v1671 = vpop.f32.mrf.mxu0
  %v1672 = vadd.f32 0.0, %v1671
  %v1673 = vand.u32 %v1562, 4294901760
  %v1674 = vsub.f32 %v1562, %v1673
  %v1675 = vand.u32 %v1674, 4294901760
  %v1676 = vsub.f32 %v1674, %v1675
  %v1677 = vand.u32 %v1676, 4294901760
  %1678 = vmatmul.f32.gmra.mxu0 %v1677
  %v1679 = vpop.f32.mrf.mxu0
  %v1680 = vadd.f32 0.0, %v1679
  %v1681 = vand.u32 %v1563, 4294901760
  %v1682 = vsub.f32 %v1563, %v1681
  %v1683 = vand.u32 %v1682, 4294901760
  %v1684 = vsub.f32 %v1682, %v1683
  %v1685 = vand.u32 %v1684, 4294901760
  %1686 = vmatmul.f32.gmra.mxu0 %v1685
  %v1687 = vpop.f32.mrf.mxu0
  %v1688 = vadd.f32 0.0, %v1687
  %v1689 = vand.u32 %v1564, 4294901760
  %v1690 = vsub.f32 %v1564, %v1689
  %v1691 = vand.u32 %v1690, 4294901760
  %v1692 = vsub.f32 %v1690, %v1691
  %v1693 = vand.u32 %v1692, 4294901760
  %1694 = vmatmul.f32.gmra.mxu0 %v1693
  %v1695 = vpop.f32.mrf.mxu0
  %v1696 = vadd.f32 0.0, %v1695
  %v1697 = vand.u32 %v1565, 4294901760
  %v1698 = vsub.f32 %v1565, %v1697
  %v1699 = vand.u32 %v1698, 4294901760
  %v1700 = vsub.f32 %v1698, %v1699
  %v1701 = vand.u32 %v1700, 4294901760
  %1702 = vmatmul.f32.gmra.mxu0 %v1701
  %v1703 = vpop.f32.mrf.mxu0
  %v1704 = vadd.f32 0.0, %v1703
  %v1705 = vand.u32 %v1566, 4294901760
  %v1706 = vsub.f32 %v1566, %v1705
  %v1707 = vand.u32 %v1706, 4294901760
  %v1708 = vsub.f32 %v1706, %v1707
  %v1709 = vand.u32 %v1708, 4294901760
  %1710 = vmatmul.f32.gmra.mxu0 %v1709
  %v1711 = vpop.f32.mrf.mxu0
  %v1712 = vadd.f32 0.0, %v1711
  %v1713 = vand.u32 %v1567, 4294901760
  %v1714 = vsub.f32 %v1567, %v1713
  %v1715 = vand.u32 %v1714, 4294901760
  %v1716 = vsub.f32 %v1714, %v1715
  %v1717 = vand.u32 %v1716, 4294901760
  %1718 = vmatmul.f32.gmra.mxu0 %v1717
  %v1719 = vpop.f32.mrf.mxu0
  %v1720 = vadd.f32 0.0, %v1719
  %v1721 = vand.u32 %v1568, 4294901760
  %v1722 = vsub.f32 %v1568, %v1721
  %v1723 = vand.u32 %v1722, 4294901760
  %v1724 = vsub.f32 %v1722, %v1723
  %v1725 = vand.u32 %v1724, 4294901760
  %1726 = vmatmul.f32.gmra.mxu0 %v1725
  %v1727 = vpop.f32.mrf.mxu0
  %v1728 = vadd.f32 0.0, %v1727
  %1729 = vdwg.mxu0
  %v1730 = vand.u32 %v48, 4294901760
  %v1731 = vsub.f32 %v48, %v1730
  %v1732 = vand.u32 %v1731, 4294901760
  %v1733 = vsub.f32 %v1731, %v1732
  %v1734 = vand.u32 %v1733, 4294901760
  %1735 = vmatpush.msra.mxu0 %v1734
  %v1736 = vand.u32 %v47, 4294901760
  %v1737 = vsub.f32 %v47, %v1736
  %v1738 = vand.u32 %v1737, 4294901760
  %v1739 = vsub.f32 %v1737, %v1738
  %v1740 = vand.u32 %v1739, 4294901760
  %1741 = vmatpush.msra.mxu0 %v1740
  %v1742 = vand.u32 %v46, 4294901760
  %v1743 = vsub.f32 %v46, %v1742
  %v1744 = vand.u32 %v1743, 4294901760
  %v1745 = vsub.f32 %v1743, %v1744
  %v1746 = vand.u32 %v1745, 4294901760
  %1747 = vmatpush.msra.mxu0 %v1746
  %v1748 = vand.u32 %v45, 4294901760
  %v1749 = vsub.f32 %v45, %v1748
  %v1750 = vand.u32 %v1749, 4294901760
  %v1751 = vsub.f32 %v1749, %v1750
  %v1752 = vand.u32 %v1751, 4294901760
  %1753 = vmatpush.msra.mxu0 %v1752
  %v1754 = vand.u32 %v44, 4294901760
  %v1755 = vsub.f32 %v44, %v1754
  %v1756 = vand.u32 %v1755, 4294901760
  %v1757 = vsub.f32 %v1755, %v1756
  %v1758 = vand.u32 %v1757, 4294901760
  %1759 = vmatpush.msra.mxu0 %v1758
  %v1760 = vand.u32 %v43, 4294901760
  %v1761 = vsub.f32 %v43, %v1760
  %v1762 = vand.u32 %v1761, 4294901760
  %v1763 = vsub.f32 %v1761, %v1762
  %v1764 = vand.u32 %v1763, 4294901760
  %1765 = vmatpush.msra.mxu0 %v1764
  %v1766 = vand.u32 %v42, 4294901760
  %v1767 = vsub.f32 %v42, %v1766
  %v1768 = vand.u32 %v1767, 4294901760
  %v1769 = vsub.f32 %v1767, %v1768
  %v1770 = vand.u32 %v1769, 4294901760
  %1771 = vmatpush.msra.mxu0 %v1770
  %v1772 = vand.u32 %v41, 4294901760
  %v1773 = vsub.f32 %v41, %v1772
  %v1774 = vand.u32 %v1773, 4294901760
  %v1775 = vsub.f32 %v1773, %v1774
  %v1776 = vand.u32 %v1775, 4294901760
  %1777 = vmatpush.msra.mxu0 %v1776
  %v1778 = vand.u32 %v40, 4294901760
  %v1779 = vsub.f32 %v40, %v1778
  %v1780 = vand.u32 %v1779, 4294901760
  %v1781 = vsub.f32 %v1779, %v1780
  %v1782 = vand.u32 %v1781, 4294901760
  %1783 = vmatpush.msra.mxu0 %v1782
  %v1784 = vand.u32 %v39, 4294901760
  %v1785 = vsub.f32 %v39, %v1784
  %v1786 = vand.u32 %v1785, 4294901760
  %v1787 = vsub.f32 %v1785, %v1786
  %v1788 = vand.u32 %v1787, 4294901760
  %1789 = vmatpush.msra.mxu0 %v1788
  %v1790 = vand.u32 %v38, 4294901760
  %v1791 = vsub.f32 %v38, %v1790
  %v1792 = vand.u32 %v1791, 4294901760
  %v1793 = vsub.f32 %v1791, %v1792
  %v1794 = vand.u32 %v1793, 4294901760
  %1795 = vmatpush.msra.mxu0 %v1794
  %v1796 = vand.u32 %v37, 4294901760
  %v1797 = vsub.f32 %v37, %v1796
  %v1798 = vand.u32 %v1797, 4294901760
  %v1799 = vsub.f32 %v1797, %v1798
  %v1800 = vand.u32 %v1799, 4294901760
  %1801 = vmatpush.msra.mxu0 %v1800
  %v1802 = vand.u32 %v36, 4294901760
  %v1803 = vsub.f32 %v36, %v1802
  %v1804 = vand.u32 %v1803, 4294901760
  %v1805 = vsub.f32 %v1803, %v1804
  %v1806 = vand.u32 %v1805, 4294901760
  %1807 = vmatpush.msra.mxu0 %v1806
  %v1808 = vand.u32 %v35, 4294901760
  %v1809 = vsub.f32 %v35, %v1808
  %v1810 = vand.u32 %v1809, 4294901760
  %v1811 = vsub.f32 %v1809, %v1810
  %v1812 = vand.u32 %v1811, 4294901760
  %1813 = vmatpush.msra.mxu0 %v1812
  %v1814 = vand.u32 %v34, 4294901760
  %v1815 = vsub.f32 %v34, %v1814
  %v1816 = vand.u32 %v1815, 4294901760
  %v1817 = vsub.f32 %v1815, %v1816
  %v1818 = vand.u32 %v1817, 4294901760
  %1819 = vmatpush.msra.mxu0 %v1818
  %v1820 = vand.u32 %v33, 4294901760
  %v1821 = vsub.f32 %v33, %v1820
  %v1822 = vand.u32 %v1821, 4294901760
  %v1823 = vsub.f32 %v1821, %v1822
  %v1824 = vand.u32 %v1823, 4294901760
  %1825 = vmatpush.msra.mxu0 %v1824
  %v1826 = vand.u32 %v1553, 4294901760
  %1827 = vmatmul.f32.gmra.mxu0 %v1826
  %v1828 = vpop.f32.mrf.mxu0
  %v1829 = vadd.f32 %v1608, %v1828
  %v1830 = vand.u32 %v1554, 4294901760
  %1831 = vmatmul.f32.gmra.mxu0 %v1830
  %v1832 = vpop.f32.mrf.mxu0
  %v1833 = vadd.f32 %v1616, %v1832
  %v1834 = vand.u32 %v1555, 4294901760
  %1835 = vmatmul.f32.gmra.mxu0 %v1834
  %v1836 = vpop.f32.mrf.mxu0
  %v1837 = vadd.f32 %v1624, %v1836
  %v1838 = vand.u32 %v1556, 4294901760
  %1839 = vmatmul.f32.gmra.mxu0 %v1838
  %v1840 = vpop.f32.mrf.mxu0
  %v1841 = vadd.f32 %v1632, %v1840
  %v1842 = vand.u32 %v1557, 4294901760
  %1843 = vmatmul.f32.gmra.mxu0 %v1842
  %v1844 = vpop.f32.mrf.mxu0
  %v1845 = vadd.f32 %v1640, %v1844
  %v1846 = vand.u32 %v1558, 4294901760
  %1847 = vmatmul.f32.gmra.mxu0 %v1846
  %v1848 = vpop.f32.mrf.mxu0
  %v1849 = vadd.f32 %v1648, %v1848
  %v1850 = vand.u32 %v1559, 4294901760
  %1851 = vmatmul.f32.gmra.mxu0 %v1850
  %v1852 = vpop.f32.mrf.mxu0
  %v1853 = vadd.f32 %v1656, %v1852
  %v1854 = vand.u32 %v1560, 4294901760
  %1855 = vmatmul.f32.gmra.mxu0 %v1854
  %v1856 = vpop.f32.mrf.mxu0
  %v1857 = vadd.f32 %v1664, %v1856
  %v1858 = vand.u32 %v1561, 4294901760
  %1859 = vmatmul.f32.gmra.mxu0 %v1858
  %v1860 = vpop.f32.mrf.mxu0
  %v1861 = vadd.f32 %v1672, %v1860
  %v1862 = vand.u32 %v1562, 4294901760
  %1863 = vmatmul.f32.gmra.mxu0 %v1862
  %v1864 = vpop.f32.mrf.mxu0
  %v1865 = vadd.f32 %v1680, %v1864
  %v1866 = vand.u32 %v1563, 4294901760
  %1867 = vmatmul.f32.gmra.mxu0 %v1866
  %v1868 = vpop.f32.mrf.mxu0
  %v1869 = vadd.f32 %v1688, %v1868
  %v1870 = vand.u32 %v1564, 4294901760
  %1871 = vmatmul.f32.gmra.mxu0 %v1870
  %v1872 = vpop.f32.mrf.mxu0
  %v1873 = vadd.f32 %v1696, %v1872
  %v1874 = vand.u32 %v1565, 4294901760
  %1875 = vmatmul.f32.gmra.mxu0 %v1874
  %v1876 = vpop.f32.mrf.mxu0
  %v1877 = vadd.f32 %v1704, %v1876
  %v1878 = vand.u32 %v1566, 4294901760
  %1879 = vmatmul.f32.gmra.mxu0 %v1878
  %v1880 = vpop.f32.mrf.mxu0
  %v1881 = vadd.f32 %v1712, %v1880
  %v1882 = vand.u32 %v1567, 4294901760
  %1883 = vmatmul.f32.gmra.mxu0 %v1882
  %v1884 = vpop.f32.mrf.mxu0
  %v1885 = vadd.f32 %v1720, %v1884
  %v1886 = vand.u32 %v1568, 4294901760
  %1887 = vmatmul.f32.gmra.mxu0 %v1886
  %v1888 = vpop.f32.mrf.mxu0
  %v1889 = vadd.f32 %v1728, %v1888
  %1890 = vdwg.mxu0
  %v1891 = vand.u32 %v48, 4294901760
  %v1892 = vsub.f32 %v48, %v1891
  %1893 = vmatpush.msra.mxu0 %v1892
  %v1894 = vand.u32 %v47, 4294901760
  %v1895 = vsub.f32 %v47, %v1894
  %1896 = vmatpush.msra.mxu0 %v1895
  %v1897 = vand.u32 %v46, 4294901760
  %v1898 = vsub.f32 %v46, %v1897
  %1899 = vmatpush.msra.mxu0 %v1898
  %v1900 = vand.u32 %v45, 4294901760
  %v1901 = vsub.f32 %v45, %v1900
  %1902 = vmatpush.msra.mxu0 %v1901
  %v1903 = vand.u32 %v44, 4294901760
  %v1904 = vsub.f32 %v44, %v1903
  %1905 = vmatpush.msra.mxu0 %v1904
  %v1906 = vand.u32 %v43, 4294901760
  %v1907 = vsub.f32 %v43, %v1906
  %1908 = vmatpush.msra.mxu0 %v1907
  %v1909 = vand.u32 %v42, 4294901760
  %v1910 = vsub.f32 %v42, %v1909
  %1911 = vmatpush.msra.mxu0 %v1910
  %v1912 = vand.u32 %v41, 4294901760
  %v1913 = vsub.f32 %v41, %v1912
  %1914 = vmatpush.msra.mxu0 %v1913
  %v1915 = vand.u32 %v40, 4294901760
  %v1916 = vsub.f32 %v40, %v1915
  %1917 = vmatpush.msra.mxu0 %v1916
  %v1918 = vand.u32 %v39, 4294901760
  %v1919 = vsub.f32 %v39, %v1918
  %1920 = vmatpush.msra.mxu0 %v1919
  %v1921 = vand.u32 %v38, 4294901760
  %v1922 = vsub.f32 %v38, %v1921
  %1923 = vmatpush.msra.mxu0 %v1922
  %v1924 = vand.u32 %v37, 4294901760
  %v1925 = vsub.f32 %v37, %v1924
  %1926 = vmatpush.msra.mxu0 %v1925
  %v1927 = vand.u32 %v36, 4294901760
  %v1928 = vsub.f32 %v36, %v1927
  %1929 = vmatpush.msra.mxu0 %v1928
  %v1930 = vand.u32 %v35, 4294901760
  %v1931 = vsub.f32 %v35, %v1930
  %1932 = vmatpush.msra.mxu0 %v1931
  %v1933 = vand.u32 %v34, 4294901760
  %v1934 = vsub.f32 %v34, %v1933
  %1935 = vmatpush.msra.mxu0 %v1934
  %v1936 = vand.u32 %v33, 4294901760
  %v1937 = vsub.f32 %v33, %v1936
  %1938 = vmatpush.msra.mxu0 %v1937
  %v1939 = vand.u32 %v1553, 4294901760
  %v1940 = vsub.f32 %v1553, %v1939
  %1941 = vmatmul.f32.gmra.mxu0 %v1940
  %v1942 = vpop.f32.mrf.mxu0
  %v1943 = vadd.f32 %v1829, %v1942
  %v1944 = vand.u32 %v1554, 4294901760
  %v1945 = vsub.f32 %v1554, %v1944
  %1946 = vmatmul.f32.gmra.mxu0 %v1945
  %v1947 = vpop.f32.mrf.mxu0
  %v1948 = vadd.f32 %v1833, %v1947
  %v1949 = vand.u32 %v1555, 4294901760
  %v1950 = vsub.f32 %v1555, %v1949
  %1951 = vmatmul.f32.gmra.mxu0 %v1950
  %v1952 = vpop.f32.mrf.mxu0
  %v1953 = vadd.f32 %v1837, %v1952
  %v1954 = vand.u32 %v1556, 4294901760
  %v1955 = vsub.f32 %v1556, %v1954
  %1956 = vmatmul.f32.gmra.mxu0 %v1955
  %v1957 = vpop.f32.mrf.mxu0
  %v1958 = vadd.f32 %v1841, %v1957
  %v1959 = vand.u32 %v1557, 4294901760
  %v1960 = vsub.f32 %v1557, %v1959
  %1961 = vmatmul.f32.gmra.mxu0 %v1960
  %v1962 = vpop.f32.mrf.mxu0
  %v1963 = vadd.f32 %v1845, %v1962
  %v1964 = vand.u32 %v1558, 4294901760
  %v1965 = vsub.f32 %v1558, %v1964
  %1966 = vmatmul.f32.gmra.mxu0 %v1965
  %v1967 = vpop.f32.mrf.mxu0
  %v1968 = vadd.f32 %v1849, %v1967
  %v1969 = vand.u32 %v1559, 4294901760
  %v1970 = vsub.f32 %v1559, %v1969
  %1971 = vmatmul.f32.gmra.mxu0 %v1970
  %v1972 = vpop.f32.mrf.mxu0
  %v1973 = vadd.f32 %v1853, %v1972
  %v1974 = vand.u32 %v1560, 4294901760
  %v1975 = vsub.f32 %v1560, %v1974
  %1976 = vmatmul.f32.gmra.mxu0 %v1975
  %v1977 = vpop.f32.mrf.mxu0
  %v1978 = vadd.f32 %v1857, %v1977
  %v1979 = vand.u32 %v1561, 4294901760
  %v1980 = vsub.f32 %v1561, %v1979
  %1981 = vmatmul.f32.gmra.mxu0 %v1980
  %v1982 = vpop.f32.mrf.mxu0
  %v1983 = vadd.f32 %v1861, %v1982
  %v1984 = vand.u32 %v1562, 4294901760
  %v1985 = vsub.f32 %v1562, %v1984
  %1986 = vmatmul.f32.gmra.mxu0 %v1985
  %v1987 = vpop.f32.mrf.mxu0
  %v1988 = vadd.f32 %v1865, %v1987
  %v1989 = vand.u32 %v1563, 4294901760
  %v1990 = vsub.f32 %v1563, %v1989
  %1991 = vmatmul.f32.gmra.mxu0 %v1990
  %v1992 = vpop.f32.mrf.mxu0
  %v1993 = vadd.f32 %v1869, %v1992
  %v1994 = vand.u32 %v1564, 4294901760
  %v1995 = vsub.f32 %v1564, %v1994
  %1996 = vmatmul.f32.gmra.mxu0 %v1995
  %v1997 = vpop.f32.mrf.mxu0
  %v1998 = vadd.f32 %v1873, %v1997
  %v1999 = vand.u32 %v1565, 4294901760
  %v2000 = vsub.f32 %v1565, %v1999
  %2001 = vmatmul.f32.gmra.mxu0 %v2000
  %v2002 = vpop.f32.mrf.mxu0
  %v2003 = vadd.f32 %v1877, %v2002
  %v2004 = vand.u32 %v1566, 4294901760
  %v2005 = vsub.f32 %v1566, %v2004
  %2006 = vmatmul.f32.gmra.mxu0 %v2005
  %v2007 = vpop.f32.mrf.mxu0
  %v2008 = vadd.f32 %v1881, %v2007
  %v2009 = vand.u32 %v1567, 4294901760
  %v2010 = vsub.f32 %v1567, %v2009
  %2011 = vmatmul.f32.gmra.mxu0 %v2010
  %v2012 = vpop.f32.mrf.mxu0
  %v2013 = vadd.f32 %v1885, %v2012
  %v2014 = vand.u32 %v1568, 4294901760
  %v2015 = vsub.f32 %v1568, %v2014
  %2016 = vmatmul.f32.gmra.mxu0 %v2015
  %v2017 = vpop.f32.mrf.mxu0
  %v2018 = vadd.f32 %v1889, %v2017
  %2019 = vdwg.mxu0
  %v2020 = vand.u32 %v48, 4294901760
  %2021 = vmatpush.msra.mxu0 %v2020
  %v2022 = vand.u32 %v47, 4294901760
  %2023 = vmatpush.msra.mxu0 %v2022
  %v2024 = vand.u32 %v46, 4294901760
  %2025 = vmatpush.msra.mxu0 %v2024
  %v2026 = vand.u32 %v45, 4294901760
  %2027 = vmatpush.msra.mxu0 %v2026
  %v2028 = vand.u32 %v44, 4294901760
  %2029 = vmatpush.msra.mxu0 %v2028
  %v2030 = vand.u32 %v43, 4294901760
  %2031 = vmatpush.msra.mxu0 %v2030
  %v2032 = vand.u32 %v42, 4294901760
  %2033 = vmatpush.msra.mxu0 %v2032
  %v2034 = vand.u32 %v41, 4294901760
  %2035 = vmatpush.msra.mxu0 %v2034
  %v2036 = vand.u32 %v40, 4294901760
  %2037 = vmatpush.msra.mxu0 %v2036
  %v2038 = vand.u32 %v39, 4294901760
  %2039 = vmatpush.msra.mxu0 %v2038
  %v2040 = vand.u32 %v38, 4294901760
  %2041 = vmatpush.msra.mxu0 %v2040
  %v2042 = vand.u32 %v37, 4294901760
  %2043 = vmatpush.msra.mxu0 %v2042
  %v2044 = vand.u32 %v36, 4294901760
  %2045 = vmatpush.msra.mxu0 %v2044
  %v2046 = vand.u32 %v35, 4294901760
  %2047 = vmatpush.msra.mxu0 %v2046
  %v2048 = vand.u32 %v34, 4294901760
  %2049 = vmatpush.msra.mxu0 %v2048
  %v2050 = vand.u32 %v33, 4294901760
  %2051 = vmatpush.msra.mxu0 %v2050
  %v2052 = vand.u32 %v1553, 4294901760
  %v2053 = vsub.f32 %v1553, %v2052
  %v2054 = vand.u32 %v2053, 4294901760
  %2055 = vmatmul.f32.gmra.mxu0 %v2054
  %v2056 = vpop.f32.mrf.mxu0
  %v2057 = vadd.f32 %v1943, %v2056
  %v2058 = vand.u32 %v1554, 4294901760
  %v2059 = vsub.f32 %v1554, %v2058
  %v2060 = vand.u32 %v2059, 4294901760
  %2061 = vmatmul.f32.gmra.mxu0 %v2060
  %v2062 = vpop.f32.mrf.mxu0
  %v2063 = vadd.f32 %v1948, %v2062
  %v2064 = vand.u32 %v1555, 4294901760
  %v2065 = vsub.f32 %v1555, %v2064
  %v2066 = vand.u32 %v2065, 4294901760
  %2067 = vmatmul.f32.gmra.mxu0 %v2066
  %v2068 = vpop.f32.mrf.mxu0
  %v2069 = vadd.f32 %v1953, %v2068
  %v2070 = vand.u32 %v1556, 4294901760
  %v2071 = vsub.f32 %v1556, %v2070
  %v2072 = vand.u32 %v2071, 4294901760
  %2073 = vmatmul.f32.gmra.mxu0 %v2072
  %v2074 = vpop.f32.mrf.mxu0
  %v2075 = vadd.f32 %v1958, %v2074
  %v2076 = vand.u32 %v1557, 4294901760
  %v2077 = vsub.f32 %v1557, %v2076
  %v2078 = vand.u32 %v2077, 4294901760
  %2079 = vmatmul.f32.gmra.mxu0 %v2078
  %v2080 = vpop.f32.mrf.mxu0
  %v2081 = vadd.f32 %v1963, %v2080
  %v2082 = vand.u32 %v1558, 4294901760
  %v2083 = vsub.f32 %v1558, %v2082
  %v2084 = vand.u32 %v2083, 4294901760
  %2085 = vmatmul.f32.gmra.mxu0 %v2084
  %v2086 = vpop.f32.mrf.mxu0
  %v2087 = vadd.f32 %v1968, %v2086
  %v2088 = vand.u32 %v1559, 4294901760
  %v2089 = vsub.f32 %v1559, %v2088
  %v2090 = vand.u32 %v2089, 4294901760
  %2091 = vmatmul.f32.gmra.mxu0 %v2090
  %v2092 = vpop.f32.mrf.mxu0
  %v2093 = vadd.f32 %v1973, %v2092
  %v2094 = vand.u32 %v1560, 4294901760
  %v2095 = vsub.f32 %v1560, %v2094
  %v2096 = vand.u32 %v2095, 4294901760
  %2097 = vmatmul.f32.gmra.mxu0 %v2096
  %v2098 = vpop.f32.mrf.mxu0
  %v2099 = vadd.f32 %v1978, %v2098
  %v2100 = vand.u32 %v1561, 4294901760
  %v2101 = vsub.f32 %v1561, %v2100
  %v2102 = vand.u32 %v2101, 4294901760
  %2103 = vmatmul.f32.gmra.mxu0 %v2102
  %v2104 = vpop.f32.mrf.mxu0
  %v2105 = vadd.f32 %v1983, %v2104
  %v2106 = vand.u32 %v1562, 4294901760
  %v2107 = vsub.f32 %v1562, %v2106
  %v2108 = vand.u32 %v2107, 4294901760
  %2109 = vmatmul.f32.gmra.mxu0 %v2108
  %v2110 = vpop.f32.mrf.mxu0
  %v2111 = vadd.f32 %v1988, %v2110
  %v2112 = vand.u32 %v1563, 4294901760
  %v2113 = vsub.f32 %v1563, %v2112
  %v2114 = vand.u32 %v2113, 4294901760
  %2115 = vmatmul.f32.gmra.mxu0 %v2114
  %v2116 = vpop.f32.mrf.mxu0
  %v2117 = vadd.f32 %v1993, %v2116
  %v2118 = vand.u32 %v1564, 4294901760
  %v2119 = vsub.f32 %v1564, %v2118
  %v2120 = vand.u32 %v2119, 4294901760
  %2121 = vmatmul.f32.gmra.mxu0 %v2120
  %v2122 = vpop.f32.mrf.mxu0
  %v2123 = vadd.f32 %v1998, %v2122
  %v2124 = vand.u32 %v1565, 4294901760
  %v2125 = vsub.f32 %v1565, %v2124
  %v2126 = vand.u32 %v2125, 4294901760
  %2127 = vmatmul.f32.gmra.mxu0 %v2126
  %v2128 = vpop.f32.mrf.mxu0
  %v2129 = vadd.f32 %v2003, %v2128
  %v2130 = vand.u32 %v1566, 4294901760
  %v2131 = vsub.f32 %v1566, %v2130
  %v2132 = vand.u32 %v2131, 4294901760
  %2133 = vmatmul.f32.gmra.mxu0 %v2132
  %v2134 = vpop.f32.mrf.mxu0
  %v2135 = vadd.f32 %v2008, %v2134
  %v2136 = vand.u32 %v1567, 4294901760
  %v2137 = vsub.f32 %v1567, %v2136
  %v2138 = vand.u32 %v2137, 4294901760
  %2139 = vmatmul.f32.gmra.mxu0 %v2138
  %v2140 = vpop.f32.mrf.mxu0
  %v2141 = vadd.f32 %v2013, %v2140
  %v2142 = vand.u32 %v1568, 4294901760
  %v2143 = vsub.f32 %v1568, %v2142
  %v2144 = vand.u32 %v2143, 4294901760
  %2145 = vmatmul.f32.gmra.mxu0 %v2144
  %v2146 = vpop.f32.mrf.mxu0
  %v2147 = vadd.f32 %v2018, %v2146
  %2148 = vdwg.mxu0
  %v2149 = vand.u32 %v48, 4294901760
  %v2150 = vsub.f32 %v48, %v2149
  %v2151 = vand.u32 %v2150, 4294901760
  %2152 = vmatpush.msra.mxu0 %v2151
  %v2153 = vand.u32 %v47, 4294901760
  %v2154 = vsub.f32 %v47, %v2153
  %v2155 = vand.u32 %v2154, 4294901760
  %2156 = vmatpush.msra.mxu0 %v2155
  %v2157 = vand.u32 %v46, 4294901760
  %v2158 = vsub.f32 %v46, %v2157
  %v2159 = vand.u32 %v2158, 4294901760
  %2160 = vmatpush.msra.mxu0 %v2159
  %v2161 = vand.u32 %v45, 4294901760
  %v2162 = vsub.f32 %v45, %v2161
  %v2163 = vand.u32 %v2162, 4294901760
  %2164 = vmatpush.msra.mxu0 %v2163
  %v2165 = vand.u32 %v44, 4294901760
  %v2166 = vsub.f32 %v44, %v2165
  %v2167 = vand.u32 %v2166, 4294901760
  %2168 = vmatpush.msra.mxu0 %v2167
  %v2169 = vand.u32 %v43, 4294901760
  %v2170 = vsub.f32 %v43, %v2169
  %v2171 = vand.u32 %v2170, 4294901760
  %2172 = vmatpush.msra.mxu0 %v2171
  %v2173 = vand.u32 %v42, 4294901760
  %v2174 = vsub.f32 %v42, %v2173
  %v2175 = vand.u32 %v2174, 4294901760
  %2176 = vmatpush.msra.mxu0 %v2175
  %v2177 = vand.u32 %v41, 4294901760
  %v2178 = vsub.f32 %v41, %v2177
  %v2179 = vand.u32 %v2178, 4294901760
  %2180 = vmatpush.msra.mxu0 %v2179
  %v2181 = vand.u32 %v40, 4294901760
  %v2182 = vsub.f32 %v40, %v2181
  %v2183 = vand.u32 %v2182, 4294901760
  %2184 = vmatpush.msra.mxu0 %v2183
  %v2185 = vand.u32 %v39, 4294901760
  %v2186 = vsub.f32 %v39, %v2185
  %v2187 = vand.u32 %v2186, 4294901760
  %2188 = vmatpush.msra.mxu0 %v2187
  %v2189 = vand.u32 %v38, 4294901760
  %v2190 = vsub.f32 %v38, %v2189
  %v2191 = vand.u32 %v2190, 4294901760
  %2192 = vmatpush.msra.mxu0 %v2191
  %v2193 = vand.u32 %v37, 4294901760
  %v2194 = vsub.f32 %v37, %v2193
  %v2195 = vand.u32 %v2194, 4294901760
  %2196 = vmatpush.msra.mxu0 %v2195
  %v2197 = vand.u32 %v36, 4294901760
  %v2198 = vsub.f32 %v36, %v2197
  %v2199 = vand.u32 %v2198, 4294901760
  %2200 = vmatpush.msra.mxu0 %v2199
  %v2201 = vand.u32 %v35, 4294901760
  %v2202 = vsub.f32 %v35, %v2201
  %v2203 = vand.u32 %v2202, 4294901760
  %2204 = vmatpush.msra.mxu0 %v2203
  %v2205 = vand.u32 %v34, 4294901760
  %v2206 = vsub.f32 %v34, %v2205
  %v2207 = vand.u32 %v2206, 4294901760
  %2208 = vmatpush.msra.mxu0 %v2207
  %v2209 = vand.u32 %v33, 4294901760
  %v2210 = vsub.f32 %v33, %v2209
  %v2211 = vand.u32 %v2210, 4294901760
  %2212 = vmatpush.msra.mxu0 %v2211
  %v2213 = vand.u32 %v1553, 4294901760
  %2214 = vmatmul.f32.gmra.mxu0 %v2213
  %v2215 = vpop.f32.mrf.mxu0
  %v2216 = vadd.f32 %v2057, %v2215
  %v2217 = vand.u32 %v1554, 4294901760
  %2218 = vmatmul.f32.gmra.mxu0 %v2217
  %v2219 = vpop.f32.mrf.mxu0
  %v2220 = vadd.f32 %v2063, %v2219
  %v2221 = vand.u32 %v1555, 4294901760
  %2222 = vmatmul.f32.gmra.mxu0 %v2221
  %v2223 = vpop.f32.mrf.mxu0
  %v2224 = vadd.f32 %v2069, %v2223
  %v2225 = vand.u32 %v1556, 4294901760
  %2226 = vmatmul.f32.gmra.mxu0 %v2225
  %v2227 = vpop.f32.mrf.mxu0
  %v2228 = vadd.f32 %v2075, %v2227
  %v2229 = vand.u32 %v1557, 4294901760
  %2230 = vmatmul.f32.gmra.mxu0 %v2229
  %v2231 = vpop.f32.mrf.mxu0
  %v2232 = vadd.f32 %v2081, %v2231
  %v2233 = vand.u32 %v1558, 4294901760
  %2234 = vmatmul.f32.gmra.mxu0 %v2233
  %v2235 = vpop.f32.mrf.mxu0
  %v2236 = vadd.f32 %v2087, %v2235
  %v2237 = vand.u32 %v1559, 4294901760
  %2238 = vmatmul.f32.gmra.mxu0 %v2237
  %v2239 = vpop.f32.mrf.mxu0
  %v2240 = vadd.f32 %v2093, %v2239
  %v2241 = vand.u32 %v1560, 4294901760
  %2242 = vmatmul.f32.gmra.mxu0 %v2241
  %v2243 = vpop.f32.mrf.mxu0
  %v2244 = vadd.f32 %v2099, %v2243
  %v2245 = vand.u32 %v1561, 4294901760
  %2246 = vmatmul.f32.gmra.mxu0 %v2245
  %v2247 = vpop.f32.mrf.mxu0
  %v2248 = vadd.f32 %v2105, %v2247
  %v2249 = vand.u32 %v1562, 4294901760
  %2250 = vmatmul.f32.gmra.mxu0 %v2249
  %v2251 = vpop.f32.mrf.mxu0
  %v2252 = vadd.f32 %v2111, %v2251
  %v2253 = vand.u32 %v1563, 4294901760
  %2254 = vmatmul.f32.gmra.mxu0 %v2253
  %v2255 = vpop.f32.mrf.mxu0
  %v2256 = vadd.f32 %v2117, %v2255
  %v2257 = vand.u32 %v1564, 4294901760
  %2258 = vmatmul.f32.gmra.mxu0 %v2257
  %v2259 = vpop.f32.mrf.mxu0
  %v2260 = vadd.f32 %v2123, %v2259
  %v2261 = vand.u32 %v1565, 4294901760
  %2262 = vmatmul.f32.gmra.mxu0 %v2261
  %v2263 = vpop.f32.mrf.mxu0
  %v2264 = vadd.f32 %v2129, %v2263
  %v2265 = vand.u32 %v1566, 4294901760
  %2266 = vmatmul.f32.gmra.mxu0 %v2265
  %v2267 = vpop.f32.mrf.mxu0
  %v2268 = vadd.f32 %v2135, %v2267
  %v2269 = vand.u32 %v1567, 4294901760
  %2270 = vmatmul.f32.gmra.mxu0 %v2269
  %v2271 = vpop.f32.mrf.mxu0
  %v2272 = vadd.f32 %v2141, %v2271
  %v2273 = vand.u32 %v1568, 4294901760
  %2274 = vmatmul.f32.gmra.mxu0 %v2273
  %v2275 = vpop.f32.mrf.mxu0
  %v2276 = vadd.f32 %v2147, %v2275
  %2277 = vdwg.mxu0
  %v2278 = vand.u32 %v48, 4294901760
  %2279 = vmatpush.msra.mxu0 %v2278
  %v2280 = vand.u32 %v47, 4294901760
  %2281 = vmatpush.msra.mxu0 %v2280
  %v2282 = vand.u32 %v46, 4294901760
  %2283 = vmatpush.msra.mxu0 %v2282
  %v2284 = vand.u32 %v45, 4294901760
  %2285 = vmatpush.msra.mxu0 %v2284
  %v2286 = vand.u32 %v44, 4294901760
  %2287 = vmatpush.msra.mxu0 %v2286
  %v2288 = vand.u32 %v43, 4294901760
  %2289 = vmatpush.msra.mxu0 %v2288
  %v2290 = vand.u32 %v42, 4294901760
  %2291 = vmatpush.msra.mxu0 %v2290
  %v2292 = vand.u32 %v41, 4294901760
  %2293 = vmatpush.msra.mxu0 %v2292
  %v2294 = vand.u32 %v40, 4294901760
  %2295 = vmatpush.msra.mxu0 %v2294
  %v2296 = vand.u32 %v39, 4294901760
  %2297 = vmatpush.msra.mxu0 %v2296
  %v2298 = vand.u32 %v38, 4294901760
  %2299 = vmatpush.msra.mxu0 %v2298
  %v2300 = vand.u32 %v37, 4294901760
  %2301 = vmatpush.msra.mxu0 %v2300
  %v2302 = vand.u32 %v36, 4294901760
  %2303 = vmatpush.msra.mxu0 %v2302
  %v2304 = vand.u32 %v35, 4294901760
  %2305 = vmatpush.msra.mxu0 %v2304
  %v2306 = vand.u32 %v34, 4294901760
  %2307 = vmatpush.msra.mxu0 %v2306
  %v2308 = vand.u32 %v33, 4294901760
  %2309 = vmatpush.msra.mxu0 %v2308
  %v2310 = vand.u32 %v1553, 4294901760
  %2311 = vmatmul.f32.gmra.mxu0 %v2310
  %v2312 = vpop.f32.mrf.mxu0
  %v2313 = vadd.f32 %v2216, %v2312
  %v2314 = vand.u32 %v1554, 4294901760
  %2315 = vmatmul.f32.gmra.mxu0 %v2314
  %v2316 = vpop.f32.mrf.mxu0
  %v2317 = vadd.f32 %v2220, %v2316
  %v2318 = vand.u32 %v1555, 4294901760
  %2319 = vmatmul.f32.gmra.mxu0 %v2318
  %v2320 = vpop.f32.mrf.mxu0
  %v2321 = vadd.f32 %v2224, %v2320
  %v2322 = vand.u32 %v1556, 4294901760
  %2323 = vmatmul.f32.gmra.mxu0 %v2322
  %v2324 = vpop.f32.mrf.mxu0
  %v2325 = vadd.f32 %v2228, %v2324
  %v2326 = vand.u32 %v1557, 4294901760
  %2327 = vmatmul.f32.gmra.mxu0 %v2326
  %v2328 = vpop.f32.mrf.mxu0
  %v2329 = vadd.f32 %v2232, %v2328
  %v2330 = vand.u32 %v1558, 4294901760
  %2331 = vmatmul.f32.gmra.mxu0 %v2330
  %v2332 = vpop.f32.mrf.mxu0
  %v2333 = vadd.f32 %v2236, %v2332
  %v2334 = vand.u32 %v1559, 4294901760
  %2335 = vmatmul.f32.gmra.mxu0 %v2334
  %v2336 = vpop.f32.mrf.mxu0
  %v2337 = vadd.f32 %v2240, %v2336
  %v2338 = vand.u32 %v1560, 4294901760
  %2339 = vmatmul.f32.gmra.mxu0 %v2338
  %v2340 = vpop.f32.mrf.mxu0
  %v2341 = vadd.f32 %v2244, %v2340
  %v2342 = vand.u32 %v1561, 4294901760
  %2343 = vmatmul.f32.gmra.mxu0 %v2342
  %v2344 = vpop.f32.mrf.mxu0
  %v2345 = vadd.f32 %v2248, %v2344
  %v2346 = vand.u32 %v1562, 4294901760
  %2347 = vmatmul.f32.gmra.mxu0 %v2346
  %v2348 = vpop.f32.mrf.mxu0
  %v2349 = vadd.f32 %v2252, %v2348
  %v2350 = vand.u32 %v1563, 4294901760
  %2351 = vmatmul.f32.gmra.mxu0 %v2350
  %v2352 = vpop.f32.mrf.mxu0
  %v2353 = vadd.f32 %v2256, %v2352
  %v2354 = vand.u32 %v1564, 4294901760
  %2355 = vmatmul.f32.gmra.mxu0 %v2354
  %v2356 = vpop.f32.mrf.mxu0
  %v2357 = vadd.f32 %v2260, %v2356
  %v2358 = vand.u32 %v1565, 4294901760
  %2359 = vmatmul.f32.gmra.mxu0 %v2358
  %v2360 = vpop.f32.mrf.mxu0
  %v2361 = vadd.f32 %v2264, %v2360
  %v2362 = vand.u32 %v1566, 4294901760
  %2363 = vmatmul.f32.gmra.mxu0 %v2362
  %v2364 = vpop.f32.mrf.mxu0
  %v2365 = vadd.f32 %v2268, %v2364
  %v2366 = vand.u32 %v1567, 4294901760
  %2367 = vmatmul.f32.gmra.mxu0 %v2366
  %v2368 = vpop.f32.mrf.mxu0
  %v2369 = vadd.f32 %v2272, %v2368
  %v2370 = vand.u32 %v1568, 4294901760
  %2371 = vmatmul.f32.gmra.mxu0 %v2370
  %v2372 = vpop.f32.mrf.mxu0
  %v2373 = vadd.f32 %v2276, %v2372
  %2374 = vdwg.mxu0
  %v2375 = vmul.f32 %v2313, 0.03125
  %v2376 = vmul.f32 %v2317, 0.03125
  %v2377 = vmul.f32 %v2321, 0.03125
  %v2378 = vmul.f32 %v2325, 0.03125
  %v2379 = vmul.f32 %v2329, 0.03125
  %v2380 = vmul.f32 %v2333, 0.03125
  %v2381 = vmul.f32 %v2337, 0.03125
  %v2382 = vmul.f32 %v2341, 0.03125
  %v2383 = vmul.f32 %v2345, 0.03125
  %v2384 = vmul.f32 %v2349, 0.03125
  %v2385 = vmul.f32 %v2353, 0.03125
  %v2386 = vmul.f32 %v2357, 0.03125
  %v2387 = vmul.f32 %v2361, 0.03125
  %v2388 = vmul.f32 %v2365, 0.03125
  %v2389 = vmul.f32 %v2369, 0.03125
  %v2390 = vmul.f32 %v2373, 0.03125
  %v2391 = vadd.f32 %v2375, 1e-05
  %v2392 = vadd.f32 %v2376, 1e-05
  %v2393 = vadd.f32 %v2377, 1e-05
  %v2394 = vadd.f32 %v2378, 1e-05
  %v2395 = vadd.f32 %v2379, 1e-05
  %v2396 = vadd.f32 %v2380, 1e-05
  %v2397 = vadd.f32 %v2381, 1e-05
  %v2398 = vadd.f32 %v2382, 1e-05
  %v2399 = vadd.f32 %v2383, 1e-05
  %v2400 = vadd.f32 %v2384, 1e-05
  %v2401 = vadd.f32 %v2385, 1e-05
  %v2402 = vadd.f32 %v2386, 1e-05
  %v2403 = vadd.f32 %v2387, 1e-05
  %v2404 = vadd.f32 %v2388, 1e-05
  %v2405 = vadd.f32 %v2389, 1e-05
  %v2406 = vadd.f32 %v2390, 1e-05
  %v2407 = vrsqrt.pop %v2391
  %v2408 = vmul.f32 %v2407, %v2391
  %v2409 = vmul.f32 %v2408, %v2407
  %v2410 = vmul.f32 0.5, %v2409
  %v2411 = vsub.f32 1.5, %v2410
  %v2412 = vmul.f32 %v2407, %v2411
  %vm2413 = vweird.f32 %v2391
  %vm2414 = vweird.f32 %v2407
  %vm2415 = vmor %vm2413, %vm2414
  %v2416 = vsel %vm2415, %v2407, %v2412
  %v2417 = vrsqrt.pop %v2392
  %v2418 = vmul.f32 %v2417, %v2392
  %v2419 = vmul.f32 %v2418, %v2417
  %v2420 = vmul.f32 0.5, %v2419
  %v2421 = vsub.f32 1.5, %v2420
  %v2422 = vmul.f32 %v2417, %v2421
  %vm2423 = vweird.f32 %v2392
  %vm2424 = vweird.f32 %v2417
  %vm2425 = vmor %vm2423, %vm2424
  %v2426 = vsel %vm2425, %v2417, %v2422
  %v2427 = vrsqrt.pop %v2393
  %v2428 = vmul.f32 %v2427, %v2393
  %v2429 = vmul.f32 %v2428, %v2427
  %v2430 = vmul.f32 0.5, %v2429
  %v2431 = vsub.f32 1.5, %v2430
  %v2432 = vmul.f32 %v2427, %v2431
  %vm2433 = vweird.f32 %v2393
  %vm2434 = vweird.f32 %v2427
  %vm2435 = vmor %vm2433, %vm2434
  %v2436 = vsel %vm2435, %v2427, %v2432
  %v2437 = vrsqrt.pop %v2394
  %v2438 = vmul.f32 %v2437, %v2394
  %v2439 = vmul.f32 %v2438, %v2437
  %v2440 = vmul.f32 0.5, %v2439
  %v2441 = vsub.f32 1.5, %v2440
  %v2442 = vmul.f32 %v2437, %v2441
  %vm2443 = vweird.f32 %v2394
  %vm2444 = vweird.f32 %v2437
  %vm2445 = vmor %vm2443, %vm2444
  %v2446 = vsel %vm2445, %v2437, %v2442
  %v2447 = vrsqrt.pop %v2395
  %v2448 = vmul.f32 %v2447, %v2395
  %v2449 = vmul.f32 %v2448, %v2447
  %v2450 = vmul.f32 0.5, %v2449
  %v2451 = vsub.f32 1.5, %v2450
  %v2452 = vmul.f32 %v2447, %v2451
  %vm2453 = vweird.f32 %v2395
  %vm2454 = vweird.f32 %v2447
  %vm2455 = vmor %vm2453, %vm2454
  %v2456 = vsel %vm2455, %v2447, %v2452
  %v2457 = vrsqrt.pop %v2396
  %v2458 = vmul.f32 %v2457, %v2396
  %v2459 = vmul.f32 %v2458, %v2457
  %v2460 = vmul.f32 0.5, %v2459
  %v2461 = vsub.f32 1.5, %v2460
  %v2462 = vmul.f32 %v2457, %v2461
  %vm2463 = vweird.f32 %v2396
  %vm2464 = vweird.f32 %v2457
  %vm2465 = vmor %vm2463, %vm2464
  %v2466 = vsel %vm2465, %v2457, %v2462
  %v2467 = vrsqrt.pop %v2397
  %v2468 = vmul.f32 %v2467, %v2397
  %v2469 = vmul.f32 %v2468, %v2467
  %v2470 = vmul.f32 0.5, %v2469
  %v2471 = vsub.f32 1.5, %v2470
  %v2472 = vmul.f32 %v2467, %v2471
  %vm2473 = vweird.f32 %v2397
  %vm2474 = vweird.f32 %v2467
  %vm2475 = vmor %vm2473, %vm2474
  %v2476 = vsel %vm2475, %v2467, %v2472
  %v2477 = vrsqrt.pop %v2398
  %v2478 = vmul.f32 %v2477, %v2398
  %v2479 = vmul.f32 %v2478, %v2477
  %v2480 = vmul.f32 0.5, %v2479
  %v2481 = vsub.f32 1.5, %v2480
  %v2482 = vmul.f32 %v2477, %v2481
  %vm2483 = vweird.f32 %v2398
  %vm2484 = vweird.f32 %v2477
  %vm2485 = vmor %vm2483, %vm2484
  %v2486 = vsel %vm2485, %v2477, %v2482
  %v2487 = vrsqrt.pop %v2399
  %v2488 = vmul.f32 %v2487, %v2399
  %v2489 = vmul.f32 %v2488, %v2487
  %v2490 = vmul.f32 0.5, %v2489
  %v2491 = vsub.f32 1.5, %v2490
  %v2492 = vmul.f32 %v2487, %v2491
  %vm2493 = vweird.f32 %v2399
  %vm2494 = vweird.f32 %v2487
  %vm2495 = vmor %vm2493, %vm2494
  %v2496 = vsel %vm2495, %v2487, %v2492
  %v2497 = vrsqrt.pop %v2400
  %v2498 = vmul.f32 %v2497, %v2400
  %v2499 = vmul.f32 %v2498, %v2497
  %v2500 = vmul.f32 0.5, %v2499
  %v2501 = vsub.f32 1.5, %v2500
  %v2502 = vmul.f32 %v2497, %v2501
  %vm2503 = vweird.f32 %v2400
  %vm2504 = vweird.f32 %v2497
  %vm2505 = vmor %vm2503, %vm2504
  %v2506 = vsel %vm2505, %v2497, %v2502
  %v2507 = vrsqrt.pop %v2401
  %v2508 = vmul.f32 %v2507, %v2401
  %v2509 = vmul.f32 %v2508, %v2507
  %v2510 = vmul.f32 0.5, %v2509
  %v2511 = vsub.f32 1.5, %v2510
  %v2512 = vmul.f32 %v2507, %v2511
  %vm2513 = vweird.f32 %v2401
  %vm2514 = vweird.f32 %v2507
  %vm2515 = vmor %vm2513, %vm2514
  %v2516 = vsel %vm2515, %v2507, %v2512
  %v2517 = vrsqrt.pop %v2402
  %v2518 = vmul.f32 %v2517, %v2402
  %v2519 = vmul.f32 %v2518, %v2517
  %v2520 = vmul.f32 0.5, %v2519
  %v2521 = vsub.f32 1.5, %v2520
  %v2522 = vmul.f32 %v2517, %v2521
  %vm2523 = vweird.f32 %v2402
  %vm2524 = vweird.f32 %v2517
  %vm2525 = vmor %vm2523, %vm2524
  %v2526 = vsel %vm2525, %v2517, %v2522
  %v2527 = vrsqrt.pop %v2403
  %v2528 = vmul.f32 %v2527, %v2403
  %v2529 = vmul.f32 %v2528, %v2527
  %v2530 = vmul.f32 0.5, %v2529
  %v2531 = vsub.f32 1.5, %v2530
  %v2532 = vmul.f32 %v2527, %v2531
  %vm2533 = vweird.f32 %v2403
  %vm2534 = vweird.f32 %v2527
  %vm2535 = vmor %vm2533, %vm2534
  %v2536 = vsel %vm2535, %v2527, %v2532
  %v2537 = vrsqrt.pop %v2404
  %v2538 = vmul.f32 %v2537, %v2404
  %v2539 = vmul.f32 %v2538, %v2537
  %v2540 = vmul.f32 0.5, %v2539
  %v2541 = vsub.f32 1.5, %v2540
  %v2542 = vmul.f32 %v2537, %v2541
  %vm2543 = vweird.f32 %v2404
  %vm2544 = vweird.f32 %v2537
  %vm2545 = vmor %vm2543, %vm2544
  %v2546 = vsel %vm2545, %v2537, %v2542
  %v2547 = vrsqrt.pop %v2405
  %v2548 = vmul.f32 %v2547, %v2405
  %v2549 = vmul.f32 %v2548, %v2547
  %v2550 = vmul.f32 0.5, %v2549
  %v2551 = vsub.f32 1.5, %v2550
  %v2552 = vmul.f32 %v2547, %v2551
  %vm2553 = vweird.f32 %v2405
  %vm2554 = vweird.f32 %v2547
  %vm2555 = vmor %vm2553, %vm2554
  %v2556 = vsel %vm2555, %v2547, %v2552
  %v2557 = vrsqrt.pop %v2406
  %v2558 = vmul.f32 %v2557, %v2406
  %v2559 = vmul.f32 %v2558, %v2557
  %v2560 = vmul.f32 0.5, %v2559
  %v2561 = vsub.f32 1.5, %v2560
  %v2562 = vmul.f32 %v2557, %v2561
  %vm2563 = vweird.f32 %v2406
  %vm2564 = vweird.f32 %v2557
  %vm2565 = vmor %vm2563, %vm2564
  %v2566 = vsel %vm2565, %v2557, %v2562
  %v2568 = vsel %vm873, %v2416, 0
  %v2571 = vsel %vm873, %v2426, 0
  %v2574 = vsel %vm873, %v2436, 0
  %v2577 = vsel %vm873, %v2446, 0
  %v2580 = vsel %vm873, %v2456, 0
  %v2583 = vsel %vm873, %v2466, 0
  %v2586 = vsel %vm873, %v2476, 0
  %v2589 = vsel %vm873, %v2486, 0
  %v2592 = vsel %vm873, %v2496, 0
  %v2595 = vsel %vm873, %v2506, 0
  %v2598 = vsel %vm873, %v2516, 0
  %v2601 = vsel %vm873, %v2526, 0
  %v2604 = vsel %vm873, %v2536, 0
  %v2607 = vsel %vm873, %v2546, 0
  %v2610 = vsel %vm873, %v2556, 0
  %v2613 = vsel %vm873, %v2566, 0
  %v2616 = vsel %vm922, %v50, 0
  %2618 = vmatpush.msra.mxu0 0.0
  %2619 = vmatpush.msra.mxu0 0.0
  %2620 = vmatpush.msra.mxu0 0.0
  %2621 = vmatpush.msra.mxu0 0.0
  %2622 = vmatpush.msra.mxu0 0.0
  %2623 = vmatpush.msra.mxu0 0.0
  %2624 = vmatpush.msra.mxu0 0.0
  %2625 = vmatpush.msra.mxu0 0.0
  %2626 = vmatpush.msra.mxu0 0.0
  %2627 = vmatpush.msra.mxu0 0.0
  %2628 = vmatpush.msra.mxu0 0.0
  %2629 = vmatpush.msra.mxu0 0.0
  %2630 = vmatpush.msra.mxu0 0.0
  %2631 = vmatpush.msra.mxu0 0.0
  %2632 = vmatpush.msra.mxu0 0.0
  %v2633 = vand.u32 %v2616, 4294901760
  %2634 = vmatpush.msra.mxu0 %v2633
  %v2635 = vand.u32 %v2568, 4294901760
  %v2636 = vsub.f32 %v2568, %v2635
  %v2637 = vand.u32 %v2636, 4294901760
  %v2638 = vsub.f32 %v2636, %v2637
  %v2639 = vand.u32 %v2638, 4294901760
  %2640 = vmatmul.f32.gmra.mxu0 %v2639
  %v2641 = vpop.f32.mrf.mxu0
  %v2642 = vadd.f32 0.0, %v2641
  %v2643 = vand.u32 %v2571, 4294901760
  %v2644 = vsub.f32 %v2571, %v2643
  %v2645 = vand.u32 %v2644, 4294901760
  %v2646 = vsub.f32 %v2644, %v2645
  %v2647 = vand.u32 %v2646, 4294901760
  %2648 = vmatmul.f32.gmra.mxu0 %v2647
  %v2649 = vpop.f32.mrf.mxu0
  %v2650 = vadd.f32 0.0, %v2649
  %v2651 = vand.u32 %v2574, 4294901760
  %v2652 = vsub.f32 %v2574, %v2651
  %v2653 = vand.u32 %v2652, 4294901760
  %v2654 = vsub.f32 %v2652, %v2653
  %v2655 = vand.u32 %v2654, 4294901760
  %2656 = vmatmul.f32.gmra.mxu0 %v2655
  %v2657 = vpop.f32.mrf.mxu0
  %v2658 = vadd.f32 0.0, %v2657
  %v2659 = vand.u32 %v2577, 4294901760
  %v2660 = vsub.f32 %v2577, %v2659
  %v2661 = vand.u32 %v2660, 4294901760
  %v2662 = vsub.f32 %v2660, %v2661
  %v2663 = vand.u32 %v2662, 4294901760
  %2664 = vmatmul.f32.gmra.mxu0 %v2663
  %v2665 = vpop.f32.mrf.mxu0
  %v2666 = vadd.f32 0.0, %v2665
  %v2667 = vand.u32 %v2580, 4294901760
  %v2668 = vsub.f32 %v2580, %v2667
  %v2669 = vand.u32 %v2668, 4294901760
  %v2670 = vsub.f32 %v2668, %v2669
  %v2671 = vand.u32 %v2670, 4294901760
  %2672 = vmatmul.f32.gmra.mxu0 %v2671
  %v2673 = vpop.f32.mrf.mxu0
  %v2674 = vadd.f32 0.0, %v2673
  %v2675 = vand.u32 %v2583, 4294901760
  %v2676 = vsub.f32 %v2583, %v2675
  %v2677 = vand.u32 %v2676, 4294901760
  %v2678 = vsub.f32 %v2676, %v2677
  %v2679 = vand.u32 %v2678, 4294901760
  %2680 = vmatmul.f32.gmra.mxu0 %v2679
  %v2681 = vpop.f32.mrf.mxu0
  %v2682 = vadd.f32 0.0, %v2681
  %v2683 = vand.u32 %v2586, 4294901760
  %v2684 = vsub.f32 %v2586, %v2683
  %v2685 = vand.u32 %v2684, 4294901760
  %v2686 = vsub.f32 %v2684, %v2685
  %v2687 = vand.u32 %v2686, 4294901760
  %2688 = vmatmul.f32.gmra.mxu0 %v2687
  %v2689 = vpop.f32.mrf.mxu0
  %v2690 = vadd.f32 0.0, %v2689
  %v2691 = vand.u32 %v2589, 4294901760
  %v2692 = vsub.f32 %v2589, %v2691
  %v2693 = vand.u32 %v2692, 4294901760
  %v2694 = vsub.f32 %v2692, %v2693
  %v2695 = vand.u32 %v2694, 4294901760
  %2696 = vmatmul.f32.gmra.mxu0 %v2695
  %v2697 = vpop.f32.mrf.mxu0
  %v2698 = vadd.f32 0.0, %v2697
  %v2699 = vand.u32 %v2592, 4294901760
  %v2700 = vsub.f32 %v2592, %v2699
  %v2701 = vand.u32 %v2700, 4294901760
  %v2702 = vsub.f32 %v2700, %v2701
  %v2703 = vand.u32 %v2702, 4294901760
  %2704 = vmatmul.f32.gmra.mxu0 %v2703
  %v2705 = vpop.f32.mrf.mxu0
  %v2706 = vadd.f32 0.0, %v2705
  %v2707 = vand.u32 %v2595, 4294901760
  %v2708 = vsub.f32 %v2595, %v2707
  %v2709 = vand.u32 %v2708, 4294901760
  %v2710 = vsub.f32 %v2708, %v2709
  %v2711 = vand.u32 %v2710, 4294901760
  %2712 = vmatmul.f32.gmra.mxu0 %v2711
  %v2713 = vpop.f32.mrf.mxu0
  %v2714 = vadd.f32 0.0, %v2713
  %v2715 = vand.u32 %v2598, 4294901760
  %v2716 = vsub.f32 %v2598, %v2715
  %v2717 = vand.u32 %v2716, 4294901760
  %v2718 = vsub.f32 %v2716, %v2717
  %v2719 = vand.u32 %v2718, 4294901760
  %2720 = vmatmul.f32.gmra.mxu0 %v2719
  %v2721 = vpop.f32.mrf.mxu0
  %v2722 = vadd.f32 0.0, %v2721
  %v2723 = vand.u32 %v2601, 4294901760
  %v2724 = vsub.f32 %v2601, %v2723
  %v2725 = vand.u32 %v2724, 4294901760
  %v2726 = vsub.f32 %v2724, %v2725
  %v2727 = vand.u32 %v2726, 4294901760
  %2728 = vmatmul.f32.gmra.mxu0 %v2727
  %v2729 = vpop.f32.mrf.mxu0
  %v2730 = vadd.f32 0.0, %v2729
  %v2731 = vand.u32 %v2604, 4294901760
  %v2732 = vsub.f32 %v2604, %v2731
  %v2733 = vand.u32 %v2732, 4294901760
  %v2734 = vsub.f32 %v2732, %v2733
  %v2735 = vand.u32 %v2734, 4294901760
  %2736 = vmatmul.f32.gmra.mxu0 %v2735
  %v2737 = vpop.f32.mrf.mxu0
  %v2738 = vadd.f32 0.0, %v2737
  %v2739 = vand.u32 %v2607, 4294901760
  %v2740 = vsub.f32 %v2607, %v2739
  %v2741 = vand.u32 %v2740, 4294901760
  %v2742 = vsub.f32 %v2740, %v2741
  %v2743 = vand.u32 %v2742, 4294901760
  %2744 = vmatmul.f32.gmra.mxu0 %v2743
  %v2745 = vpop.f32.mrf.mxu0
  %v2746 = vadd.f32 0.0, %v2745
  %v2747 = vand.u32 %v2610, 4294901760
  %v2748 = vsub.f32 %v2610, %v2747
  %v2749 = vand.u32 %v2748, 4294901760
  %v2750 = vsub.f32 %v2748, %v2749
  %v2751 = vand.u32 %v2750, 4294901760
  %2752 = vmatmul.f32.gmra.mxu0 %v2751
  %v2753 = vpop.f32.mrf.mxu0
  %v2754 = vadd.f32 0.0, %v2753
  %v2755 = vand.u32 %v2613, 4294901760
  %v2756 = vsub.f32 %v2613, %v2755
  %v2757 = vand.u32 %v2756, 4294901760
  %v2758 = vsub.f32 %v2756, %v2757
  %v2759 = vand.u32 %v2758, 4294901760
  %2760 = vmatmul.f32.gmra.mxu0 %v2759
  %v2761 = vpop.f32.mrf.mxu0
  %v2762 = vadd.f32 0.0, %v2761
  %2763 = vdwg.mxu0
  %2764 = vmatpush.msra.mxu0 0.0
  %2765 = vmatpush.msra.mxu0 0.0
  %2766 = vmatpush.msra.mxu0 0.0
  %2767 = vmatpush.msra.mxu0 0.0
  %2768 = vmatpush.msra.mxu0 0.0
  %2769 = vmatpush.msra.mxu0 0.0
  %2770 = vmatpush.msra.mxu0 0.0
  %2771 = vmatpush.msra.mxu0 0.0
  %2772 = vmatpush.msra.mxu0 0.0
  %2773 = vmatpush.msra.mxu0 0.0
  %2774 = vmatpush.msra.mxu0 0.0
  %2775 = vmatpush.msra.mxu0 0.0
  %2776 = vmatpush.msra.mxu0 0.0
  %2777 = vmatpush.msra.mxu0 0.0
  %2778 = vmatpush.msra.mxu0 0.0
  %v2779 = vand.u32 %v2616, 4294901760
  %v2780 = vsub.f32 %v2616, %v2779
  %v2781 = vand.u32 %v2780, 4294901760
  %v2782 = vsub.f32 %v2780, %v2781
  %v2783 = vand.u32 %v2782, 4294901760
  %2784 = vmatpush.msra.mxu0 %v2783
  %v2785 = vand.u32 %v2568, 4294901760
  %2786 = vmatmul.f32.gmra.mxu0 %v2785
  %v2787 = vpop.f32.mrf.mxu0
  %v2788 = vadd.f32 %v2642, %v2787
  %v2789 = vand.u32 %v2571, 4294901760
  %2790 = vmatmul.f32.gmra.mxu0 %v2789
  %v2791 = vpop.f32.mrf.mxu0
  %v2792 = vadd.f32 %v2650, %v2791
  %v2793 = vand.u32 %v2574, 4294901760
  %2794 = vmatmul.f32.gmra.mxu0 %v2793
  %v2795 = vpop.f32.mrf.mxu0
  %v2796 = vadd.f32 %v2658, %v2795
  %v2797 = vand.u32 %v2577, 4294901760
  %2798 = vmatmul.f32.gmra.mxu0 %v2797
  %v2799 = vpop.f32.mrf.mxu0
  %v2800 = vadd.f32 %v2666, %v2799
  %v2801 = vand.u32 %v2580, 4294901760
  %2802 = vmatmul.f32.gmra.mxu0 %v2801
  %v2803 = vpop.f32.mrf.mxu0
  %v2804 = vadd.f32 %v2674, %v2803
  %v2805 = vand.u32 %v2583, 4294901760
  %2806 = vmatmul.f32.gmra.mxu0 %v2805
  %v2807 = vpop.f32.mrf.mxu0
  %v2808 = vadd.f32 %v2682, %v2807
  %v2809 = vand.u32 %v2586, 4294901760
  %2810 = vmatmul.f32.gmra.mxu0 %v2809
  %v2811 = vpop.f32.mrf.mxu0
  %v2812 = vadd.f32 %v2690, %v2811
  %v2813 = vand.u32 %v2589, 4294901760
  %2814 = vmatmul.f32.gmra.mxu0 %v2813
  %v2815 = vpop.f32.mrf.mxu0
  %v2816 = vadd.f32 %v2698, %v2815
  %v2817 = vand.u32 %v2592, 4294901760
  %2818 = vmatmul.f32.gmra.mxu0 %v2817
  %v2819 = vpop.f32.mrf.mxu0
  %v2820 = vadd.f32 %v2706, %v2819
  %v2821 = vand.u32 %v2595, 4294901760
  %2822 = vmatmul.f32.gmra.mxu0 %v2821
  %v2823 = vpop.f32.mrf.mxu0
  %v2824 = vadd.f32 %v2714, %v2823
  %v2825 = vand.u32 %v2598, 4294901760
  %2826 = vmatmul.f32.gmra.mxu0 %v2825
  %v2827 = vpop.f32.mrf.mxu0
  %v2828 = vadd.f32 %v2722, %v2827
  %v2829 = vand.u32 %v2601, 4294901760
  %2830 = vmatmul.f32.gmra.mxu0 %v2829
  %v2831 = vpop.f32.mrf.mxu0
  %v2832 = vadd.f32 %v2730, %v2831
  %v2833 = vand.u32 %v2604, 4294901760
  %2834 = vmatmul.f32.gmra.mxu0 %v2833
  %v2835 = vpop.f32.mrf.mxu0
  %v2836 = vadd.f32 %v2738, %v2835
  %v2837 = vand.u32 %v2607, 4294901760
  %2838 = vmatmul.f32.gmra.mxu0 %v2837
  %v2839 = vpop.f32.mrf.mxu0
  %v2840 = vadd.f32 %v2746, %v2839
  %v2841 = vand.u32 %v2610, 4294901760
  %2842 = vmatmul.f32.gmra.mxu0 %v2841
  %v2843 = vpop.f32.mrf.mxu0
  %v2844 = vadd.f32 %v2754, %v2843
  %v2845 = vand.u32 %v2613, 4294901760
  %2846 = vmatmul.f32.gmra.mxu0 %v2845
  %v2847 = vpop.f32.mrf.mxu0
  %v2848 = vadd.f32 %v2762, %v2847
  %2849 = vdwg.mxu0
  %2850 = vmatpush.msra.mxu0 0.0
  %2851 = vmatpush.msra.mxu0 0.0
  %2852 = vmatpush.msra.mxu0 0.0
  %2853 = vmatpush.msra.mxu0 0.0
  %2854 = vmatpush.msra.mxu0 0.0
  %2855 = vmatpush.msra.mxu0 0.0
  %2856 = vmatpush.msra.mxu0 0.0
  %2857 = vmatpush.msra.mxu0 0.0
  %2858 = vmatpush.msra.mxu0 0.0
  %2859 = vmatpush.msra.mxu0 0.0
  %2860 = vmatpush.msra.mxu0 0.0
  %2861 = vmatpush.msra.mxu0 0.0
  %2862 = vmatpush.msra.mxu0 0.0
  %2863 = vmatpush.msra.mxu0 0.0
  %2864 = vmatpush.msra.mxu0 0.0
  %v2865 = vand.u32 %v2616, 4294901760
  %v2866 = vsub.f32 %v2616, %v2865
  %2867 = vmatpush.msra.mxu0 %v2866
  %v2868 = vand.u32 %v2568, 4294901760
  %v2869 = vsub.f32 %v2568, %v2868
  %2870 = vmatmul.f32.gmra.mxu0 %v2869
  %v2871 = vpop.f32.mrf.mxu0
  %v2872 = vadd.f32 %v2788, %v2871
  %v2873 = vand.u32 %v2571, 4294901760
  %v2874 = vsub.f32 %v2571, %v2873
  %2875 = vmatmul.f32.gmra.mxu0 %v2874
  %v2876 = vpop.f32.mrf.mxu0
  %v2877 = vadd.f32 %v2792, %v2876
  %v2878 = vand.u32 %v2574, 4294901760
  %v2879 = vsub.f32 %v2574, %v2878
  %2880 = vmatmul.f32.gmra.mxu0 %v2879
  %v2881 = vpop.f32.mrf.mxu0
  %v2882 = vadd.f32 %v2796, %v2881
  %v2883 = vand.u32 %v2577, 4294901760
  %v2884 = vsub.f32 %v2577, %v2883
  %2885 = vmatmul.f32.gmra.mxu0 %v2884
  %v2886 = vpop.f32.mrf.mxu0
  %v2887 = vadd.f32 %v2800, %v2886
  %v2888 = vand.u32 %v2580, 4294901760
  %v2889 = vsub.f32 %v2580, %v2888
  %2890 = vmatmul.f32.gmra.mxu0 %v2889
  %v2891 = vpop.f32.mrf.mxu0
  %v2892 = vadd.f32 %v2804, %v2891
  %v2893 = vand.u32 %v2583, 4294901760
  %v2894 = vsub.f32 %v2583, %v2893
  %2895 = vmatmul.f32.gmra.mxu0 %v2894
  %v2896 = vpop.f32.mrf.mxu0
  %v2897 = vadd.f32 %v2808, %v2896
  %v2898 = vand.u32 %v2586, 4294901760
  %v2899 = vsub.f32 %v2586, %v2898
  %2900 = vmatmul.f32.gmra.mxu0 %v2899
  %v2901 = vpop.f32.mrf.mxu0
  %v2902 = vadd.f32 %v2812, %v2901
  %v2903 = vand.u32 %v2589, 4294901760
  %v2904 = vsub.f32 %v2589, %v2903
  %2905 = vmatmul.f32.gmra.mxu0 %v2904
  %v2906 = vpop.f32.mrf.mxu0
  %v2907 = vadd.f32 %v2816, %v2906
  %v2908 = vand.u32 %v2592, 4294901760
  %v2909 = vsub.f32 %v2592, %v2908
  %2910 = vmatmul.f32.gmra.mxu0 %v2909
  %v2911 = vpop.f32.mrf.mxu0
  %v2912 = vadd.f32 %v2820, %v2911
  %v2913 = vand.u32 %v2595, 4294901760
  %v2914 = vsub.f32 %v2595, %v2913
  %2915 = vmatmul.f32.gmra.mxu0 %v2914
  %v2916 = vpop.f32.mrf.mxu0
  %v2917 = vadd.f32 %v2824, %v2916
  %v2918 = vand.u32 %v2598, 4294901760
  %v2919 = vsub.f32 %v2598, %v2918
  %2920 = vmatmul.f32.gmra.mxu0 %v2919
  %v2921 = vpop.f32.mrf.mxu0
  %v2922 = vadd.f32 %v2828, %v2921
  %v2923 = vand.u32 %v2601, 4294901760
  %v2924 = vsub.f32 %v2601, %v2923
  %2925 = vmatmul.f32.gmra.mxu0 %v2924
  %v2926 = vpop.f32.mrf.mxu0
  %v2927 = vadd.f32 %v2832, %v2926
  %v2928 = vand.u32 %v2604, 4294901760
  %v2929 = vsub.f32 %v2604, %v2928
  %2930 = vmatmul.f32.gmra.mxu0 %v2929
  %v2931 = vpop.f32.mrf.mxu0
  %v2932 = vadd.f32 %v2836, %v2931
  %v2933 = vand.u32 %v2607, 4294901760
  %v2934 = vsub.f32 %v2607, %v2933
  %2935 = vmatmul.f32.gmra.mxu0 %v2934
  %v2936 = vpop.f32.mrf.mxu0
  %v2937 = vadd.f32 %v2840, %v2936
  %v2938 = vand.u32 %v2610, 4294901760
  %v2939 = vsub.f32 %v2610, %v2938
  %2940 = vmatmul.f32.gmra.mxu0 %v2939
  %v2941 = vpop.f32.mrf.mxu0
  %v2942 = vadd.f32 %v2844, %v2941
  %v2943 = vand.u32 %v2613, 4294901760
  %v2944 = vsub.f32 %v2613, %v2943
  %2945 = vmatmul.f32.gmra.mxu0 %v2944
  %v2946 = vpop.f32.mrf.mxu0
  %v2947 = vadd.f32 %v2848, %v2946
  %2948 = vdwg.mxu0
  %2949 = vmatpush.msra.mxu0 0.0
  %2950 = vmatpush.msra.mxu0 0.0
  %2951 = vmatpush.msra.mxu0 0.0
  %2952 = vmatpush.msra.mxu0 0.0
  %2953 = vmatpush.msra.mxu0 0.0
  %2954 = vmatpush.msra.mxu0 0.0
  %2955 = vmatpush.msra.mxu0 0.0
  %2956 = vmatpush.msra.mxu0 0.0
  %2957 = vmatpush.msra.mxu0 0.0
  %2958 = vmatpush.msra.mxu0 0.0
  %2959 = vmatpush.msra.mxu0 0.0
  %2960 = vmatpush.msra.mxu0 0.0
  %2961 = vmatpush.msra.mxu0 0.0
  %2962 = vmatpush.msra.mxu0 0.0
  %2963 = vmatpush.msra.mxu0 0.0
  %v2964 = vand.u32 %v2616, 4294901760
  %2965 = vmatpush.msra.mxu0 %v2964
  %v2966 = vand.u32 %v2568, 4294901760
  %v2967 = vsub.f32 %v2568, %v2966
  %v2968 = vand.u32 %v2967, 4294901760
  %2969 = vmatmul.f32.gmra.mxu0 %v2968
  %v2970 = vpop.f32.mrf.mxu0
  %v2971 = vadd.f32 %v2872, %v2970
  %v2972 = vand.u32 %v2571, 4294901760
  %v2973 = vsub.f32 %v2571, %v2972
  %v2974 = vand.u32 %v2973, 4294901760
  %2975 = vmatmul.f32.gmra.mxu0 %v2974
  %v2976 = vpop.f32.mrf.mxu0
  %v2977 = vadd.f32 %v2877, %v2976
  %v2978 = vand.u32 %v2574, 4294901760
  %v2979 = vsub.f32 %v2574, %v2978
  %v2980 = vand.u32 %v2979, 4294901760
  %2981 = vmatmul.f32.gmra.mxu0 %v2980
  %v2982 = vpop.f32.mrf.mxu0
  %v2983 = vadd.f32 %v2882, %v2982
  %v2984 = vand.u32 %v2577, 4294901760
  %v2985 = vsub.f32 %v2577, %v2984
  %v2986 = vand.u32 %v2985, 4294901760
  %2987 = vmatmul.f32.gmra.mxu0 %v2986
  %v2988 = vpop.f32.mrf.mxu0
  %v2989 = vadd.f32 %v2887, %v2988
  %v2990 = vand.u32 %v2580, 4294901760
  %v2991 = vsub.f32 %v2580, %v2990
  %v2992 = vand.u32 %v2991, 4294901760
  %2993 = vmatmul.f32.gmra.mxu0 %v2992
  %v2994 = vpop.f32.mrf.mxu0
  %v2995 = vadd.f32 %v2892, %v2994
  %v2996 = vand.u32 %v2583, 4294901760
  %v2997 = vsub.f32 %v2583, %v2996
  %v2998 = vand.u32 %v2997, 4294901760
  %2999 = vmatmul.f32.gmra.mxu0 %v2998
  %v3000 = vpop.f32.mrf.mxu0
  %v3001 = vadd.f32 %v2897, %v3000
  %v3002 = vand.u32 %v2586, 4294901760
  %v3003 = vsub.f32 %v2586, %v3002
  %v3004 = vand.u32 %v3003, 4294901760
  %3005 = vmatmul.f32.gmra.mxu0 %v3004
  %v3006 = vpop.f32.mrf.mxu0
  %v3007 = vadd.f32 %v2902, %v3006
  %v3008 = vand.u32 %v2589, 4294901760
  %v3009 = vsub.f32 %v2589, %v3008
  %v3010 = vand.u32 %v3009, 4294901760
  %3011 = vmatmul.f32.gmra.mxu0 %v3010
  %v3012 = vpop.f32.mrf.mxu0
  %v3013 = vadd.f32 %v2907, %v3012
  %v3014 = vand.u32 %v2592, 4294901760
  %v3015 = vsub.f32 %v2592, %v3014
  %v3016 = vand.u32 %v3015, 4294901760
  %3017 = vmatmul.f32.gmra.mxu0 %v3016
  %v3018 = vpop.f32.mrf.mxu0
  %v3019 = vadd.f32 %v2912, %v3018
  %v3020 = vand.u32 %v2595, 4294901760
  %v3021 = vsub.f32 %v2595, %v3020
  %v3022 = vand.u32 %v3021, 4294901760
  %3023 = vmatmul.f32.gmra.mxu0 %v3022
  %v3024 = vpop.f32.mrf.mxu0
  %v3025 = vadd.f32 %v2917, %v3024
  %v3026 = vand.u32 %v2598, 4294901760
  %v3027 = vsub.f32 %v2598, %v3026
  %v3028 = vand.u32 %v3027, 4294901760
  %3029 = vmatmul.f32.gmra.mxu0 %v3028
  %v3030 = vpop.f32.mrf.mxu0
  %v3031 = vadd.f32 %v2922, %v3030
  %v3032 = vand.u32 %v2601, 4294901760
  %v3033 = vsub.f32 %v2601, %v3032
  %v3034 = vand.u32 %v3033, 4294901760
  %3035 = vmatmul.f32.gmra.mxu0 %v3034
  %v3036 = vpop.f32.mrf.mxu0
  %v3037 = vadd.f32 %v2927, %v3036
  %v3038 = vand.u32 %v2604, 4294901760
  %v3039 = vsub.f32 %v2604, %v3038
  %v3040 = vand.u32 %v3039, 4294901760
  %3041 = vmatmul.f32.gmra.mxu0 %v3040
  %v3042 = vpop.f32.mrf.mxu0
  %v3043 = vadd.f32 %v2932, %v3042
  %v3044 = vand.u32 %v2607, 4294901760
  %v3045 = vsub.f32 %v2607, %v3044
  %v3046 = vand.u32 %v3045, 4294901760
  %3047 = vmatmul.f32.gmra.mxu0 %v3046
  %v3048 = vpop.f32.mrf.mxu0
  %v3049 = vadd.f32 %v2937, %v3048
  %v3050 = vand.u32 %v2610, 4294901760
  %v3051 = vsub.f32 %v2610, %v3050
  %v3052 = vand.u32 %v3051, 4294901760
  %3053 = vmatmul.f32.gmra.mxu0 %v3052
  %v3054 = vpop.f32.mrf.mxu0
  %v3055 = vadd.f32 %v2942, %v3054
  %v3056 = vand.u32 %v2613, 4294901760
  %v3057 = vsub.f32 %v2613, %v3056
  %v3058 = vand.u32 %v3057, 4294901760
  %3059 = vmatmul.f32.gmra.mxu0 %v3058
  %v3060 = vpop.f32.mrf.mxu0
  %v3061 = vadd.f32 %v2947, %v3060
  %3062 = vdwg.mxu0
  %3063 = vmatpush.msra.mxu0 0.0
  %3064 = vmatpush.msra.mxu0 0.0
  %3065 = vmatpush.msra.mxu0 0.0
  %3066 = vmatpush.msra.mxu0 0.0
  %3067 = vmatpush.msra.mxu0 0.0
  %3068 = vmatpush.msra.mxu0 0.0
  %3069 = vmatpush.msra.mxu0 0.0
  %3070 = vmatpush.msra.mxu0 0.0
  %3071 = vmatpush.msra.mxu0 0.0
  %3072 = vmatpush.msra.mxu0 0.0
  %3073 = vmatpush.msra.mxu0 0.0
  %3074 = vmatpush.msra.mxu0 0.0
  %3075 = vmatpush.msra.mxu0 0.0
  %3076 = vmatpush.msra.mxu0 0.0
  %3077 = vmatpush.msra.mxu0 0.0
  %v3078 = vand.u32 %v2616, 4294901760
  %v3079 = vsub.f32 %v2616, %v3078
  %v3080 = vand.u32 %v3079, 4294901760
  %3081 = vmatpush.msra.mxu0 %v3080
  %v3082 = vand.u32 %v2568, 4294901760
  %3083 = vmatmul.f32.gmra.mxu0 %v3082
  %v3084 = vpop.f32.mrf.mxu0
  %v3085 = vadd.f32 %v2971, %v3084
  %v3086 = vand.u32 %v2571, 4294901760
  %3087 = vmatmul.f32.gmra.mxu0 %v3086
  %v3088 = vpop.f32.mrf.mxu0
  %v3089 = vadd.f32 %v2977, %v3088
  %v3090 = vand.u32 %v2574, 4294901760
  %3091 = vmatmul.f32.gmra.mxu0 %v3090
  %v3092 = vpop.f32.mrf.mxu0
  %v3093 = vadd.f32 %v2983, %v3092
  %v3094 = vand.u32 %v2577, 4294901760
  %3095 = vmatmul.f32.gmra.mxu0 %v3094
  %v3096 = vpop.f32.mrf.mxu0
  %v3097 = vadd.f32 %v2989, %v3096
  %v3098 = vand.u32 %v2580, 4294901760
  %3099 = vmatmul.f32.gmra.mxu0 %v3098
  %v3100 = vpop.f32.mrf.mxu0
  %v3101 = vadd.f32 %v2995, %v3100
  %v3102 = vand.u32 %v2583, 4294901760
  %3103 = vmatmul.f32.gmra.mxu0 %v3102
  %v3104 = vpop.f32.mrf.mxu0
  %v3105 = vadd.f32 %v3001, %v3104
  %v3106 = vand.u32 %v2586, 4294901760
  %3107 = vmatmul.f32.gmra.mxu0 %v3106
  %v3108 = vpop.f32.mrf.mxu0
  %v3109 = vadd.f32 %v3007, %v3108
  %v3110 = vand.u32 %v2589, 4294901760
  %3111 = vmatmul.f32.gmra.mxu0 %v3110
  %v3112 = vpop.f32.mrf.mxu0
  %v3113 = vadd.f32 %v3013, %v3112
  %v3114 = vand.u32 %v2592, 4294901760
  %3115 = vmatmul.f32.gmra.mxu0 %v3114
  %v3116 = vpop.f32.mrf.mxu0
  %v3117 = vadd.f32 %v3019, %v3116
  %v3118 = vand.u32 %v2595, 4294901760
  %3119 = vmatmul.f32.gmra.mxu0 %v3118
  %v3120 = vpop.f32.mrf.mxu0
  %v3121 = vadd.f32 %v3025, %v3120
  %v3122 = vand.u32 %v2598, 4294901760
  %3123 = vmatmul.f32.gmra.mxu0 %v3122
  %v3124 = vpop.f32.mrf.mxu0
  %v3125 = vadd.f32 %v3031, %v3124
  %v3126 = vand.u32 %v2601, 4294901760
  %3127 = vmatmul.f32.gmra.mxu0 %v3126
  %v3128 = vpop.f32.mrf.mxu0
  %v3129 = vadd.f32 %v3037, %v3128
  %v3130 = vand.u32 %v2604, 4294901760
  %3131 = vmatmul.f32.gmra.mxu0 %v3130
  %v3132 = vpop.f32.mrf.mxu0
  %v3133 = vadd.f32 %v3043, %v3132
  %v3134 = vand.u32 %v2607, 4294901760
  %3135 = vmatmul.f32.gmra.mxu0 %v3134
  %v3136 = vpop.f32.mrf.mxu0
  %v3137 = vadd.f32 %v3049, %v3136
  %v3138 = vand.u32 %v2610, 4294901760
  %3139 = vmatmul.f32.gmra.mxu0 %v3138
  %v3140 = vpop.f32.mrf.mxu0
  %v3141 = vadd.f32 %v3055, %v3140
  %v3142 = vand.u32 %v2613, 4294901760
  %3143 = vmatmul.f32.gmra.mxu0 %v3142
  %v3144 = vpop.f32.mrf.mxu0
  %v3145 = vadd.f32 %v3061, %v3144
  %3146 = vdwg.mxu0
  %3147 = vmatpush.msra.mxu0 0.0
  %3148 = vmatpush.msra.mxu0 0.0
  %3149 = vmatpush.msra.mxu0 0.0
  %3150 = vmatpush.msra.mxu0 0.0
  %3151 = vmatpush.msra.mxu0 0.0
  %3152 = vmatpush.msra.mxu0 0.0
  %3153 = vmatpush.msra.mxu0 0.0
  %3154 = vmatpush.msra.mxu0 0.0
  %3155 = vmatpush.msra.mxu0 0.0
  %3156 = vmatpush.msra.mxu0 0.0
  %3157 = vmatpush.msra.mxu0 0.0
  %3158 = vmatpush.msra.mxu0 0.0
  %3159 = vmatpush.msra.mxu0 0.0
  %3160 = vmatpush.msra.mxu0 0.0
  %3161 = vmatpush.msra.mxu0 0.0
  %v3162 = vand.u32 %v2616, 4294901760
  %3163 = vmatpush.msra.mxu0 %v3162
  %v3164 = vand.u32 %v2568, 4294901760
  %3165 = vmatmul.f32.gmra.mxu0 %v3164
  %v3166 = vpop.f32.mrf.mxu0
  %v3167 = vadd.f32 %v3085, %v3166
  %v3168 = vand.u32 %v2571, 4294901760
  %3169 = vmatmul.f32.gmra.mxu0 %v3168
  %v3170 = vpop.f32.mrf.mxu0
  %v3171 = vadd.f32 %v3089, %v3170
  %v3172 = vand.u32 %v2574, 4294901760
  %3173 = vmatmul.f32.gmra.mxu0 %v3172
  %v3174 = vpop.f32.mrf.mxu0
  %v3175 = vadd.f32 %v3093, %v3174
  %v3176 = vand.u32 %v2577, 4294901760
  %3177 = vmatmul.f32.gmra.mxu0 %v3176
  %v3178 = vpop.f32.mrf.mxu0
  %v3179 = vadd.f32 %v3097, %v3178
  %v3180 = vand.u32 %v2580, 4294901760
  %3181 = vmatmul.f32.gmra.mxu0 %v3180
  %v3182 = vpop.f32.mrf.mxu0
  %v3183 = vadd.f32 %v3101, %v3182
  %v3184 = vand.u32 %v2583, 4294901760
  %3185 = vmatmul.f32.gmra.mxu0 %v3184
  %v3186 = vpop.f32.mrf.mxu0
  %v3187 = vadd.f32 %v3105, %v3186
  %v3188 = vand.u32 %v2586, 4294901760
  %3189 = vmatmul.f32.gmra.mxu0 %v3188
  %v3190 = vpop.f32.mrf.mxu0
  %v3191 = vadd.f32 %v3109, %v3190
  %v3192 = vand.u32 %v2589, 4294901760
  %3193 = vmatmul.f32.gmra.mxu0 %v3192
  %v3194 = vpop.f32.mrf.mxu0
  %v3195 = vadd.f32 %v3113, %v3194
  %v3196 = vand.u32 %v2592, 4294901760
  %3197 = vmatmul.f32.gmra.mxu0 %v3196
  %v3198 = vpop.f32.mrf.mxu0
  %v3199 = vadd.f32 %v3117, %v3198
  %v3200 = vand.u32 %v2595, 4294901760
  %3201 = vmatmul.f32.gmra.mxu0 %v3200
  %v3202 = vpop.f32.mrf.mxu0
  %v3203 = vadd.f32 %v3121, %v3202
  %v3204 = vand.u32 %v2598, 4294901760
  %3205 = vmatmul.f32.gmra.mxu0 %v3204
  %v3206 = vpop.f32.mrf.mxu0
  %v3207 = vadd.f32 %v3125, %v3206
  %v3208 = vand.u32 %v2601, 4294901760
  %3209 = vmatmul.f32.gmra.mxu0 %v3208
  %v3210 = vpop.f32.mrf.mxu0
  %v3211 = vadd.f32 %v3129, %v3210
  %v3212 = vand.u32 %v2604, 4294901760
  %3213 = vmatmul.f32.gmra.mxu0 %v3212
  %v3214 = vpop.f32.mrf.mxu0
  %v3215 = vadd.f32 %v3133, %v3214
  %v3216 = vand.u32 %v2607, 4294901760
  %3217 = vmatmul.f32.gmra.mxu0 %v3216
  %v3218 = vpop.f32.mrf.mxu0
  %v3219 = vadd.f32 %v3137, %v3218
  %v3220 = vand.u32 %v2610, 4294901760
  %3221 = vmatmul.f32.gmra.mxu0 %v3220
  %v3222 = vpop.f32.mrf.mxu0
  %v3223 = vadd.f32 %v3141, %v3222
  %v3224 = vand.u32 %v2613, 4294901760
  %3225 = vmatmul.f32.gmra.mxu0 %v3224
  %v3226 = vpop.f32.mrf.mxu0
  %v3227 = vadd.f32 %v3145, %v3226
  %3228 = vdwg.mxu0
  %v3229 = vmul.f32 %v17, %v3167
  %v3230 = vmul.f32 %v18, %v3171
  %v3231 = vmul.f32 %v19, %v3175
  %v3232 = vmul.f32 %v20, %v3179
  %v3233 = vmul.f32 %v21, %v3183
  %v3234 = vmul.f32 %v22, %v3187
  %v3235 = vmul.f32 %v23, %v3191
  %v3236 = vmul.f32 %v24, %v3195
  %v3237 = vmul.f32 %v25, %v3199
  %v3238 = vmul.f32 %v26, %v3203
  %v3239 = vmul.f32 %v27, %v3207
  %v3240 = vmul.f32 %v28, %v3211
  %v3241 = vmul.f32 %v29, %v3215
  %v3242 = vmul.f32 %v30, %v3219
  %v3243 = vmul.f32 %v31, %v3223
  %v3244 = vmul.f32 %v32, %v3227
  %3245 = vst [vmem:[%s4] sm:$0xff] %v3229
  %3246 = vst [vmem:[%s4 + $0x8] sm:$0xff] %v3230
  %3247 = vst [vmem:[%s4 + $0x10] sm:$0xff] %v3231
  %3248 = vst [vmem:[%s4 + $0x18] sm:$0xff] %v3232
  %3249 = vst [vmem:[%s4 + $0x20] sm:$0xff] %v3233
  %3250 = vst [vmem:[%s4 + $0x28] sm:$0xff] %v3234
  %3251 = vst [vmem:[%s4 + $0x30] sm:$0xff] %v3235
  %3252 = vst [vmem:[%s4 + $0x38] sm:$0xff] %v3236
  %3253 = vst [vmem:[%s4 + $0x40] sm:$0xff] %v3237
  %3254 = vst [vmem:[%s4 + $0x48] sm:$0xff] %v3238
  %3255 = vst [vmem:[%s4 + $0x50] sm:$0xff] %v3239
  %3256 = vst [vmem:[%s4 + $0x58] sm:$0xff] %v3240
  %3257 = vst [vmem:[%s4 + $0x60] sm:$0xff] %v3241
  %3258 = vst [vmem:[%s4 + $0x68] sm:$0xff] %v3242
  %3259 = vst [vmem:[%s4 + $0x70] sm:$0xff] %v3243
  %3260 = vst [vmem:[%s4 + $0x78] sm:$0xff] %v3244
  // Predicated region
  $region18: #{biasfree_layernorm.1} parent=0 // pred_check
    _
  $region19: #{biasfree_layernorm.1} parent=0 // pred_check_branch
    %3262 = sbr.rel (0) target = $region21
  $region20: #{biasfree_layernorm.1} parent=0 // pred_region
    _
  $region21: #{biasfree_layernorm.1} parent=0 // pred_fallthru
    _
  // Predicated region
  $region22: #{biasfree_layernorm.1} parent=0 // pred_check
    _
  $region23: #{biasfree_layernorm.1} parent=0 // pred_check_branch
    %3264 = sbr.rel (0) target = $region25
  $region24: #{biasfree_layernorm.1} parent=0 // pred_region
    _
  $region25: #{biasfree_layernorm.1} parent=0 // pred_fallthru
    _

</llo_original>
